<compile_context>
chip_gen: v7x
topology: tpu7x:2x2x1
jax: 0.10.0
libtpu: 0.0.40
codegen_flags: <defaults>
</compile_context>

<pallas_src>
import math
from functools import partial

import jax
import jax.numpy as jnp
import numpy as np
from jax.experimental import pallas as pl
from jax.experimental.pallas import tpu as pltpu


def _layer_norm(h, gamma, beta, eps=1e-5):
    mean = jnp.mean(h, axis=-1, keepdims=True)
    var = jnp.mean(jnp.square(h - mean), axis=-1, keepdims=True)
    return (h - mean) * jax.lax.rsqrt(var + eps) * gamma + beta


def _round_up(x, m):
    return ((x + m - 1) // m) * m


def cross_attn_block_kernel(x_ref, cond_ref,
                            wq_ref, bq_ref, wkv_ref, bkv_ref,
                            wo_ref, bo_ref,
                            g1_ref, be1_ref,
                            w1_ref, b1_ref, w2_ref, b2_ref,
                            g2_ref, be2_ref,
                            o_ref,
                            kv_scr,
                            *, num_heads):
    H = num_heads
    D = wq_ref.shape[0]
    Dh = D // H
    cdt = wq_ref.dtype          # MXU operand dtype (bf16 by default); f32 accumulation.

    # ---- K/V projection: once per batch element, cached in persistent VMEM -----
    # (query-tile axis is "arbitrary", so this is valid across t iterations)
    @pl.when(pl.program_id(1) == 0)
    def _():
        cond = cond_ref[0].astype(cdt)                                   # (Tc, D)
        kv = jnp.dot(cond, wkv_ref[...],
                     preferred_element_type=jnp.float32) + bkv_ref[...]  # (Tc, 2D) f32
        kv_scr[...] = kv.astype(cdt)

    x = x_ref[0]                                                         # (TQ, D) f32

    # ---- Q projection: full-width lane-dense matmul (1/sqrt(Dh) folded in Wq/bq)
    q = jnp.dot(x.astype(cdt), wq_ref[...],
                preferred_element_type=jnp.float32) + bq_ref[...]        # (TQ, D) f32
    q = q.astype(cdt)

    # ---- per-head attention (Dh-wide score/PV contractions are inherent to MHA).
    # Per-head views are cheap static lane slices of q and of the cached K/V.
    heads = []
    for h in range(H):
        lo, hi = h * Dh, (h + 1) * Dh
        qh = q[:, lo:hi]                                                 # (TQ, Dh)
        kh = kv_scr[:, lo:hi]                                            # (Tc, Dh)
        vh = kv_scr[:, D + lo:D + hi]                                    # (Tc, Dh)

        s = jnp.einsum('qf,kf->qk', qh, kh,
                       preferred_element_type=jnp.float32)               # (TQ, Tc) f32
        s = s - jnp.max(s, axis=-1, keepdims=True)
        p = jnp.exp(s)
        p = p * pl.reciprocal(jnp.sum(p, axis=-1, keepdims=True), approx=True)

        heads.append(jnp.dot(p.astype(cdt), vh,
                             preferred_element_type=jnp.float32))        # (TQ, Dh)

    # ---- concat heads + single (TQ,D)@(D,D) output projection -------------------
    o_cat = jnp.concatenate(heads, axis=-1).astype(cdt)                  # (TQ, D)
    attn = jnp.dot(o_cat, wo_ref[...],
                   preferred_element_type=jnp.float32) + bo_ref[...]

    # residual + LayerNorm (f32)
    h1 = _layer_norm(x + attn, g1_ref[...], be1_ref[...])

    # FFN: Linear -> ReLU -> Linear (f32 accumulation)
    ffn = jnp.dot(h1.astype(cdt), w1_ref[...],
                  preferred_element_type=jnp.float32) + b1_ref[...]
    ffn = jnp.maximum(ffn, 0.0)
    ffn = jnp.dot(ffn.astype(cdt), w2_ref[...],
                  preferred_element_type=jnp.float32) + b2_ref[...]

    # residual + LayerNorm (f32)
    o_ref[0] = _layer_norm(h1 + ffn, g2_ref[...], be2_ref[...]).astype(o_ref.dtype)


def cross_attention_block(x, cond, params, num_heads, *,
                          block_q=None, compute_dtype=jnp.bfloat16,
                          vmem_limit_bytes=None):
    """x: (B, Tx, D), cond: (B, Tc, D). params: PyTorch-style (pre-transposed) weights."""
    (wq, wk, wv, bq, bk, bv, wo, bo, g1, be1, w1, b1, w2, b2, g2, be2) = params
    B, Tx, D = x.shape
    _, Tc, _ = cond.shape
    H = num_heads
    assert D % H == 0
    Dh = D // H
    scale = 1.0 / math.sqrt(Dh)
    f32 = jnp.float32
    cdt = compute_dtype

    # ---- chip-aware defaults ---------------------------------------------------
    try:
        vmem_cap = int(pltpu.get_tpu_info().vmem_capacity_bytes)
    except Exception:                                   # older jax / no TPU info
        vmem_cap = 64 * 1024 * 1024
    if vmem_limit_bytes is None:
        # leave ~15% headroom for compiler scratch/spill (≈54 MiB v7x, ≈109 MiB v5e/v6e)
        vmem_limit_bytes = int(vmem_cap * 0.85)
    if block_q is None:
        block_q = 256 if vmem_cap >= 96 * 1024 * 1024 else 128

    # ---- fold softmax scale into Wq/bq, fuse K|V weights, cast MXU operands -----
    wq_c = (wq * scale).astype(cdt)
    bq_c = (bq.reshape(1, -1) * scale).astype(f32)
    wkv_c = jnp.concatenate([wk, wv], axis=1).astype(cdt)                # (D, 2D)
    bkv_c = jnp.concatenate([bk.reshape(1, -1), bv.reshape(1, -1)], axis=1).astype(f32)

    kparams = (wq_c, bq_c, wkv_c, bkv_c,
               wo.astype(cdt), bo.reshape(1, -1).astype(f32),
               g1.reshape(1, -1).astype(f32), be1.reshape(1, -1).astype(f32),
               w1.astype(cdt), b1.reshape(1, -1).astype(f32),
               w2.astype(cdt), b2.reshape(1, -1).astype(f32),
               g2.reshape(1, -1).astype(f32), be2.reshape(1, -1).astype(f32))

    # ---- query tiling: tq multiple of 8 (16 for bf16 I/O), zero-padded tail -----
    mult = 16 if x.dtype == jnp.bfloat16 else 8
    tq = min(_round_up(block_q, mult), _round_up(Tx, mult))
    Tx_pad = _round_up(Tx, tq)
    x_pad = x if Tx_pad == Tx else jnp.pad(x, ((0, 0), (0, Tx_pad - Tx), (0, 0)))
    grid = (B, Tx_pad // tq)

    # ---- scheduler hint ----------------------------------------------------------
    flops = 2 * B * (
        Tx_pad * D * D                  # Q projection
        + Tc * D * (2 * D)              # fused K|V projection (once per batch)
        + 2 * Tx_pad * Tc * D           # scores + P@V (summed over heads)
        + Tx_pad * D * D                # output projection
        + 2 * Tx_pad * D * (4 * D)      # FFN (two layers)
    )
    transcendentals = B * H * Tx_pad * Tc
    bytes_accessed = (x_pad.size * x_pad.dtype.itemsize
                      + cond.size * cond.dtype.itemsize
                      + B * Tx_pad * D * x.dtype.itemsize
                      + sum(int(p.size) * p.dtype.itemsize for p in kparams))
    cost_estimate = pl.CostEstimate(flops=int(flops),
                                    transcendentals=int(transcendentals),
                                    bytes_accessed=int(bytes_accessed))

    kernel = partial(cross_attn_block_kernel, num_heads=H)

    def _call(single_buffer_weights):
        def _const_spec(p):
            nd = p.ndim
            if single_buffer_weights:
                return pl.BlockSpec(p.shape, lambda b, t, _nd=nd: (0,) * _nd,
                                    pipeline_mode=pl.Buffered(1))
            return pl.BlockSpec(p.shape, lambda b, t, _nd=nd: (0,) * _nd)

        in_specs = [
            pl.BlockSpec((1, tq, D), lambda b, t: (b, t, 0)),   # x: tiled over queries
            pl.BlockSpec((1, Tc, D), lambda b, t: (b, 0, 0)),   # cond: constant over t
        ] + [_const_spec(p) for p in kparams]
        out_specs = pl.BlockSpec((1, tq, D), lambda b, t: (b, t, 0))

        return pl.pallas_call(
            kernel,
            out_shape=jax.ShapeDtypeStruct((B, Tx_pad, D), x.dtype),
            grid_spec=pltpu.PrefetchScalarGridSpec(
                num_scalar_prefetch=0,
                grid=grid,
                in_specs=in_specs,
                out_specs=out_specs,
                scratch_shapes=[pltpu.VMEM((Tc, 2 * D), cdt)],   # cached K|V per batch
            ),
            compiler_params=pltpu.CompilerParams(
                # t carries the cached-K/V scratch dependence -> "arbitrary";
                # batch axis stays "parallel" for megacore sharding.
                dimension_semantics=("parallel", "arbitrary"),
                vmem_limit_bytes=vmem_limit_bytes,
            ),
            cost_estimate=cost_estimate,
        )(x_pad, cond, *kparams)

    try:
        out = _call(True)    # single-buffered constant weights (halves weight VMEM)
    except Exception:
        out = _call(False)   # fallback for JAX versions without pipeline_mode support

    return out[:, :Tx, :] if Tx_pad != Tx else out


def reference_block(x, cond, params, num_heads):
    """Pure-JAX reference for correctness check."""
    (wq, wk, wv, bq, bk, bv, wo, bo, g1, be1, w1, b1, w2, b2, g2, be2) = params
    B, Tx, D = x.shape
    Dh = D // num_heads
    scale = 1.0 / math.sqrt(Dh)

    q = x @ wq + bq
    k = cond @ wk + bk
    v = cond @ wv + bv

    def split_heads(t):  # (B, T, D) -> (B, H, T, Dh)
        return t.reshape(t.shape[0], t.shape[1], num_heads, Dh).transpose(0, 2, 1, 3)

    qh, kh, vh = split_heads(q), split_heads(k), split_heads(v)
    s = jnp.einsum("bhqd,bhkd->bhqk", qh, kh) * scale
    p = jax.nn.softmax(s, axis=-1)
    o = jnp.einsum("bhqk,bhkd->bhqd", p, vh)
    o = o.transpose(0, 2, 1, 3).reshape(B, Tx, D)
    attn = o @ wo + bo

    h1 = _layer_norm(x + attn, g1, be1)
    ffn = jnp.maximum(h1 @ w1 + b1, 0.0) @ w2 + b2
    return _layer_norm(h1 + ffn, g2, be2)


if __name__ == "__main__":
    B, Tx, Tc, D, H = 2, 16, 8, 32, 4
    key = jax.random.PRNGKey(0)
    ks = jax.random.split(key, 20)

    def init(k, shape, scale=0.05):
        return jax.random.normal(k, shape, jnp.float32) * scale

    # MultiheadAttention params (pre-transposed: (in, out))
    wq = init(ks[0], (D, D))
    wk = init(ks[1], (D, D))
    wv = init(ks[2], (D, D))
    bq = init(ks[3], (1, D))
    bk = init(ks[4], (1, D))
    bv = init(ks[5], (1, D))
    wo = init(ks[6], (D, D))
    bo = init(ks[7], (1, D))
    # LayerNorm 1
    g1 = jnp.ones((1, D), jnp.float32)
    be1 = jnp.zeros((1, D), jnp.float32)
    # FFN params (pre-transposed)
    w1 = init(ks[8], (D, 4 * D))
    b1 = init(ks[9], (1, 4 * D))
    w2 = init(ks[10], (4 * D, D))
    b2 = init(ks[11], (1, D))
    # LayerNorm 2
    g2 = jnp.ones((1, D), jnp.float32)
    be2 = jnp.zeros((1, D), jnp.float32)

    params = (wq, wk, wv, bq, bk, bv, wo, bo, g1, be1, w1, b1, w2, b2, g2, be2)

    x = jax.random.normal(ks[12], (B, Tx, D), jnp.float32)
    cond = jax.random.normal(ks[13], (B, Tc, D), jnp.float32)

    ref = reference_block(x, cond, params, H)

    # f32 MXU-operand path, query tiling + cached-K/V path exercised
    # (block_q=8 -> grid (2, 2); approx EUP reciprocal bounds tolerance at ~5e-3).
    out = cross_attention_block(x, cond, params, H, block_q=8,
                                compute_dtype=jnp.float32)
    out = jax.block_until_ready(out)
    np.testing.assert_allclose(np.asarray(out), np.asarray(ref), rtol=5e-3, atol=5e-3)

    # Ragged query length (Tx=13): padded-tail path, output sliced back.
    x_r = x[:, :13, :]
    ref_r = reference_block(x_r, cond, params, H)
    out_r = cross_attention_block(x_r, cond, params, H, block_q=8,
                                  compute_dtype=jnp.float32)
    out_r = jax.block_until_ready(out_r)
    np.testing.assert_allclose(np.asarray(out_r), np.asarray(ref_r),
                               rtol=5e-3, atol=5e-3)

    # Default bf16 MXU-operand path (perf config), f32 accumulation / LayerNorm.
    out_bf16 = cross_attention_block(x, cond, params, H, block_q=8)
    out_bf16 = jax.block_until_ready(out_bf16)
    np.testing.assert_allclose(np.asarray(out_bf16), np.asarray(ref),
                               rtol=5e-2, atol=5e-2)

    print("KERNEL_OK")
</pallas_src>

<mosaic_0001>
module attributes {stable_mosaic.version = 11 : i64} {
  func.func @cross_attn_block_kernel(%arg0: i32, %arg1: i32, %arg2: memref<1x8x32xf32, #tpu.memory_space<vmem>>, %arg3: memref<1x8x32xf32, #tpu.memory_space<vmem>>, %arg4: memref<32x32xf32, #tpu.memory_space<vmem>>, %arg5: memref<1x32xf32, #tpu.memory_space<vmem>>, %arg6: memref<32x64xf32, #tpu.memory_space<vmem>>, %arg7: memref<1x64xf32, #tpu.memory_space<vmem>>, %arg8: memref<32x32xf32, #tpu.memory_space<vmem>>, %arg9: memref<1x32xf32, #tpu.memory_space<vmem>>, %arg10: memref<1x32xf32, #tpu.memory_space<vmem>>, %arg11: memref<1x32xf32, #tpu.memory_space<vmem>>, %arg12: memref<32x128xf32, #tpu.memory_space<vmem>>, %arg13: memref<1x128xf32, #tpu.memory_space<vmem>>, %arg14: memref<128x32xf32, #tpu.memory_space<vmem>>, %arg15: memref<1x32xf32, #tpu.memory_space<vmem>>, %arg16: memref<1x32xf32, #tpu.memory_space<vmem>>, %arg17: memref<1x32xf32, #tpu.memory_space<vmem>>, %arg18: memref<1x8x32xf32, #tpu.memory_space<vmem>>, %arg19: memref<8x64xf32, #tpu.memory_space<vmem>>) attributes {dimension_semantics = [#tpu.dimension_semantics<parallel>, #tpu.dimension_semantics<arbitrary>], iteration_bounds = array<i64: 2, 2>, scalar_prefetch = 0 : i64, scratch_operands = 1 : i64, tpu.core_type = #tpu.core_type<tc>, window_params = [{transform_indices = @transform_0, window_bounds = array<i64: 1, 8, 32>}, {transform_indices = @transform_1, window_bounds = array<i64: 1, 8, 32>}, {pipeline_mode = #tpu.pipeline_mode<synchronous>, transform_indices = @transform_2, window_bounds = array<i64: 32, 32>}, {pipeline_mode = #tpu.pipeline_mode<synchronous>, transform_indices = @transform_3, window_bounds = array<i64: 1, 32>}, {pipeline_mode = #tpu.pipeline_mode<synchronous>, transform_indices = @transform_4, window_bounds = array<i64: 32, 64>}, {pipeline_mode = #tpu.pipeline_mode<synchronous>, transform_indices = @transform_5, window_bounds = array<i64: 1, 64>}, {pipeline_mode = #tpu.pipeline_mode<synchronous>, transform_indices = @transform_6, window_bounds = array<i64: 32, 32>}, {pipeline_mode = #tpu.pipeline_mode<synchronous>, transform_indices = @transform_7, window_bounds = array<i64: 1, 32>}, {pipeline_mode = #tpu.pipeline_mode<synchronous>, transform_indices = @transform_8, window_bounds = array<i64: 1, 32>}, {pipeline_mode = #tpu.pipeline_mode<synchronous>, transform_indices = @transform_9, window_bounds = array<i64: 1, 32>}, {pipeline_mode = #tpu.pipeline_mode<synchronous>, transform_indices = @transform_10, window_bounds = array<i64: 32, 128>}, {pipeline_mode = #tpu.pipeline_mode<synchronous>, transform_indices = @transform_11, window_bounds = array<i64: 1, 128>}, {pipeline_mode = #tpu.pipeline_mode<synchronous>, transform_indices = @transform_12, window_bounds = array<i64: 128, 32>}, {pipeline_mode = #tpu.pipeline_mode<synchronous>, transform_indices = @transform_13, window_bounds = array<i64: 1, 32>}, {pipeline_mode = #tpu.pipeline_mode<synchronous>, transform_indices = @transform_14, window_bounds = array<i64: 1, 32>}, {pipeline_mode = #tpu.pipeline_mode<synchronous>, transform_indices = @transform_15, window_bounds = array<i64: 1, 32>}, {transform_indices = @transform_16, window_bounds = array<i64: 1, 8, 32>}]} {
    %c0_i32 = arith.constant 0 : i32
    %0 = arith.cmpi eq, %arg1, %c0_i32 : i32
    %1 = arith.extui %0 : i1 to i32
    %c0_i32_0 = arith.constant 0 : i32
    %2 = arith.cmpi ne, %1, %c0_i32_0 : i32
    scf.if %2 {
      %c0_69 = arith.constant 0 : index
      %c0_70 = arith.constant 0 : index
      %c0_71 = arith.constant 0 : index
      %141 = vector.load %arg3[%c0_69, %c0_70, %c0_71] : memref<1x8x32xf32, #tpu.memory_space<vmem>>, vector<1x8x32xf32>
      %142 = vector.shape_cast %141 : vector<1x8x32xf32> to vector<8x32xf32>
      %c0_72 = arith.constant 0 : index
      %c0_73 = arith.constant 0 : index
      %143 = vector.load %arg6[%c0_72, %c0_73] : memref<32x64xf32, #tpu.memory_space<vmem>>, vector<32x64xf32>
      %cst_74 = arith.constant dense<0.000000e+00> : vector<8x64xf32>
      %144 = tpu.matmul %142, %143, %cst_74 {dimension_numbers = #tpu.dot_dimension_numbers<[1], [0], [0], [1], [0, 0, 1, 1], [], []>} : vector<8x32xf32>, vector<32x64xf32>, vector<8x64xf32> -> vector<8x64xf32>
      %c0_75 = arith.constant 0 : index
      %c0_76 = arith.constant 0 : index
      %145 = vector.load %arg7[%c0_75, %c0_76] : memref<1x64xf32, #tpu.memory_space<vmem>>, vector<1x64xf32>
      %146 = vector.broadcast %145 : vector<1x64xf32> to vector<8x64xf32>
      %147 = arith.addf %144, %146 : vector<8x64xf32>
      %c0_77 = arith.constant 0 : index
      %c0_78 = arith.constant 0 : index
      %148 = vector.load %arg19[%c0_77, %c0_78] : memref<8x64xf32, #tpu.memory_space<vmem>>, vector<8x64xf32>
      tpu.vector_store %arg19[%c0_77, %c0_78], %147 {strides = array<i32>} : memref<8x64xf32, #tpu.memory_space<vmem>>, vector<8x64xf32>,
    } else {
    }
    %c0 = arith.constant 0 : index
    %c0_1 = arith.constant 0 : index
    %c0_2 = arith.constant 0 : index
    %3 = vector.load %arg2[%c0, %c0_1, %c0_2] : memref<1x8x32xf32, #tpu.memory_space<vmem>>, vector<1x8x32xf32>
    %4 = vector.shape_cast %3 : vector<1x8x32xf32> to vector<8x32xf32>
    %c0_3 = arith.constant 0 : index
    %c0_4 = arith.constant 0 : index
    %5 = vector.load %arg4[%c0_3, %c0_4] : memref<32x32xf32, #tpu.memory_space<vmem>>, vector<32x32xf32>
    %cst = arith.constant dense<0.000000e+00> : vector<8x32xf32>
    %6 = tpu.matmul %4, %5, %cst {dimension_numbers = #tpu.dot_dimension_numbers<[1], [0], [0], [1], [0, 0, 1, 1], [], []>} : vector<8x32xf32>, vector<32x32xf32>, vector<8x32xf32> -> vector<8x32xf32>
    %c0_5 = arith.constant 0 : index
    %c0_6 = arith.constant 0 : index
    %7 = vector.load %arg5[%c0_5, %c0_6] : memref<1x32xf32, #tpu.memory_space<vmem>>, vector<1x32xf32>
    %8 = vector.broadcast %7 : vector<1x32xf32> to vector<8x32xf32>
    %9 = arith.addf %6, %8 : vector<8x32xf32>
    %10 = vector.extract_strided_slice %9 {offsets = [0, 0], sizes = [8, 8], strides = [1, 1]} : vector<8x32xf32> to vector<8x8xf32>
    %c0_7 = arith.constant 0 : index
    %c0_8 = arith.constant 0 : index
    %11 = vector.load %arg19[%c0_7, %c0_8] : memref<8x64xf32, #tpu.memory_space<vmem>>, vector<8x8xf32>
    %c0_9 = arith.constant 0 : index
    %c32 = arith.constant 32 : index
    %12 = vector.load %arg19[%c0_9, %c32] : memref<8x64xf32, #tpu.memory_space<vmem>>, vector<8x8xf32>
    "tpu.trace_start"() <{level = 10 : i32, message = "qf,kf->qk"}> : () -> ()
    %cst_10 = arith.constant dense<0.000000e+00> : vector<8x8xf32>
    %13 = tpu.matmul %10, %11, %cst_10 {dimension_numbers = #tpu.dot_dimension_numbers<[1], [1], [0], [0], [0, 0, 1, 0], [], []>} : vector<8x8xf32>, vector<8x8xf32>, vector<8x8xf32> -> vector<8x8xf32>
    "tpu.trace_stop"() : () -> ()
    %cst_11 = arith.constant dense<0xFF800000> : vector<8xf32>
    %14 = vector.multi_reduction <maximumf>, %13, %cst_11 [1] : vector<8x8xf32> to vector<8xf32>
    %15 = vector.shape_cast %14 : vector<8xf32> to vector<8x1xf32>
    %16 = vector.broadcast %15 : vector<8x1xf32> to vector<8x8xf32>
    %17 = arith.subf %13, %16 : vector<8x8xf32>
    %18 = math.exp %17 : vector<8x8xf32>
    %cst_12 = arith.constant dense<0.000000e+00> : vector<8xf32>
    %19 = vector.multi_reduction <add>, %18, %cst_12 [1] : vector<8x8xf32> to vector<8xf32>
    %20 = vector.shape_cast %19 : vector<8xf32> to vector<8x1xf32>
    %21 = tpu.reciprocal %20 {approx = true} : vector<8x1xf32> -> vector<8x1xf32>
    %22 = vector.broadcast %21 : vector<8x1xf32> to vector<8x8xf32>
    %23 = arith.mulf %18, %22 : vector<8x8xf32>
    %cst_13 = arith.constant dense<0.000000e+00> : vector<8x8xf32>
    %24 = tpu.matmul %23, %12, %cst_13 {dimension_numbers = #tpu.dot_dimension_numbers<[1], [0], [0], [1], [0, 0, 1, 1], [], []>} : vector<8x8xf32>, vector<8x8xf32>, vector<8x8xf32> -> vector<8x8xf32>
    %25 = vector.extract_strided_slice %9 {offsets = [0, 8], sizes = [8, 8], strides = [1, 1]} : vector<8x32xf32> to vector<8x8xf32>
    %c0_14 = arith.constant 0 : index
    %c8 = arith.constant 8 : index
    %26 = vector.load %arg19[%c0_14, %c8] : memref<8x64xf32, #tpu.memory_space<vmem>>, vector<8x8xf32>
    %c0_15 = arith.constant 0 : index
    %c40 = arith.constant 40 : index
    %27 = vector.load %arg19[%c0_15, %c40] : memref<8x64xf32, #tpu.memory_space<vmem>>, vector<8x8xf32>
    "tpu.trace_start"() <{level = 10 : i32, message = "qf,kf->qk"}> : () -> ()
    %cst_16 = arith.constant dense<0.000000e+00> : vector<8x8xf32>
    %28 = tpu.matmul %25, %26, %cst_16 {dimension_numbers = #tpu.dot_dimension_numbers<[1], [1], [0], [0], [0, 0, 1, 0], [], []>} : vector<8x8xf32>, vector<8x8xf32>, vector<8x8xf32> -> vector<8x8xf32>
    "tpu.trace_stop"() : () -> ()
    %cst_17 = arith.constant dense<0xFF800000> : vector<8xf32>
    %29 = vector.multi_reduction <maximumf>, %28, %cst_17 [1] : vector<8x8xf32> to vector<8xf32>
    %30 = vector.shape_cast %29 : vector<8xf32> to vector<8x1xf32>
    %31 = vector.broadcast %30 : vector<8x1xf32> to vector<8x8xf32>
    %32 = arith.subf %28, %31 : vector<8x8xf32>
    %33 = math.exp %32 : vector<8x8xf32>
    %cst_18 = arith.constant dense<0.000000e+00> : vector<8xf32>
    %34 = vector.multi_reduction <add>, %33, %cst_18 [1] : vector<8x8xf32> to vector<8xf32>
    %35 = vector.shape_cast %34 : vector<8xf32> to vector<8x1xf32>
    %36 = tpu.reciprocal %35 {approx = true} : vector<8x1xf32> -> vector<8x1xf32>
    %37 = vector.broadcast %36 : vector<8x1xf32> to vector<8x8xf32>
    %38 = arith.mulf %33, %37 : vector<8x8xf32>
    %cst_19 = arith.constant dense<0.000000e+00> : vector<8x8xf32>
    %39 = tpu.matmul %38, %27, %cst_19 {dimension_numbers = #tpu.dot_dimension_numbers<[1], [0], [0], [1], [0, 0, 1, 1], [], []>} : vector<8x8xf32>, vector<8x8xf32>, vector<8x8xf32> -> vector<8x8xf32>
    %40 = vector.extract_strided_slice %9 {offsets = [0, 16], sizes = [8, 8], strides = [1, 1]} : vector<8x32xf32> to vector<8x8xf32>
    %c0_20 = arith.constant 0 : index
    %c16 = arith.constant 16 : index
    %41 = vector.load %arg19[%c0_20, %c16] : memref<8x64xf32, #tpu.memory_space<vmem>>, vector<8x8xf32>
    %c0_21 = arith.constant 0 : index
    %c48 = arith.constant 48 : index
    %42 = vector.load %arg19[%c0_21, %c48] : memref<8x64xf32, #tpu.memory_space<vmem>>, vector<8x8xf32>
    "tpu.trace_start"() <{level = 10 : i32, message = "qf,kf->qk"}> : () -> ()
    %cst_22 = arith.constant dense<0.000000e+00> : vector<8x8xf32>
    %43 = tpu.matmul %40, %41, %cst_22 {dimension_numbers = #tpu.dot_dimension_numbers<[1], [1], [0], [0], [0, 0, 1, 0], [], []>} : vector<8x8xf32>, vector<8x8xf32>, vector<8x8xf32> -> vector<8x8xf32>
    "tpu.trace_stop"() : () -> ()
    %cst_23 = arith.constant dense<0xFF800000> : vector<8xf32>
    %44 = vector.multi_reduction <maximumf>, %43, %cst_23 [1] : vector<8x8xf32> to vector<8xf32>
    %45 = vector.shape_cast %44 : vector<8xf32> to vector<8x1xf32>
    %46 = vector.broadcast %45 : vector<8x1xf32> to vector<8x8xf32>
    %47 = arith.subf %43, %46 : vector<8x8xf32>
    %48 = math.exp %47 : vector<8x8xf32>
    %cst_24 = arith.constant dense<0.000000e+00> : vector<8xf32>
    %49 = vector.multi_reduction <add>, %48, %cst_24 [1] : vector<8x8xf32> to vector<8xf32>
    %50 = vector.shape_cast %49 : vector<8xf32> to vector<8x1xf32>
    %51 = tpu.reciprocal %50 {approx = true} : vector<8x1xf32> -> vector<8x1xf32>
    %52 = vector.broadcast %51 : vector<8x1xf32> to vector<8x8xf32>
    %53 = arith.mulf %48, %52 : vector<8x8xf32>
    %cst_25 = arith.constant dense<0.000000e+00> : vector<8x8xf32>
    %54 = tpu.matmul %53, %42, %cst_25 {dimension_numbers = #tpu.dot_dimension_numbers<[1], [0], [0], [1], [0, 0, 1, 1], [], []>} : vector<8x8xf32>, vector<8x8xf32>, vector<8x8xf32> -> vector<8x8xf32>
    %55 = vector.extract_strided_slice %9 {offsets = [0, 24], sizes = [8, 8], strides = [1, 1]} : vector<8x32xf32> to vector<8x8xf32>
    %c0_26 = arith.constant 0 : index
    %c24 = arith.constant 24 : index
    %56 = vector.load %arg19[%c0_26, %c24] : memref<8x64xf32, #tpu.memory_space<vmem>>, vector<8x8xf32>
    %c0_27 = arith.constant 0 : index
    %c56 = arith.constant 56 : index
    %57 = vector.load %arg19[%c0_27, %c56] : memref<8x64xf32, #tpu.memory_space<vmem>>, vector<8x8xf32>
    "tpu.trace_start"() <{level = 10 : i32, message = "qf,kf->qk"}> : () -> ()
    %cst_28 = arith.constant dense<0.000000e+00> : vector<8x8xf32>
    %58 = tpu.matmul %55, %56, %cst_28 {dimension_numbers = #tpu.dot_dimension_numbers<[1], [1], [0], [0], [0, 0, 1, 0], [], []>} : vector<8x8xf32>, vector<8x8xf32>, vector<8x8xf32> -> vector<8x8xf32>
    "tpu.trace_stop"() : () -> ()
    %cst_29 = arith.constant dense<0xFF800000> : vector<8xf32>
    %59 = vector.multi_reduction <maximumf>, %58, %cst_29 [1] : vector<8x8xf32> to vector<8xf32>
    %60 = vector.shape_cast %59 : vector<8xf32> to vector<8x1xf32>
    %61 = vector.broadcast %60 : vector<8x1xf32> to vector<8x8xf32>
    %62 = arith.subf %58, %61 : vector<8x8xf32>
    %63 = math.exp %62 : vector<8x8xf32>
    %cst_30 = arith.constant dense<0.000000e+00> : vector<8xf32>
    %64 = vector.multi_reduction <add>, %63, %cst_30 [1] : vector<8x8xf32> to vector<8xf32>
    %65 = vector.shape_cast %64 : vector<8xf32> to vector<8x1xf32>
    %66 = tpu.reciprocal %65 {approx = true} : vector<8x1xf32> -> vector<8x1xf32>
    %67 = vector.broadcast %66 : vector<8x1xf32> to vector<8x8xf32>
    %68 = arith.mulf %63, %67 : vector<8x8xf32>
    %cst_31 = arith.constant dense<0.000000e+00> : vector<8x8xf32>
    %69 = tpu.matmul %68, %57, %cst_31 {dimension_numbers = #tpu.dot_dimension_numbers<[1], [0], [0], [1], [0, 0, 1, 1], [], []>} : vector<8x8xf32>, vector<8x8xf32>, vector<8x8xf32> -> vector<8x8xf32>
    %70 = tpu.concatenate %24, %39, %54, %69 in 1 : vector<8x8xf32>, vector<8x8xf32>, vector<8x8xf32>, vector<8x8xf32> -> vector<8x32xf32>
    %c0_32 = arith.constant 0 : index
    %c0_33 = arith.constant 0 : index
    %71 = vector.load %arg8[%c0_32, %c0_33] : memref<32x32xf32, #tpu.memory_space<vmem>>, vector<32x32xf32>
    %cst_34 = arith.constant dense<0.000000e+00> : vector<8x32xf32>
    %72 = tpu.matmul %70, %71, %cst_34 {dimension_numbers = #tpu.dot_dimension_numbers<[1], [0], [0], [1], [0, 0, 1, 1], [], []>} : vector<8x32xf32>, vector<32x32xf32>, vector<8x32xf32> -> vector<8x32xf32>
    %c0_35 = arith.constant 0 : index
    %c0_36 = arith.constant 0 : index
    %73 = vector.load %arg9[%c0_35, %c0_36] : memref<1x32xf32, #tpu.memory_space<vmem>>, vector<1x32xf32>
    %74 = vector.broadcast %73 : vector<1x32xf32> to vector<8x32xf32>
    %75 = arith.addf %72, %74 : vector<8x32xf32>
    %76 = arith.addf %4, %75 : vector<8x32xf32>
    %c0_37 = arith.constant 0 : index
    %c0_38 = arith.constant 0 : index
    %77 = vector.load %arg10[%c0_37, %c0_38] : memref<1x32xf32, #tpu.memory_space<vmem>>, vector<1x32xf32>
    %c0_39 = arith.constant 0 : index
    %c0_40 = arith.constant 0 : index
    %78 = vector.load %arg11[%c0_39, %c0_40] : memref<1x32xf32, #tpu.memory_space<vmem>>, vector<1x32xf32>
    %cst_41 = arith.constant dense<0.000000e+00> : vector<8xf32>
    %79 = vector.multi_reduction <add>, %76, %cst_41 [1] : vector<8x32xf32> to vector<8xf32>
    %80 = vector.shape_cast %79 : vector<8xf32> to vector<8x1xf32>
    %cst_42 = arith.constant 3.200000e+01 : f32
    %81 = vector.broadcast %cst_42 : f32 to vector<8x1xf32>
    %82 = arith.divf %80, %81 : vector<8x1xf32>
    %83 = vector.broadcast %82 : vector<8x1xf32> to vector<8x32xf32>
    %84 = arith.subf %76, %83 : vector<8x32xf32>
    %85 = arith.mulf %84, %84 : vector<8x32xf32>
    %cst_43 = arith.constant dense<0.000000e+00> : vector<8xf32>
    %86 = vector.multi_reduction <add>, %85, %cst_43 [1] : vector<8x32xf32> to vector<8xf32>
    %87 = vector.shape_cast %86 : vector<8xf32> to vector<8x1xf32>
    %cst_44 = arith.constant 3.200000e+01 : f32
    %88 = vector.broadcast %cst_44 : f32 to vector<8x1xf32>
    %89 = arith.divf %87, %88 : vector<8x1xf32>
    %90 = vector.broadcast %82 : vector<8x1xf32> to vector<8x32xf32>
    %91 = arith.subf %76, %90 : vector<8x32xf32>
    %cst_45 = arith.constant 9.99999974E-6 : f32
    %92 = vector.broadcast %cst_45 : f32 to vector<8x1xf32>
    %93 = arith.addf %89, %92 : vector<8x1xf32>
    %94 = math.rsqrt %93 : vector<8x1xf32>
    %95 = vector.broadcast %94 : vector<8x1xf32> to vector<8x32xf32>
    %96 = arith.mulf %91, %95 : vector<8x32xf32>
    %97 = vector.broadcast %77 : vector<1x32xf32> to vector<8x32xf32>
    %98 = arith.mulf %96, %97 : vector<8x32xf32>
    %99 = vector.broadcast %78 : vector<1x32xf32> to vector<8x32xf32>
    %100 = arith.addf %98, %99 : vector<8x32xf32>
    %c0_46 = arith.constant 0 : index
    %c0_47 = arith.constant 0 : index
    %101 = vector.load %arg12[%c0_46, %c0_47] : memref<32x128xf32, #tpu.memory_space<vmem>>, vector<32x128xf32>
    %cst_48 = arith.constant dense<0.000000e+00> : vector<8x128xf32>
    %102 = tpu.matmul %100, %101, %cst_48 {dimension_numbers = #tpu.dot_dimension_numbers<[1], [0], [0], [1], [0, 0, 1, 1], [], []>} : vector<8x32xf32>, vector<32x128xf32>, vector<8x128xf32> -> vector<8x128xf32>
    %c0_49 = arith.constant 0 : index
    %c0_50 = arith.constant 0 : index
    %103 = vector.load %arg13[%c0_49, %c0_50] : memref<1x128xf32, #tpu.memory_space<vmem>>, vector<1x128xf32>
    %104 = vector.broadcast %103 : vector<1x128xf32> to vector<8x128xf32>
    %105 = arith.addf %102, %104 : vector<8x128xf32>
    %cst_51 = arith.constant 0.000000e+00 : f32
    %106 = vector.broadcast %cst_51 : f32 to vector<8x128xf32>
    %107 = arith.maximumf %105, %106 : vector<8x128xf32>
    %c0_52 = arith.constant 0 : index
    %c0_53 = arith.constant 0 : index
    %108 = vector.load %arg14[%c0_52, %c0_53] : memref<128x32xf32, #tpu.memory_space<vmem>>, vector<128x32xf32>
    %cst_54 = arith.constant dense<0.000000e+00> : vector<8x32xf32>
    %109 = tpu.matmul %107, %108, %cst_54 {dimension_numbers = #tpu.dot_dimension_numbers<[1], [0], [0], [1], [0, 0, 1, 1], [], []>} : vector<8x128xf32>, vector<128x32xf32>, vector<8x32xf32> -> vector<8x32xf32>
    %c0_55 = arith.constant 0 : index
    %c0_56 = arith.constant 0 : index
    %110 = vector.load %arg15[%c0_55, %c0_56] : memref<1x32xf32, #tpu.memory_space<vmem>>, vector<1x32xf32>
    %111 = vector.broadcast %110 : vector<1x32xf32> to vector<8x32xf32>
    %112 = arith.addf %109, %111 : vector<8x32xf32>
    %113 = arith.addf %100, %112 : vector<8x32xf32>
    %c0_57 = arith.constant 0 : index
    %c0_58 = arith.constant 0 : index
    %114 = vector.load %arg16[%c0_57, %c0_58] : memref<1x32xf32, #tpu.memory_space<vmem>>, vector<1x32xf32>
    %c0_59 = arith.constant 0 : index
    %c0_60 = arith.constant 0 : index
    %115 = vector.load %arg17[%c0_59, %c0_60] : memref<1x32xf32, #tpu.memory_space<vmem>>, vector<1x32xf32>
    %cst_61 = arith.constant dense<0.000000e+00> : vector<8xf32>
    %116 = vector.multi_reduction <add>, %113, %cst_61 [1] : vector<8x32xf32> to vector<8xf32>
    %117 = vector.shape_cast %116 : vector<8xf32> to vector<8x1xf32>
    %cst_62 = arith.constant 3.200000e+01 : f32
    %118 = vector.broadcast %cst_62 : f32 to vector<8x1xf32>
    %119 = arith.divf %117, %118 : vector<8x1xf32>
    %120 = vector.broadcast %119 : vector<8x1xf32> to vector<8x32xf32>
    %121 = arith.subf %113, %120 : vector<8x32xf32>
    %122 = arith.mulf %121, %121 : vector<8x32xf32>
    %cst_63 = arith.constant dense<0.000000e+00> : vector<8xf32>
    %123 = vector.multi_reduction <add>, %122, %cst_63 [1] : vector<8x32xf32> to vector<8xf32>
    %124 = vector.shape_cast %123 : vector<8xf32> to vector<8x1xf32>
    %cst_64 = arith.constant 3.200000e+01 : f32
    %125 = vector.broadcast %cst_64 : f32 to vector<8x1xf32>
    %126 = arith.divf %124, %125 : vector<8x1xf32>
    %127 = vector.broadcast %119 : vector<8x1xf32> to vector<8x32xf32>
    %128 = arith.subf %113, %127 : vector<8x32xf32>
    %cst_65 = arith.constant 9.99999974E-6 : f32
    %129 = vector.broadcast %cst_65 : f32 to vector<8x1xf32>
    %130 = arith.addf %126, %129 : vector<8x1xf32>
    %131 = math.rsqrt %130 : vector<8x1xf32>
    %132 = vector.broadcast %131 : vector<8x1xf32> to vector<8x32xf32>
    %133 = arith.mulf %128, %132 : vector<8x32xf32>
    %134 = vector.broadcast %114 : vector<1x32xf32> to vector<8x32xf32>
    %135 = arith.mulf %133, %134 : vector<8x32xf32>
    %136 = vector.broadcast %115 : vector<1x32xf32> to vector<8x32xf32>
    %137 = arith.addf %135, %136 : vector<8x32xf32>
    %c0_66 = arith.constant 0 : index
    %c0_67 = arith.constant 0 : index
    %c0_68 = arith.constant 0 : index
    %138 = vector.load %arg18[%c0_66, %c0_67, %c0_68] : memref<1x8x32xf32, #tpu.memory_space<vmem>>, vector<1x8x32xf32>
    %139 = vector.shape_cast %138 : vector<1x8x32xf32> to vector<8x32xf32>
    %140 = vector.shape_cast %137 : vector<8x32xf32> to vector<1x8x32xf32>
    tpu.vector_store %arg18[%c0_66, %c0_67, %c0_68], %140 {strides = array<i32>} : memref<1x8x32xf32, #tpu.memory_space<vmem>>, vector<1x8x32xf32>,
    return
  }
  func.func @transform_0(%arg0: i32, %arg1: i32) -> (i32, i32, i32) {
    %c0_i32 = arith.constant 0 : i32
    %c0_i32_0 = arith.constant 0 : i32
    return %arg0, %arg1, %c0_i32 : i32, i32, i32
  }
  func.func @transform_1(%arg0: i32, %arg1: i32) -> (i32, i32, i32) {
    %c0_i32 = arith.constant 0 : i32
    %c0_i32_0 = arith.constant 0 : i32
    %c0_i32_1 = arith.constant 0 : i32
    return %arg0, %c0_i32, %c0_i32_0 : i32, i32, i32
  }
  func.func @transform_2(%arg0: i32, %arg1: i32) -> (i32, i32) {
    %c0_i32 = arith.constant 0 : i32
    %c0_i32_0 = arith.constant 0 : i32
    %c0_i32_1 = arith.constant 0 : i32
    return %c0_i32, %c0_i32_0 : i32, i32
  }
  func.func @transform_3(%arg0: i32, %arg1: i32) -> (i32, i32) {
    %c0_i32 = arith.constant 0 : i32
    %c0_i32_0 = arith.constant 0 : i32
    %c0_i32_1 = arith.constant 0 : i32
    return %c0_i32, %c0_i32_0 : i32, i32
  }
  func.func @transform_4(%arg0: i32, %arg1: i32) -> (i32, i32) {
    %c0_i32 = arith.constant 0 : i32
    %c0_i32_0 = arith.constant 0 : i32
    %c0_i32_1 = arith.constant 0 : i32
    return %c0_i32, %c0_i32_0 : i32, i32
  }
  func.func @transform_5(%arg0: i32, %arg1: i32) -> (i32, i32) {
    %c0_i32 = arith.constant 0 : i32
    %c0_i32_0 = arith.constant 0 : i32
    %c0_i32_1 = arith.constant 0 : i32
    return %c0_i32, %c0_i32_0 : i32, i32
  }
  func.func @transform_6(%arg0: i32, %arg1: i32) -> (i32, i32) {
    %c0_i32 = arith.constant 0 : i32
    %c0_i32_0 = arith.constant 0 : i32
    %c0_i32_1 = arith.constant 0 : i32
    return %c0_i32, %c0_i32_0 : i32, i32
  }
  func.func @transform_7(%arg0: i32, %arg1: i32) -> (i32, i32) {
    %c0_i32 = arith.constant 0 : i32
    %c0_i32_0 = arith.constant 0 : i32
    %c0_i32_1 = arith.constant 0 : i32
    return %c0_i32, %c0_i32_0 : i32, i32
  }
  func.func @transform_8(%arg0: i32, %arg1: i32) -> (i32, i32) {
    %c0_i32 = arith.constant 0 : i32
    %c0_i32_0 = arith.constant 0 : i32
    %c0_i32_1 = arith.constant 0 : i32
    return %c0_i32, %c0_i32_0 : i32, i32
  }
  func.func @transform_9(%arg0: i32, %arg1: i32) -> (i32, i32) {
    %c0_i32 = arith.constant 0 : i32
    %c0_i32_0 = arith.constant 0 : i32
    %c0_i32_1 = arith.constant 0 : i32
    return %c0_i32, %c0_i32_0 : i32, i32
  }
  func.func @transform_10(%arg0: i32, %arg1: i32) -> (i32, i32) {
    %c0_i32 = arith.constant 0 : i32
    %c0_i32_0 = arith.constant 0 : i32
    %c0_i32_1 = arith.constant 0 : i32
    return %c0_i32, %c0_i32_0 : i32, i32
  }
  func.func @transform_11(%arg0: i32, %arg1: i32) -> (i32, i32) {
    %c0_i32 = arith.constant 0 : i32
    %c0_i32_0 = arith.constant 0 : i32
    %c0_i32_1 = arith.constant 0 : i32
    return %c0_i32, %c0_i32_0 : i32, i32
  }
  func.func @transform_12(%arg0: i32, %arg1: i32) -> (i32, i32) {
    %c0_i32 = arith.constant 0 : i32
    %c0_i32_0 = arith.constant 0 : i32
    %c0_i32_1 = arith.constant 0 : i32
    return %c0_i32, %c0_i32_0 : i32, i32
  }
  func.func @transform_13(%arg0: i32, %arg1: i32) -> (i32, i32) {
    %c0_i32 = arith.constant 0 : i32
    %c0_i32_0 = arith.constant 0 : i32
    %c0_i32_1 = arith.constant 0 : i32
    return %c0_i32, %c0_i32_0 : i32, i32
  }
  func.func @transform_14(%arg0: i32, %arg1: i32) -> (i32, i32) {
    %c0_i32 = arith.constant 0 : i32
    %c0_i32_0 = arith.constant 0 : i32
    %c0_i32_1 = arith.constant 0 : i32
    return %c0_i32, %c0_i32_0 : i32, i32
  }
  func.func @transform_15(%arg0: i32, %arg1: i32) -> (i32, i32) {
    %c0_i32 = arith.constant 0 : i32
    %c0_i32_0 = arith.constant 0 : i32
    %c0_i32_1 = arith.constant 0 : i32
    return %c0_i32, %c0_i32_0 : i32, i32
  }
  func.func @transform_16(%arg0: i32, %arg1: i32) -> (i32, i32, i32) {
    %c0_i32 = arith.constant 0 : i32
    %c0_i32_0 = arith.constant 0 : i32
    return %arg0, %arg1, %c0_i32 : i32, i32, i32
  }
}

module attributes {stable_mosaic.version = 11 : i64} {
  func.func @cross_attn_block_kernel(%arg0: i32, %arg1: i32, %arg2: memref<1x8x32xf32, #tpu.memory_space<vmem>>, %arg3: memref<1x8x32xf32, #tpu.memory_space<vmem>>, %arg4: memref<32x32xf32, #tpu.memory_space<vmem>>, %arg5: memref<1x32xf32, #tpu.memory_space<vmem>>, %arg6: memref<32x64xf32, #tpu.memory_space<vmem>>, %arg7: memref<1x64xf32, #tpu.memory_space<vmem>>, %arg8: memref<32x32xf32, #tpu.memory_space<vmem>>, %arg9: memref<1x32xf32, #tpu.memory_space<vmem>>, %arg10: memref<1x32xf32, #tpu.memory_space<vmem>>, %arg11: memref<1x32xf32, #tpu.memory_space<vmem>>, %arg12: memref<32x128xf32, #tpu.memory_space<vmem>>, %arg13: memref<1x128xf32, #tpu.memory_space<vmem>>, %arg14: memref<128x32xf32, #tpu.memory_space<vmem>>, %arg15: memref<1x32xf32, #tpu.memory_space<vmem>>, %arg16: memref<1x32xf32, #tpu.memory_space<vmem>>, %arg17: memref<1x32xf32, #tpu.memory_space<vmem>>, %arg18: memref<1x8x32xf32, #tpu.memory_space<vmem>>, %arg19: memref<8x64xf32, #tpu.memory_space<vmem>>) attributes {dimension_semantics = [#tpu.dimension_semantics<parallel>, #tpu.dimension_semantics<arbitrary>], iteration_bounds = array<i64: 2, 2>, scalar_prefetch = 0 : i64, scratch_operands = 1 : i64, tpu.core_type = #tpu.core_type<tc>, window_params = [{transform_indices = @transform_0, window_bounds = array<i64: 1, 8, 32>}, {transform_indices = @transform_1, window_bounds = array<i64: 1, 8, 32>}, {pipeline_mode = #tpu.pipeline_mode<synchronous>, transform_indices = @transform_2, window_bounds = array<i64: 32, 32>}, {pipeline_mode = #tpu.pipeline_mode<synchronous>, transform_indices = @transform_3, window_bounds = array<i64: 1, 32>}, {pipeline_mode = #tpu.pipeline_mode<synchronous>, transform_indices = @transform_4, window_bounds = array<i64: 32, 64>}, {pipeline_mode = #tpu.pipeline_mode<synchronous>, transform_indices = @transform_5, window_bounds = array<i64: 1, 64>}, {pipeline_mode = #tpu.pipeline_mode<synchronous>, transform_indices = @transform_6, window_bounds = array<i64: 32, 32>}, {pipeline_mode = #tpu.pipeline_mode<synchronous>, transform_indices = @transform_7, window_bounds = array<i64: 1, 32>}, {pipeline_mode = #tpu.pipeline_mode<synchronous>, transform_indices = @transform_8, window_bounds = array<i64: 1, 32>}, {pipeline_mode = #tpu.pipeline_mode<synchronous>, transform_indices = @transform_9, window_bounds = array<i64: 1, 32>}, {pipeline_mode = #tpu.pipeline_mode<synchronous>, transform_indices = @transform_10, window_bounds = array<i64: 32, 128>}, {pipeline_mode = #tpu.pipeline_mode<synchronous>, transform_indices = @transform_11, window_bounds = array<i64: 1, 128>}, {pipeline_mode = #tpu.pipeline_mode<synchronous>, transform_indices = @transform_12, window_bounds = array<i64: 128, 32>}, {pipeline_mode = #tpu.pipeline_mode<synchronous>, transform_indices = @transform_13, window_bounds = array<i64: 1, 32>}, {pipeline_mode = #tpu.pipeline_mode<synchronous>, transform_indices = @transform_14, window_bounds = array<i64: 1, 32>}, {pipeline_mode = #tpu.pipeline_mode<synchronous>, transform_indices = @transform_15, window_bounds = array<i64: 1, 32>}, {transform_indices = @transform_16, window_bounds = array<i64: 1, 8, 32>}]} {
    %c0_i32 = arith.constant 0 : i32
    %0 = arith.cmpi eq, %arg1, %c0_i32 : i32
    %1 = arith.extui %0 : i1 to i32
    %c0_i32_0 = arith.constant 0 : i32
    %2 = arith.cmpi ne, %1, %c0_i32_0 : i32
    scf.if %2 {
      %c0_69 = arith.constant 0 : index
      %c0_70 = arith.constant 0 : index
      %c0_71 = arith.constant 0 : index
      %141 = vector.load %arg3[%c0_69, %c0_70, %c0_71] : memref<1x8x32xf32, #tpu.memory_space<vmem>>, vector<1x8x32xf32>
      %142 = vector.shape_cast %141 : vector<1x8x32xf32> to vector<8x32xf32>
      %c0_72 = arith.constant 0 : index
      %c0_73 = arith.constant 0 : index
      %143 = vector.load %arg6[%c0_72, %c0_73] : memref<32x64xf32, #tpu.memory_space<vmem>>, vector<32x64xf32>
      %cst_74 = arith.constant dense<0.000000e+00> : vector<8x64xf32>
      %144 = tpu.matmul %142, %143, %cst_74 {dimension_numbers = #tpu.dot_dimension_numbers<[1], [0], [0], [1], [0, 0, 1, 1], [], []>} : vector<8x32xf32>, vector<32x64xf32>, vector<8x64xf32> -> vector<8x64xf32>
      %c0_75 = arith.constant 0 : index
      %c0_76 = arith.constant 0 : index
      %145 = vector.load %arg7[%c0_75, %c0_76] : memref<1x64xf32, #tpu.memory_space<vmem>>, vector<1x64xf32>
      %146 = vector.broadcast %145 : vector<1x64xf32> to vector<8x64xf32>
      %147 = arith.addf %144, %146 : vector<8x64xf32>
      %c0_77 = arith.constant 0 : index
      %c0_78 = arith.constant 0 : index
      %148 = vector.load %arg19[%c0_77, %c0_78] : memref<8x64xf32, #tpu.memory_space<vmem>>, vector<8x64xf32>
      tpu.vector_store %arg19[%c0_77, %c0_78], %147 {strides = array<i32>} : memref<8x64xf32, #tpu.memory_space<vmem>>, vector<8x64xf32>,
    } else {
    }
    %c0 = arith.constant 0 : index
    %c0_1 = arith.constant 0 : index
    %c0_2 = arith.constant 0 : index
    %3 = vector.load %arg2[%c0, %c0_1, %c0_2] : memref<1x8x32xf32, #tpu.memory_space<vmem>>, vector<1x8x32xf32>
    %4 = vector.shape_cast %3 : vector<1x8x32xf32> to vector<8x32xf32>
    %c0_3 = arith.constant 0 : index
    %c0_4 = arith.constant 0 : index
    %5 = vector.load %arg4[%c0_3, %c0_4] : memref<32x32xf32, #tpu.memory_space<vmem>>, vector<32x32xf32>
    %cst = arith.constant dense<0.000000e+00> : vector<8x32xf32>
    %6 = tpu.matmul %4, %5, %cst {dimension_numbers = #tpu.dot_dimension_numbers<[1], [0], [0], [1], [0, 0, 1, 1], [], []>} : vector<8x32xf32>, vector<32x32xf32>, vector<8x32xf32> -> vector<8x32xf32>
    %c0_5 = arith.constant 0 : index
    %c0_6 = arith.constant 0 : index
    %7 = vector.load %arg5[%c0_5, %c0_6] : memref<1x32xf32, #tpu.memory_space<vmem>>, vector<1x32xf32>
    %8 = vector.broadcast %7 : vector<1x32xf32> to vector<8x32xf32>
    %9 = arith.addf %6, %8 : vector<8x32xf32>
    %10 = vector.extract_strided_slice %9 {offsets = [0, 0], sizes = [8, 8], strides = [1, 1]} : vector<8x32xf32> to vector<8x8xf32>
    %c0_7 = arith.constant 0 : index
    %c0_8 = arith.constant 0 : index
    %11 = vector.load %arg19[%c0_7, %c0_8] : memref<8x64xf32, #tpu.memory_space<vmem>>, vector<8x8xf32>
    %c0_9 = arith.constant 0 : index
    %c32 = arith.constant 32 : index
    %12 = vector.load %arg19[%c0_9, %c32] : memref<8x64xf32, #tpu.memory_space<vmem>>, vector<8x8xf32>
    "tpu.trace_start"() <{level = 10 : i32, message = "qf,kf->qk"}> : () -> ()
    %cst_10 = arith.constant dense<0.000000e+00> : vector<8x8xf32>
    %13 = tpu.matmul %10, %11, %cst_10 {dimension_numbers = #tpu.dot_dimension_numbers<[1], [1], [0], [0], [0, 0, 1, 0], [], []>} : vector<8x8xf32>, vector<8x8xf32>, vector<8x8xf32> -> vector<8x8xf32>
    "tpu.trace_stop"() : () -> ()
    %cst_11 = arith.constant dense<0xFF800000> : vector<8xf32>
    %14 = vector.multi_reduction <maximumf>, %13, %cst_11 [1] : vector<8x8xf32> to vector<8xf32>
    %15 = vector.shape_cast %14 : vector<8xf32> to vector<8x1xf32>
    %16 = vector.broadcast %15 : vector<8x1xf32> to vector<8x8xf32>
    %17 = arith.subf %13, %16 : vector<8x8xf32>
    %18 = math.exp %17 : vector<8x8xf32>
    %cst_12 = arith.constant dense<0.000000e+00> : vector<8xf32>
    %19 = vector.multi_reduction <add>, %18, %cst_12 [1] : vector<8x8xf32> to vector<8xf32>
    %20 = vector.shape_cast %19 : vector<8xf32> to vector<8x1xf32>
    %21 = tpu.reciprocal %20 {approx = true} : vector<8x1xf32> -> vector<8x1xf32>
    %22 = vector.broadcast %21 : vector<8x1xf32> to vector<8x8xf32>
    %23 = arith.mulf %18, %22 : vector<8x8xf32>
    %cst_13 = arith.constant dense<0.000000e+00> : vector<8x8xf32>
    %24 = tpu.matmul %23, %12, %cst_13 {dimension_numbers = #tpu.dot_dimension_numbers<[1], [0], [0], [1], [0, 0, 1, 1], [], []>} : vector<8x8xf32>, vector<8x8xf32>, vector<8x8xf32> -> vector<8x8xf32>
    %25 = vector.extract_strided_slice %9 {offsets = [0, 8], sizes = [8, 8], strides = [1, 1]} : vector<8x32xf32> to vector<8x8xf32>
    %c0_14 = arith.constant 0 : index
    %c8 = arith.constant 8 : index
    %26 = vector.load %arg19[%c0_14, %c8] : memref<8x64xf32, #tpu.memory_space<vmem>>, vector<8x8xf32>
    %c0_15 = arith.constant 0 : index
    %c40 = arith.constant 40 : index
    %27 = vector.load %arg19[%c0_15, %c40] : memref<8x64xf32, #tpu.memory_space<vmem>>, vector<8x8xf32>
    "tpu.trace_start"() <{level = 10 : i32, message = "qf,kf->qk"}> : () -> ()
    %cst_16 = arith.constant dense<0.000000e+00> : vector<8x8xf32>
    %28 = tpu.matmul %25, %26, %cst_16 {dimension_numbers = #tpu.dot_dimension_numbers<[1], [1], [0], [0], [0, 0, 1, 0], [], []>} : vector<8x8xf32>, vector<8x8xf32>, vector<8x8xf32> -> vector<8x8xf32>
    "tpu.trace_stop"() : () -> ()
    %cst_17 = arith.constant dense<0xFF800000> : vector<8xf32>
    %29 = vector.multi_reduction <maximumf>, %28, %cst_17 [1] : vector<8x8xf32> to vector<8xf32>
    %30 = vector.shape_cast %29 : vector<8xf32> to vector<8x1xf32>
    %31 = vector.broadcast %30 : vector<8x1xf32> to vector<8x8xf32>
    %32 = arith.subf %28, %31 : vector<8x8xf32>
    %33 = math.exp %32 : vector<8x8xf32>
    %cst_18 = arith.constant dense<0.000000e+00> : vector<8xf32>
    %34 = vector.multi_reduction <add>, %33, %cst_18 [1] : vector<8x8xf32> to vector<8xf32>
    %35 = vector.shape_cast %34 : vector<8xf32> to vector<8x1xf32>
    %36 = tpu.reciprocal %35 {approx = true} : vector<8x1xf32> -> vector<8x1xf32>
    %37 = vector.broadcast %36 : vector<8x1xf32> to vector<8x8xf32>
    %38 = arith.mulf %33, %37 : vector<8x8xf32>
    %cst_19 = arith.constant dense<0.000000e+00> : vector<8x8xf32>
    %39 = tpu.matmul %38, %27, %cst_19 {dimension_numbers = #tpu.dot_dimension_numbers<[1], [0], [0], [1], [0, 0, 1, 1], [], []>} : vector<8x8xf32>, vector<8x8xf32>, vector<8x8xf32> -> vector<8x8xf32>
    %40 = vector.extract_strided_slice %9 {offsets = [0, 16], sizes = [8, 8], strides = [1, 1]} : vector<8x32xf32> to vector<8x8xf32>
    %c0_20 = arith.constant 0 : index
    %c16 = arith.constant 16 : index
    %41 = vector.load %arg19[%c0_20, %c16] : memref<8x64xf32, #tpu.memory_space<vmem>>, vector<8x8xf32>
    %c0_21 = arith.constant 0 : index
    %c48 = arith.constant 48 : index
    %42 = vector.load %arg19[%c0_21, %c48] : memref<8x64xf32, #tpu.memory_space<vmem>>, vector<8x8xf32>
    "tpu.trace_start"() <{level = 10 : i32, message = "qf,kf->qk"}> : () -> ()
    %cst_22 = arith.constant dense<0.000000e+00> : vector<8x8xf32>
    %43 = tpu.matmul %40, %41, %cst_22 {dimension_numbers = #tpu.dot_dimension_numbers<[1], [1], [0], [0], [0, 0, 1, 0], [], []>} : vector<8x8xf32>, vector<8x8xf32>, vector<8x8xf32> -> vector<8x8xf32>
    "tpu.trace_stop"() : () -> ()
    %cst_23 = arith.constant dense<0xFF800000> : vector<8xf32>
    %44 = vector.multi_reduction <maximumf>, %43, %cst_23 [1] : vector<8x8xf32> to vector<8xf32>
    %45 = vector.shape_cast %44 : vector<8xf32> to vector<8x1xf32>
    %46 = vector.broadcast %45 : vector<8x1xf32> to vector<8x8xf32>
    %47 = arith.subf %43, %46 : vector<8x8xf32>
    %48 = math.exp %47 : vector<8x8xf32>
    %cst_24 = arith.constant dense<0.000000e+00> : vector<8xf32>
    %49 = vector.multi_reduction <add>, %48, %cst_24 [1] : vector<8x8xf32> to vector<8xf32>
    %50 = vector.shape_cast %49 : vector<8xf32> to vector<8x1xf32>
    %51 = tpu.reciprocal %50 {approx = true} : vector<8x1xf32> -> vector<8x1xf32>
    %52 = vector.broadcast %51 : vector<8x1xf32> to vector<8x8xf32>
    %53 = arith.mulf %48, %52 : vector<8x8xf32>
    %cst_25 = arith.constant dense<0.000000e+00> : vector<8x8xf32>
    %54 = tpu.matmul %53, %42, %cst_25 {dimension_numbers = #tpu.dot_dimension_numbers<[1], [0], [0], [1], [0, 0, 1, 1], [], []>} : vector<8x8xf32>, vector<8x8xf32>, vector<8x8xf32> -> vector<8x8xf32>
    %55 = vector.extract_strided_slice %9 {offsets = [0, 24], sizes = [8, 8], strides = [1, 1]} : vector<8x32xf32> to vector<8x8xf32>
    %c0_26 = arith.constant 0 : index
    %c24 = arith.constant 24 : index
    %56 = vector.load %arg19[%c0_26, %c24] : memref<8x64xf32, #tpu.memory_space<vmem>>, vector<8x8xf32>
    %c0_27 = arith.constant 0 : index
    %c56 = arith.constant 56 : index
    %57 = vector.load %arg19[%c0_27, %c56] : memref<8x64xf32, #tpu.memory_space<vmem>>, vector<8x8xf32>
    "tpu.trace_start"() <{level = 10 : i32, message = "qf,kf->qk"}> : () -> ()
    %cst_28 = arith.constant dense<0.000000e+00> : vector<8x8xf32>
    %58 = tpu.matmul %55, %56, %cst_28 {dimension_numbers = #tpu.dot_dimension_numbers<[1], [1], [0], [0], [0, 0, 1, 0], [], []>} : vector<8x8xf32>, vector<8x8xf32>, vector<8x8xf32> -> vector<8x8xf32>
    "tpu.trace_stop"() : () -> ()
    %cst_29 = arith.constant dense<0xFF800000> : vector<8xf32>
    %59 = vector.multi_reduction <maximumf>, %58, %cst_29 [1] : vector<8x8xf32> to vector<8xf32>
    %60 = vector.shape_cast %59 : vector<8xf32> to vector<8x1xf32>
    %61 = vector.broadcast %60 : vector<8x1xf32> to vector<8x8xf32>
    %62 = arith.subf %58, %61 : vector<8x8xf32>
    %63 = math.exp %62 : vector<8x8xf32>
    %cst_30 = arith.constant dense<0.000000e+00> : vector<8xf32>
    %64 = vector.multi_reduction <add>, %63, %cst_30 [1] : vector<8x8xf32> to vector<8xf32>
    %65 = vector.shape_cast %64 : vector<8xf32> to vector<8x1xf32>
    %66 = tpu.reciprocal %65 {approx = true} : vector<8x1xf32> -> vector<8x1xf32>
    %67 = vector.broadcast %66 : vector<8x1xf32> to vector<8x8xf32>
    %68 = arith.mulf %63, %67 : vector<8x8xf32>
    %cst_31 = arith.constant dense<0.000000e+00> : vector<8x8xf32>
    %69 = tpu.matmul %68, %57, %cst_31 {dimension_numbers = #tpu.dot_dimension_numbers<[1], [0], [0], [1], [0, 0, 1, 1], [], []>} : vector<8x8xf32>, vector<8x8xf32>, vector<8x8xf32> -> vector<8x8xf32>
    %70 = tpu.concatenate %24, %39, %54, %69 in 1 : vector<8x8xf32>, vector<8x8xf32>, vector<8x8xf32>, vector<8x8xf32> -> vector<8x32xf32>
    %c0_32 = arith.constant 0 : index
    %c0_33 = arith.constant 0 : index
    %71 = vector.load %arg8[%c0_32, %c0_33] : memref<32x32xf32, #tpu.memory_space<vmem>>, vector<32x32xf32>
    %cst_34 = arith.constant dense<0.000000e+00> : vector<8x32xf32>
    %72 = tpu.matmul %70, %71, %cst_34 {dimension_numbers = #tpu.dot_dimension_numbers<[1], [0], [0], [1], [0, 0, 1, 1], [], []>} : vector<8x32xf32>, vector<32x32xf32>, vector<8x32xf32> -> vector<8x32xf32>
    %c0_35 = arith.constant 0 : index
    %c0_36 = arith.constant 0 : index
    %73 = vector.load %arg9[%c0_35, %c0_36] : memref<1x32xf32, #tpu.memory_space<vmem>>, vector<1x32xf32>
    %74 = vector.broadcast %73 : vector<1x32xf32> to vector<8x32xf32>
    %75 = arith.addf %72, %74 : vector<8x32xf32>
    %76 = arith.addf %4, %75 : vector<8x32xf32>
    %c0_37 = arith.constant 0 : index
    %c0_38 = arith.constant 0 : index
    %77 = vector.load %arg10[%c0_37, %c0_38] : memref<1x32xf32, #tpu.memory_space<vmem>>, vector<1x32xf32>
    %c0_39 = arith.constant 0 : index
    %c0_40 = arith.constant 0 : index
    %78 = vector.load %arg11[%c0_39, %c0_40] : memref<1x32xf32, #tpu.memory_space<vmem>>, vector<1x32xf32>
    %cst_41 = arith.constant dense<0.000000e+00> : vector<8xf32>
    %79 = vector.multi_reduction <add>, %76, %cst_41 [1] : vector<8x32xf32> to vector<8xf32>
    %80 = vector.shape_cast %79 : vector<8xf32> to vector<8x1xf32>
    %cst_42 = arith.constant 3.200000e+01 : f32
    %81 = vector.broadcast %cst_42 : f32 to vector<8x1xf32>
    %82 = arith.divf %80, %81 : vector<8x1xf32>
    %83 = vector.broadcast %82 : vector<8x1xf32> to vector<8x32xf32>
    %84 = arith.subf %76, %83 : vector<8x32xf32>
    %85 = arith.mulf %84, %84 : vector<8x32xf32>
    %cst_43 = arith.constant dense<0.000000e+00> : vector<8xf32>
    %86 = vector.multi_reduction <add>, %85, %cst_43 [1] : vector<8x32xf32> to vector<8xf32>
    %87 = vector.shape_cast %86 : vector<8xf32> to vector<8x1xf32>
    %cst_44 = arith.constant 3.200000e+01 : f32
    %88 = vector.broadcast %cst_44 : f32 to vector<8x1xf32>
    %89 = arith.divf %87, %88 : vector<8x1xf32>
    %90 = vector.broadcast %82 : vector<8x1xf32> to vector<8x32xf32>
    %91 = arith.subf %76, %90 : vector<8x32xf32>
    %cst_45 = arith.constant 9.99999974E-6 : f32
    %92 = vector.broadcast %cst_45 : f32 to vector<8x1xf32>
    %93 = arith.addf %89, %92 : vector<8x1xf32>
    %94 = math.rsqrt %93 : vector<8x1xf32>
    %95 = vector.broadcast %94 : vector<8x1xf32> to vector<8x32xf32>
    %96 = arith.mulf %91, %95 : vector<8x32xf32>
    %97 = vector.broadcast %77 : vector<1x32xf32> to vector<8x32xf32>
    %98 = arith.mulf %96, %97 : vector<8x32xf32>
    %99 = vector.broadcast %78 : vector<1x32xf32> to vector<8x32xf32>
    %100 = arith.addf %98, %99 : vector<8x32xf32>
    %c0_46 = arith.constant 0 : index
    %c0_47 = arith.constant 0 : index
    %101 = vector.load %arg12[%c0_46, %c0_47] : memref<32x128xf32, #tpu.memory_space<vmem>>, vector<32x128xf32>
    %cst_48 = arith.constant dense<0.000000e+00> : vector<8x128xf32>
    %102 = tpu.matmul %100, %101, %cst_48 {dimension_numbers = #tpu.dot_dimension_numbers<[1], [0], [0], [1], [0, 0, 1, 1], [], []>} : vector<8x32xf32>, vector<32x128xf32>, vector<8x128xf32> -> vector<8x128xf32>
    %c0_49 = arith.constant 0 : index
    %c0_50 = arith.constant 0 : index
    %103 = vector.load %arg13[%c0_49, %c0_50] : memref<1x128xf32, #tpu.memory_space<vmem>>, vector<1x128xf32>
    %104 = vector.broadcast %103 : vector<1x128xf32> to vector<8x128xf32>
    %105 = arith.addf %102, %104 : vector<8x128xf32>
    %cst_51 = arith.constant 0.000000e+00 : f32
    %106 = vector.broadcast %cst_51 : f32 to vector<8x128xf32>
    %107 = arith.maximumf %105, %106 : vector<8x128xf32>
    %c0_52 = arith.constant 0 : index
    %c0_53 = arith.constant 0 : index
    %108 = vector.load %arg14[%c0_52, %c0_53] : memref<128x32xf32, #tpu.memory_space<vmem>>, vector<128x32xf32>
    %cst_54 = arith.constant dense<0.000000e+00> : vector<8x32xf32>
    %109 = tpu.matmul %107, %108, %cst_54 {dimension_numbers = #tpu.dot_dimension_numbers<[1], [0], [0], [1], [0, 0, 1, 1], [], []>} : vector<8x128xf32>, vector<128x32xf32>, vector<8x32xf32> -> vector<8x32xf32>
    %c0_55 = arith.constant 0 : index
    %c0_56 = arith.constant 0 : index
    %110 = vector.load %arg15[%c0_55, %c0_56] : memref<1x32xf32, #tpu.memory_space<vmem>>, vector<1x32xf32>
    %111 = vector.broadcast %110 : vector<1x32xf32> to vector<8x32xf32>
    %112 = arith.addf %109, %111 : vector<8x32xf32>
    %113 = arith.addf %100, %112 : vector<8x32xf32>
    %c0_57 = arith.constant 0 : index
    %c0_58 = arith.constant 0 : index
    %114 = vector.load %arg16[%c0_57, %c0_58] : memref<1x32xf32, #tpu.memory_space<vmem>>, vector<1x32xf32>
    %c0_59 = arith.constant 0 : index
    %c0_60 = arith.constant 0 : index
    %115 = vector.load %arg17[%c0_59, %c0_60] : memref<1x32xf32, #tpu.memory_space<vmem>>, vector<1x32xf32>
    %cst_61 = arith.constant dense<0.000000e+00> : vector<8xf32>
    %116 = vector.multi_reduction <add>, %113, %cst_61 [1] : vector<8x32xf32> to vector<8xf32>
    %117 = vector.shape_cast %116 : vector<8xf32> to vector<8x1xf32>
    %cst_62 = arith.constant 3.200000e+01 : f32
    %118 = vector.broadcast %cst_62 : f32 to vector<8x1xf32>
    %119 = arith.divf %117, %118 : vector<8x1xf32>
    %120 = vector.broadcast %119 : vector<8x1xf32> to vector<8x32xf32>
    %121 = arith.subf %113, %120 : vector<8x32xf32>
    %122 = arith.mulf %121, %121 : vector<8x32xf32>
    %cst_63 = arith.constant dense<0.000000e+00> : vector<8xf32>
    %123 = vector.multi_reduction <add>, %122, %cst_63 [1] : vector<8x32xf32> to vector<8xf32>
    %124 = vector.shape_cast %123 : vector<8xf32> to vector<8x1xf32>
    %cst_64 = arith.constant 3.200000e+01 : f32
    %125 = vector.broadcast %cst_64 : f32 to vector<8x1xf32>
    %126 = arith.divf %124, %125 : vector<8x1xf32>
    %127 = vector.broadcast %119 : vector<8x1xf32> to vector<8x32xf32>
    %128 = arith.subf %113, %127 : vector<8x32xf32>
    %cst_65 = arith.constant 9.99999974E-6 : f32
    %129 = vector.broadcast %cst_65 : f32 to vector<8x1xf32>
    %130 = arith.addf %126, %129 : vector<8x1xf32>
    %131 = math.rsqrt %130 : vector<8x1xf32>
    %132 = vector.broadcast %131 : vector<8x1xf32> to vector<8x32xf32>
    %133 = arith.mulf %128, %132 : vector<8x32xf32>
    %134 = vector.broadcast %114 : vector<1x32xf32> to vector<8x32xf32>
    %135 = arith.mulf %133, %134 : vector<8x32xf32>
    %136 = vector.broadcast %115 : vector<1x32xf32> to vector<8x32xf32>
    %137 = arith.addf %135, %136 : vector<8x32xf32>
    %c0_66 = arith.constant 0 : index
    %c0_67 = arith.constant 0 : index
    %c0_68 = arith.constant 0 : index
    %138 = vector.load %arg18[%c0_66, %c0_67, %c0_68] : memref<1x8x32xf32, #tpu.memory_space<vmem>>, vector<1x8x32xf32>
    %139 = vector.shape_cast %138 : vector<1x8x32xf32> to vector<8x32xf32>
    %140 = vector.shape_cast %137 : vector<8x32xf32> to vector<1x8x32xf32>
    tpu.vector_store %arg18[%c0_66, %c0_67, %c0_68], %140 {strides = array<i32>} : memref<1x8x32xf32, #tpu.memory_space<vmem>>, vector<1x8x32xf32>,
    return
  }
  func.func @transform_0(%arg0: i32, %arg1: i32) -> (i32, i32, i32) {
    %c0_i32 = arith.constant 0 : i32
    %c0_i32_0 = arith.constant 0 : i32
    return %arg0, %arg1, %c0_i32 : i32, i32, i32
  }
  func.func @transform_1(%arg0: i32, %arg1: i32) -> (i32, i32, i32) {
    %c0_i32 = arith.constant 0 : i32
    %c0_i32_0 = arith.constant 0 : i32
    %c0_i32_1 = arith.constant 0 : i32
    return %arg0, %c0_i32, %c0_i32_0 : i32, i32, i32
  }
  func.func @transform_2(%arg0: i32, %arg1: i32) -> (i32, i32) {
    %c0_i32 = arith.constant 0 : i32
    %c0_i32_0 = arith.constant 0 : i32
    %c0_i32_1 = arith.constant 0 : i32
    return %c0_i32, %c0_i32_0 : i32, i32
  }
  func.func @transform_3(%arg0: i32, %arg1: i32) -> (i32, i32) {
    %c0_i32 = arith.constant 0 : i32
    %c0_i32_0 = arith.constant 0 : i32
    %c0_i32_1 = arith.constant 0 : i32
    return %c0_i32, %c0_i32_0 : i32, i32
  }
  func.func @transform_4(%arg0: i32, %arg1: i32) -> (i32, i32) {
    %c0_i32 = arith.constant 0 : i32
    %c0_i32_0 = arith.constant 0 : i32
    %c0_i32_1 = arith.constant 0 : i32
    return %c0_i32, %c0_i32_0 : i32, i32
  }
  func.func @transform_5(%arg0: i32, %arg1: i32) -> (i32, i32) {
    %c0_i32 = arith.constant 0 : i32
    %c0_i32_0 = arith.constant 0 : i32
    %c0_i32_1 = arith.constant 0 : i32
    return %c0_i32, %c0_i32_0 : i32, i32
  }
  func.func @transform_6(%arg0: i32, %arg1: i32) -> (i32, i32) {
    %c0_i32 = arith.constant 0 : i32
    %c0_i32_0 = arith.constant 0 : i32
    %c0_i32_1 = arith.constant 0 : i32
    return %c0_i32, %c0_i32_0 : i32, i32
  }
  func.func @transform_7(%arg0: i32, %arg1: i32) -> (i32, i32) {
    %c0_i32 = arith.constant 0 : i32
    %c0_i32_0 = arith.constant 0 : i32
    %c0_i32_1 = arith.constant 0 : i32
    return %c0_i32, %c0_i32_0 : i32, i32
  }
  func.func @transform_8(%arg0: i32, %arg1: i32) -> (i32, i32) {
    %c0_i32 = arith.constant 0 : i32
    %c0_i32_0 = arith.constant 0 : i32
    %c0_i32_1 = arith.constant 0 : i32
    return %c0_i32, %c0_i32_0 : i32, i32
  }
  func.func @transform_9(%arg0: i32, %arg1: i32) -> (i32, i32) {
    %c0_i32 = arith.constant 0 : i32
    %c0_i32_0 = arith.constant 0 : i32
    %c0_i32_1 = arith.constant 0 : i32
    return %c0_i32, %c0_i32_0 : i32, i32
  }
  func.func @transform_10(%arg0: i32, %arg1: i32) -> (i32, i32) {
    %c0_i32 = arith.constant 0 : i32
    %c0_i32_0 = arith.constant 0 : i32
    %c0_i32_1 = arith.constant 0 : i32
    return %c0_i32, %c0_i32_0 : i32, i32
  }
  func.func @transform_11(%arg0: i32, %arg1: i32) -> (i32, i32) {
    %c0_i32 = arith.constant 0 : i32
    %c0_i32_0 = arith.constant 0 : i32
    %c0_i32_1 = arith.constant 0 : i32
    return %c0_i32, %c0_i32_0 : i32, i32
  }
  func.func @transform_12(%arg0: i32, %arg1: i32) -> (i32, i32) {
    %c0_i32 = arith.constant 0 : i32
    %c0_i32_0 = arith.constant 0 : i32
    %c0_i32_1 = arith.constant 0 : i32
    return %c0_i32, %c0_i32_0 : i32, i32
  }
  func.func @transform_13(%arg0: i32, %arg1: i32) -> (i32, i32) {
    %c0_i32 = arith.constant 0 : i32
    %c0_i32_0 = arith.constant 0 : i32
    %c0_i32_1 = arith.constant 0 : i32
    return %c0_i32, %c0_i32_0 : i32, i32
  }
  func.func @transform_14(%arg0: i32, %arg1: i32) -> (i32, i32) {
    %c0_i32 = arith.constant 0 : i32
    %c0_i32_0 = arith.constant 0 : i32
    %c0_i32_1 = arith.constant 0 : i32
    return %c0_i32, %c0_i32_0 : i32, i32
  }
  func.func @transform_15(%arg0: i32, %arg1: i32) -> (i32, i32) {
    %c0_i32 = arith.constant 0 : i32
    %c0_i32_0 = arith.constant 0 : i32
    %c0_i32_1 = arith.constant 0 : i32
    return %c0_i32, %c0_i32_0 : i32, i32
  }
  func.func @transform_16(%arg0: i32, %arg1: i32) -> (i32, i32, i32) {
    %c0_i32 = arith.constant 0 : i32
    %c0_i32_0 = arith.constant 0 : i32
    return %arg0, %arg1, %c0_i32 : i32, i32, i32
  }
}

</mosaic_0001>

<llo_original>
// kernel: tpu_custom_call.1
$region0: #{tpu_custom_call.1}
  #allocation0 [shape = 'u32[]', space=smem, size = 0x4, offset = 0x4, fixed_abs, tag = 'smem constant byte address 0x4 - core index']
  #allocation1 [shape = 'u32[144,128]{1,0:T(1,128)}', space=vmem, size = 0x12000, scoped, tag = 'internal scratch']
  #allocation2 [shape = 'f32[8,64]{1,0:T(8,128)}', space=vmem, size = 0x1000, scoped, tag = 'scratch operand']
  %s0 = inlined_call_operand.vmem [shape: f32[2,16,32], index: 0, kind: input, shape index: {}]
  %s1 = inlined_call_operand.hbm [shape: f32[2,8,32], index: 1, kind: input, shape index: {}]
  %s2 = inlined_call_operand.vmem [shape: f32[32,32], index: 2, kind: input, shape index: {}]
  %s3 = inlined_call_operand.vmem [shape: f32[1,32], index: 3, kind: input, shape index: {}]
  %s4 = inlined_call_operand.vmem [shape: f32[32,64], index: 4, kind: input, shape index: {}]
  %s5 = inlined_call_operand.vmem [shape: f32[1,64], index: 5, kind: input, shape index: {}]
  %s6 = inlined_call_operand.vmem [shape: f32[32,32], index: 6, kind: input, shape index: {}]
  %s7 = inlined_call_operand.vmem [shape: f32[1,32], index: 7, kind: input, shape index: {}]
  %s8 = inlined_call_operand.vmem [shape: f32[1,32], index: 8, kind: input, shape index: {}]
  %s9 = inlined_call_operand.vmem [shape: f32[1,32], index: 9, kind: input, shape index: {}]
  %s10 = inlined_call_operand.vmem [shape: f32[32,128], index: 10, kind: input, shape index: {}]
  %s11 = inlined_call_operand.vmem [shape: f32[1,128], index: 11, kind: input, shape index: {}]
  %s12 = inlined_call_operand.vmem [shape: f32[128,32], index: 12, kind: input, shape index: {}]
  %s13 = inlined_call_operand.vmem [shape: f32[1,32], index: 13, kind: input, shape index: {}]
  %s14 = inlined_call_operand.vmem [shape: f32[1,32], index: 14, kind: input, shape index: {}]
  %s15 = inlined_call_operand.vmem [shape: f32[1,32], index: 15, kind: input, shape index: {}]
  %s16 = inlined_call_operand.hbm [shape: f32[2,16,32], index: 16, kind: output, shape index: {}]
  %s17 = sld [smem:[#allocation0]]
  $region105: #{tpu_custom_call.1} parent=0
    _
  %s19 = ssub.s32 1, %s17
  %s20 = scalar_select 0, %s19, %s17
  $region1: #{tpu_custom_call.1} parent=0
    #allocation3 [shape = 'u8[8192]{0}', space=vmem, size = 0x2000, scoped, tag = 'input window, operand 1']
    #allocation4 [shape = 's32[2]{0}', space=sflag, size = 0x8, scoped, tag = 'scoped memory for tpu_custom_call.1']
    #allocation5 [shape = 's32[2]{0}', space=sflag, size = 0x8, scoped, tag = 'scoped memory for tpu_custom_call.1']
    #allocation6 [shape = 'u8[8192]{0}', space=vmem, size = 0x2000, scoped, tag = 'output window, operand 0']
    %21 = vsyncpa [#allocation4], 0
    %s22 = scalar_lea.sflag [#allocation4], 1
    %23 = vsyncpa %s22, 0
    %24 = vsyncpa [#allocation5], 0
    %s25 = scalar_lea.sflag [#allocation5], 1
    %26 = vsyncpa %s25, 0
    loop: start=0, step=1, limit=6
    $region2: #{tpu_custom_call.1} parent=1 // loop_pre_header
      _
    $region3: #{tpu_custom_call.1} parent=1 // loop_header
      %s28 = sphi 0, %s32
      %p29 = scmp.ge.s32.totalorder %s28, 6
      %s35 = sphi 0, %s47
      %s36 = sphi 0, %s43
      %s37 = sphi 0, %s35
      %s38 = sphi 0, %s36
      %s39 = sphi 0, %s37
      %s40 = sphi 0, %s38
      %s52 = sphi 0, %s54
      %s55 = sphi 0, %s52
      %s56 = sphi 0, %s55
      %s72 = sphi 0, %s56
      %s78 = sphi 0, %s80
      %s81 = sphi 0, %s78
      %s82 = sphi 0, %s81
      %s98 = sphi 0, %s82
      %s102 = sphi 0, %s102
      %s104 = sphi 0, %s102
      %s105 = sphi 0, %s104
      %s119 = sphi 0, %s105
      %s123 = sphi 0, %s123
      %s125 = sphi 0, %s123
      %s126 = sphi 0, %s125
      %s140 = sphi 0, %s126
      %s144 = sphi 0, %s144
      %s146 = sphi 0, %s144
      %s147 = sphi 0, %s146
      %s161 = sphi 0, %s147
      %s165 = sphi 0, %s165
      %s167 = sphi 0, %s165
      %s168 = sphi 0, %s167
      %s182 = sphi 0, %s168
      %s186 = sphi 0, %s186
      %s188 = sphi 0, %s186
      %s189 = sphi 0, %s188
      %s203 = sphi 0, %s189
      %s207 = sphi 0, %s207
      %s209 = sphi 0, %s207
      %s210 = sphi 0, %s209
      %s224 = sphi 0, %s210
      %s228 = sphi 0, %s228
      %s230 = sphi 0, %s228
      %s231 = sphi 0, %s230
      %s245 = sphi 0, %s231
      %s249 = sphi 0, %s249
      %s251 = sphi 0, %s249
      %s252 = sphi 0, %s251
      %s266 = sphi 0, %s252
      %s270 = sphi 0, %s270
      %s272 = sphi 0, %s270
      %s273 = sphi 0, %s272
      %s287 = sphi 0, %s273
      %s291 = sphi 0, %s291
      %s293 = sphi 0, %s291
      %s294 = sphi 0, %s293
      %s308 = sphi 0, %s294
      %s312 = sphi 0, %s312
      %s314 = sphi 0, %s312
      %s315 = sphi 0, %s314
      %s329 = sphi 0, %s315
      %s333 = sphi 0, %s333
      %s335 = sphi 0, %s333
      %s336 = sphi 0, %s335
      %s350 = sphi 0, %s336
      %s354 = sphi 0, %s354
      %s356 = sphi 0, %s354
      %s357 = sphi 0, %s356
      %s371 = sphi 0, %s357
      %s375 = sphi 0, %s375
      %s377 = sphi 0, %s375
      %s378 = sphi 0, %s377
      %s392 = sphi 0, %s378
      %s400 = sphi 0, %s402
      %s403 = sphi 0, %s400
      %s404 = sphi 0, %s403
      %s420 = sphi 0, %s404
    $region4: #{tpu_custom_call.1} parent=1 // loop_header_branch
      %31 = sbr.rel (%p29) target = $region8
    $region5: #{tpu_custom_call.1} parent=1 // loop_body
      %s33 = ssub.s32 %s28, 1
      %s34 = ssub.s32 %s28, 2
      %s41 = sadd.s32 1, %s36
      %p42 = scmp.ge.s32.totalorder %s41, 2
      %s43 = scalar_select %p42, 0, %s41
      %s44 = sadd.s32 1, %s35
      %s45 = scalar_select %p42, %s44, %s35
      %p46 = scmp.ge.s32.totalorder %s45, 2
      %s47 = scalar_select %p46, 0, %s45
      %s48 = ssub.s32 %s35, %s47
      %s49 = ssub.s32 %s36, %s43
      %s50 = sor.u32 %s48, %s49
      %p51 = scmp.eq.s32.totalorder %s50, 0
      %s53 = sadd.s32 %s52, 1
      %s54 = scalar_select %p51, %s52, %s53
      %p57 = pneg %p51
      %p58 = scmp.eq.s32.totalorder %s28, 3
      %p59 = por %p57, %p58
      %p60 = scmp.ne.s32.totalorder %s52, %s55
      %p61 = scmp.eq.s32.totalorder %s28, 0
      %p62 = por %p60, %p61
      %p63 = scmp.ne.s32.totalorder %s52, %s55
      %p64 = scmp.eq.s32.totalorder %s33, 3
      %p65 = por %p63, %p64
      %p66 = scmp.ne.s32.totalorder %s55, %s56
      %p67 = scmp.eq.s32.totalorder %s33, 0
      %p68 = por %p66, %p67
      %p69 = scmp.ne.s32.totalorder %s55, %s56
      %p70 = scmp.eq.s32.totalorder %s34, 3
      %p71 = por %p69, %p70
      %p73 = scmp.ne.s32.totalorder %s56, %s72
      %p74 = scmp.eq.s32.totalorder %s34, 0
      %p75 = por %p73, %p74
      %s76 = ssub.s32 %s35, %s47
      %p77 = scmp.eq.s32.totalorder %s76, 0
      %s79 = sadd.s32 %s78, 1
      %s80 = scalar_select %p77, %s78, %s79
      %p83 = pneg %p77
      %p84 = scmp.eq.s32.totalorder %s28, 3
      %p85 = por %p83, %p84
      %p86 = scmp.ne.s32.totalorder %s78, %s81
      %p87 = scmp.eq.s32.totalorder %s28, 0
      %p88 = por %p86, %p87
      %p89 = scmp.ne.s32.totalorder %s78, %s81
      %p90 = scmp.eq.s32.totalorder %s33, 3
      %p91 = por %p89, %p90
      %p92 = scmp.ne.s32.totalorder %s81, %s82
      %p93 = scmp.eq.s32.totalorder %s33, 0
      %p94 = por %p92, %p93
      %p95 = scmp.ne.s32.totalorder %s81, %s82
      %p96 = scmp.eq.s32.totalorder %s34, 3
      %p97 = por %p95, %p96
      %p99 = scmp.ne.s32.totalorder %s82, %s98
      %p100 = scmp.eq.s32.totalorder %s34, 0
      %p101 = por %p99, %p100
      %s103 = sadd.s32 %s102, 1
      %p106 = scmp.eq.s32.totalorder %s28, 3
      %p107 = scmp.ne.s32.totalorder %s102, %s104
      %p108 = scmp.eq.s32.totalorder %s28, 0
      %p109 = por %p107, %p108
      %p110 = scmp.ne.s32.totalorder %s102, %s104
      %p111 = scmp.eq.s32.totalorder %s33, 3
      %p112 = por %p110, %p111
      %p113 = scmp.ne.s32.totalorder %s104, %s105
      %p114 = scmp.eq.s32.totalorder %s33, 0
      %p115 = por %p113, %p114
      %p116 = scmp.ne.s32.totalorder %s104, %s105
      %p117 = scmp.eq.s32.totalorder %s34, 3
      %p118 = por %p116, %p117
      %p120 = scmp.ne.s32.totalorder %s105, %s119
      %p121 = scmp.eq.s32.totalorder %s34, 0
      %p122 = por %p120, %p121
      %s124 = sadd.s32 %s123, 1
      %p127 = scmp.eq.s32.totalorder %s28, 3
      %p128 = scmp.ne.s32.totalorder %s123, %s125
      %p129 = scmp.eq.s32.totalorder %s28, 0
      %p130 = por %p128, %p129
      %p131 = scmp.ne.s32.totalorder %s123, %s125
      %p132 = scmp.eq.s32.totalorder %s33, 3
      %p133 = por %p131, %p132
      %p134 = scmp.ne.s32.totalorder %s125, %s126
      %p135 = scmp.eq.s32.totalorder %s33, 0
      %p136 = por %p134, %p135
      %p137 = scmp.ne.s32.totalorder %s125, %s126
      %p138 = scmp.eq.s32.totalorder %s34, 3
      %p139 = por %p137, %p138
      %p141 = scmp.ne.s32.totalorder %s126, %s140
      %p142 = scmp.eq.s32.totalorder %s34, 0
      %p143 = por %p141, %p142
      %s145 = sadd.s32 %s144, 1
      %p148 = scmp.eq.s32.totalorder %s28, 3
      %p149 = scmp.ne.s32.totalorder %s144, %s146
      %p150 = scmp.eq.s32.totalorder %s28, 0
      %p151 = por %p149, %p150
      %p152 = scmp.ne.s32.totalorder %s144, %s146
      %p153 = scmp.eq.s32.totalorder %s33, 3
      %p154 = por %p152, %p153
      %p155 = scmp.ne.s32.totalorder %s146, %s147
      %p156 = scmp.eq.s32.totalorder %s33, 0
      %p157 = por %p155, %p156
      %p158 = scmp.ne.s32.totalorder %s146, %s147
      %p159 = scmp.eq.s32.totalorder %s34, 3
      %p160 = por %p158, %p159
      %p162 = scmp.ne.s32.totalorder %s147, %s161
      %p163 = scmp.eq.s32.totalorder %s34, 0
      %p164 = por %p162, %p163
      %s166 = sadd.s32 %s165, 1
      %p169 = scmp.eq.s32.totalorder %s28, 3
      %p170 = scmp.ne.s32.totalorder %s165, %s167
      %p171 = scmp.eq.s32.totalorder %s28, 0
      %p172 = por %p170, %p171
      %p173 = scmp.ne.s32.totalorder %s165, %s167
      %p174 = scmp.eq.s32.totalorder %s33, 3
      %p175 = por %p173, %p174
      %p176 = scmp.ne.s32.totalorder %s167, %s168
      %p177 = scmp.eq.s32.totalorder %s33, 0
      %p178 = por %p176, %p177
      %p179 = scmp.ne.s32.totalorder %s167, %s168
      %p180 = scmp.eq.s32.totalorder %s34, 3
      %p181 = por %p179, %p180
      %p183 = scmp.ne.s32.totalorder %s168, %s182
      %p184 = scmp.eq.s32.totalorder %s34, 0
      %p185 = por %p183, %p184
      %s187 = sadd.s32 %s186, 1
      %p190 = scmp.eq.s32.totalorder %s28, 3
      %p191 = scmp.ne.s32.totalorder %s186, %s188
      %p192 = scmp.eq.s32.totalorder %s28, 0
      %p193 = por %p191, %p192
      %p194 = scmp.ne.s32.totalorder %s186, %s188
      %p195 = scmp.eq.s32.totalorder %s33, 3
      %p196 = por %p194, %p195
      %p197 = scmp.ne.s32.totalorder %s188, %s189
      %p198 = scmp.eq.s32.totalorder %s33, 0
      %p199 = por %p197, %p198
      %p200 = scmp.ne.s32.totalorder %s188, %s189
      %p201 = scmp.eq.s32.totalorder %s34, 3
      %p202 = por %p200, %p201
      %p204 = scmp.ne.s32.totalorder %s189, %s203
      %p205 = scmp.eq.s32.totalorder %s34, 0
      %p206 = por %p204, %p205
      %s208 = sadd.s32 %s207, 1
      %p211 = scmp.eq.s32.totalorder %s28, 3
      %p212 = scmp.ne.s32.totalorder %s207, %s209
      %p213 = scmp.eq.s32.totalorder %s28, 0
      %p214 = por %p212, %p213
      %p215 = scmp.ne.s32.totalorder %s207, %s209
      %p216 = scmp.eq.s32.totalorder %s33, 3
      %p217 = por %p215, %p216
      %p218 = scmp.ne.s32.totalorder %s209, %s210
      %p219 = scmp.eq.s32.totalorder %s33, 0
      %p220 = por %p218, %p219
      %p221 = scmp.ne.s32.totalorder %s209, %s210
      %p222 = scmp.eq.s32.totalorder %s34, 3
      %p223 = por %p221, %p222
      %p225 = scmp.ne.s32.totalorder %s210, %s224
      %p226 = scmp.eq.s32.totalorder %s34, 0
      %p227 = por %p225, %p226
      %s229 = sadd.s32 %s228, 1
      %p232 = scmp.eq.s32.totalorder %s28, 3
      %p233 = scmp.ne.s32.totalorder %s228, %s230
      %p234 = scmp.eq.s32.totalorder %s28, 0
      %p235 = por %p233, %p234
      %p236 = scmp.ne.s32.totalorder %s228, %s230
      %p237 = scmp.eq.s32.totalorder %s33, 3
      %p238 = por %p236, %p237
      %p239 = scmp.ne.s32.totalorder %s230, %s231
      %p240 = scmp.eq.s32.totalorder %s33, 0
      %p241 = por %p239, %p240
      %p242 = scmp.ne.s32.totalorder %s230, %s231
      %p243 = scmp.eq.s32.totalorder %s34, 3
      %p244 = por %p242, %p243
      %p246 = scmp.ne.s32.totalorder %s231, %s245
      %p247 = scmp.eq.s32.totalorder %s34, 0
      %p248 = por %p246, %p247
      %s250 = sadd.s32 %s249, 1
      %p253 = scmp.eq.s32.totalorder %s28, 3
      %p254 = scmp.ne.s32.totalorder %s249, %s251
      %p255 = scmp.eq.s32.totalorder %s28, 0
      %p256 = por %p254, %p255
      %p257 = scmp.ne.s32.totalorder %s249, %s251
      %p258 = scmp.eq.s32.totalorder %s33, 3
      %p259 = por %p257, %p258
      %p260 = scmp.ne.s32.totalorder %s251, %s252
      %p261 = scmp.eq.s32.totalorder %s33, 0
      %p262 = por %p260, %p261
      %p263 = scmp.ne.s32.totalorder %s251, %s252
      %p264 = scmp.eq.s32.totalorder %s34, 3
      %p265 = por %p263, %p264
      %p267 = scmp.ne.s32.totalorder %s252, %s266
      %p268 = scmp.eq.s32.totalorder %s34, 0
      %p269 = por %p267, %p268
      %s271 = sadd.s32 %s270, 1
      %p274 = scmp.eq.s32.totalorder %s28, 3
      %p275 = scmp.ne.s32.totalorder %s270, %s272
      %p276 = scmp.eq.s32.totalorder %s28, 0
      %p277 = por %p275, %p276
      %p278 = scmp.ne.s32.totalorder %s270, %s272
      %p279 = scmp.eq.s32.totalorder %s33, 3
      %p280 = por %p278, %p279
      %p281 = scmp.ne.s32.totalorder %s272, %s273
      %p282 = scmp.eq.s32.totalorder %s33, 0
      %p283 = por %p281, %p282
      %p284 = scmp.ne.s32.totalorder %s272, %s273
      %p285 = scmp.eq.s32.totalorder %s34, 3
      %p286 = por %p284, %p285
      %p288 = scmp.ne.s32.totalorder %s273, %s287
      %p289 = scmp.eq.s32.totalorder %s34, 0
      %p290 = por %p288, %p289
      %s292 = sadd.s32 %s291, 1
      %p295 = scmp.eq.s32.totalorder %s28, 3
      %p296 = scmp.ne.s32.totalorder %s291, %s293
      %p297 = scmp.eq.s32.totalorder %s28, 0
      %p298 = por %p296, %p297
      %p299 = scmp.ne.s32.totalorder %s291, %s293
      %p300 = scmp.eq.s32.totalorder %s33, 3
      %p301 = por %p299, %p300
      %p302 = scmp.ne.s32.totalorder %s293, %s294
      %p303 = scmp.eq.s32.totalorder %s33, 0
      %p304 = por %p302, %p303
      %p305 = scmp.ne.s32.totalorder %s293, %s294
      %p306 = scmp.eq.s32.totalorder %s34, 3
      %p307 = por %p305, %p306
      %p309 = scmp.ne.s32.totalorder %s294, %s308
      %p310 = scmp.eq.s32.totalorder %s34, 0
      %p311 = por %p309, %p310
      %s313 = sadd.s32 %s312, 1
      %p316 = scmp.eq.s32.totalorder %s28, 3
      %p317 = scmp.ne.s32.totalorder %s312, %s314
      %p318 = scmp.eq.s32.totalorder %s28, 0
      %p319 = por %p317, %p318
      %p320 = scmp.ne.s32.totalorder %s312, %s314
      %p321 = scmp.eq.s32.totalorder %s33, 3
      %p322 = por %p320, %p321
      %p323 = scmp.ne.s32.totalorder %s314, %s315
      %p324 = scmp.eq.s32.totalorder %s33, 0
      %p325 = por %p323, %p324
      %p326 = scmp.ne.s32.totalorder %s314, %s315
      %p327 = scmp.eq.s32.totalorder %s34, 3
      %p328 = por %p326, %p327
      %p330 = scmp.ne.s32.totalorder %s315, %s329
      %p331 = scmp.eq.s32.totalorder %s34, 0
      %p332 = por %p330, %p331
      %s334 = sadd.s32 %s333, 1
      %p337 = scmp.eq.s32.totalorder %s28, 3
      %p338 = scmp.ne.s32.totalorder %s333, %s335
      %p339 = scmp.eq.s32.totalorder %s28, 0
      %p340 = por %p338, %p339
      %p341 = scmp.ne.s32.totalorder %s333, %s335
      %p342 = scmp.eq.s32.totalorder %s33, 3
      %p343 = por %p341, %p342
      %p344 = scmp.ne.s32.totalorder %s335, %s336
      %p345 = scmp.eq.s32.totalorder %s33, 0
      %p346 = por %p344, %p345
      %p347 = scmp.ne.s32.totalorder %s335, %s336
      %p348 = scmp.eq.s32.totalorder %s34, 3
      %p349 = por %p347, %p348
      %p351 = scmp.ne.s32.totalorder %s336, %s350
      %p352 = scmp.eq.s32.totalorder %s34, 0
      %p353 = por %p351, %p352
      %s355 = sadd.s32 %s354, 1
      %p358 = scmp.eq.s32.totalorder %s28, 3
      %p359 = scmp.ne.s32.totalorder %s354, %s356
      %p360 = scmp.eq.s32.totalorder %s28, 0
      %p361 = por %p359, %p360
      %p362 = scmp.ne.s32.totalorder %s354, %s356
      %p363 = scmp.eq.s32.totalorder %s33, 3
      %p364 = por %p362, %p363
      %p365 = scmp.ne.s32.totalorder %s356, %s357
      %p366 = scmp.eq.s32.totalorder %s33, 0
      %p367 = por %p365, %p366
      %p368 = scmp.ne.s32.totalorder %s356, %s357
      %p369 = scmp.eq.s32.totalorder %s34, 3
      %p370 = por %p368, %p369
      %p372 = scmp.ne.s32.totalorder %s357, %s371
      %p373 = scmp.eq.s32.totalorder %s34, 0
      %p374 = por %p372, %p373
      %s376 = sadd.s32 %s375, 1
      %p379 = scmp.eq.s32.totalorder %s28, 3
      %p380 = scmp.ne.s32.totalorder %s375, %s377
      %p381 = scmp.eq.s32.totalorder %s28, 0
      %p382 = por %p380, %p381
      %p383 = scmp.ne.s32.totalorder %s375, %s377
      %p384 = scmp.eq.s32.totalorder %s33, 3
      %p385 = por %p383, %p384
      %p386 = scmp.ne.s32.totalorder %s377, %s378
      %p387 = scmp.eq.s32.totalorder %s33, 0
      %p388 = por %p386, %p387
      %p389 = scmp.ne.s32.totalorder %s377, %s378
      %p390 = scmp.eq.s32.totalorder %s34, 3
      %p391 = por %p389, %p390
      %p393 = scmp.ne.s32.totalorder %s378, %s392
      %p394 = scmp.eq.s32.totalorder %s34, 0
      %p395 = por %p393, %p394
      %s396 = ssub.s32 %s35, %s47
      %s397 = ssub.s32 %s36, %s43
      %s398 = sor.u32 %s396, %s397
      %p399 = scmp.eq.s32.totalorder %s398, 0
      %s401 = sadd.s32 %s400, 1
      %s402 = scalar_select %p399, %s400, %s401
      %p405 = pneg %p399
      %p406 = scmp.eq.s32.totalorder %s28, 3
      %p407 = por %p405, %p406
      %p408 = scmp.ne.s32.totalorder %s400, %s403
      %p409 = scmp.eq.s32.totalorder %s28, 0
      %p410 = por %p408, %p409
      %p411 = scmp.ne.s32.totalorder %s400, %s403
      %p412 = scmp.eq.s32.totalorder %s33, 3
      %p413 = por %p411, %p412
      %p414 = scmp.ne.s32.totalorder %s403, %s404
      %p415 = scmp.eq.s32.totalorder %s33, 0
      %p416 = por %p414, %p415
      %p417 = scmp.ne.s32.totalorder %s403, %s404
      %p418 = scmp.eq.s32.totalorder %s34, 3
      %p419 = por %p417, %p418
      %p421 = scmp.ne.s32.totalorder %s404, %s420
      %p422 = scmp.eq.s32.totalorder %s34, 0
      %p423 = por %p421, %p422
      %p424 = scmp.le.s32.totalorder 1, %s28
      %p425 = scmp.lt.s32.totalorder %s28, 5
      %p426 = pnand %p424, %p425
      %p427 = pneg %p426
      // Predicated region
      $region9: #{tpu_custom_call.1} parent=5 // pred_check
        _
      $region10: #{tpu_custom_call.1} parent=5 // pred_check_branch
        %429 = sbr.rel (%p426) target = $region12
      $region11: #{tpu_custom_call.1} parent=5 // pred_region
        %s430 = ssub.s32 %s28, 1
        // Predicated region
        $region13: #{tpu_custom_call.1} parent=11 // pred_check
          %p431 = pneg %p115
        $region14: #{tpu_custom_call.1} parent=11 // pred_check_branch
          %433 = sbr.rel (%p431) target = $region16
        $region15: #{tpu_custom_call.1} parent=11 // pred_region
          _
        $region16: #{tpu_custom_call.1} parent=11 // pred_fallthru
          _
        // Predicated region
        $region17: #{tpu_custom_call.1} parent=11 // pred_check
          %p434 = pneg %p136
        $region18: #{tpu_custom_call.1} parent=11 // pred_check_branch
          %436 = sbr.rel (%p434) target = $region20
        $region19: #{tpu_custom_call.1} parent=11 // pred_region
          _
        $region20: #{tpu_custom_call.1} parent=11 // pred_fallthru
          _
        // Predicated region
        $region21: #{tpu_custom_call.1} parent=11 // pred_check
          %p437 = pneg %p157
        $region22: #{tpu_custom_call.1} parent=11 // pred_check_branch
          %439 = sbr.rel (%p437) target = $region24
        $region23: #{tpu_custom_call.1} parent=11 // pred_region
          _
        $region24: #{tpu_custom_call.1} parent=11 // pred_fallthru
          _
        // Predicated region
        $region25: #{tpu_custom_call.1} parent=11 // pred_check
          %p440 = pneg %p178
        $region26: #{tpu_custom_call.1} parent=11 // pred_check_branch
          %442 = sbr.rel (%p440) target = $region28
        $region27: #{tpu_custom_call.1} parent=11 // pred_region
          _
        $region28: #{tpu_custom_call.1} parent=11 // pred_fallthru
          _
        // Predicated region
        $region29: #{tpu_custom_call.1} parent=11 // pred_check
          %p443 = pneg %p199
        $region30: #{tpu_custom_call.1} parent=11 // pred_check_branch
          %445 = sbr.rel (%p443) target = $region32
        $region31: #{tpu_custom_call.1} parent=11 // pred_region
          _
        $region32: #{tpu_custom_call.1} parent=11 // pred_fallthru
          _
        // Predicated region
        $region33: #{tpu_custom_call.1} parent=11 // pred_check
          %p446 = pneg %p220
        $region34: #{tpu_custom_call.1} parent=11 // pred_check_branch
          %448 = sbr.rel (%p446) target = $region36
        $region35: #{tpu_custom_call.1} parent=11 // pred_region
          _
        $region36: #{tpu_custom_call.1} parent=11 // pred_fallthru
          _
        // Predicated region
        $region37: #{tpu_custom_call.1} parent=11 // pred_check
          %p449 = pneg %p241
        $region38: #{tpu_custom_call.1} parent=11 // pred_check_branch
          %451 = sbr.rel (%p449) target = $region40
        $region39: #{tpu_custom_call.1} parent=11 // pred_region
          _
        $region40: #{tpu_custom_call.1} parent=11 // pred_fallthru
          _
        // Predicated region
        $region41: #{tpu_custom_call.1} parent=11 // pred_check
          %p452 = pneg %p262
        $region42: #{tpu_custom_call.1} parent=11 // pred_check_branch
          %454 = sbr.rel (%p452) target = $region44
        $region43: #{tpu_custom_call.1} parent=11 // pred_region
          _
        $region44: #{tpu_custom_call.1} parent=11 // pred_fallthru
          _
        // Predicated region
        $region45: #{tpu_custom_call.1} parent=11 // pred_check
          %p455 = pneg %p283
        $region46: #{tpu_custom_call.1} parent=11 // pred_check_branch
          %457 = sbr.rel (%p455) target = $region48
        $region47: #{tpu_custom_call.1} parent=11 // pred_region
          _
        $region48: #{tpu_custom_call.1} parent=11 // pred_fallthru
          _
        // Predicated region
        $region49: #{tpu_custom_call.1} parent=11 // pred_check
          %p458 = pneg %p304
        $region50: #{tpu_custom_call.1} parent=11 // pred_check_branch
          %460 = sbr.rel (%p458) target = $region52
        $region51: #{tpu_custom_call.1} parent=11 // pred_region
          _
        $region52: #{tpu_custom_call.1} parent=11 // pred_fallthru
          _
        // Predicated region
        $region53: #{tpu_custom_call.1} parent=11 // pred_check
          %p461 = pneg %p325
        $region54: #{tpu_custom_call.1} parent=11 // pred_check_branch
          %463 = sbr.rel (%p461) target = $region56
        $region55: #{tpu_custom_call.1} parent=11 // pred_region
          _
        $region56: #{tpu_custom_call.1} parent=11 // pred_fallthru
          _
        // Predicated region
        $region57: #{tpu_custom_call.1} parent=11 // pred_check
          %p464 = pneg %p346
        $region58: #{tpu_custom_call.1} parent=11 // pred_check_branch
          %466 = sbr.rel (%p464) target = $region60
        $region59: #{tpu_custom_call.1} parent=11 // pred_region
          _
        $region60: #{tpu_custom_call.1} parent=11 // pred_fallthru
          _
        // Predicated region
        $region61: #{tpu_custom_call.1} parent=11 // pred_check
          %p467 = pneg %p367
        $region62: #{tpu_custom_call.1} parent=11 // pred_check_branch
          %469 = sbr.rel (%p467) target = $region64
        $region63: #{tpu_custom_call.1} parent=11 // pred_region
          _
        $region64: #{tpu_custom_call.1} parent=11 // pred_fallthru
          _
        // Predicated region
        $region65: #{tpu_custom_call.1} parent=11 // pred_check
          %p470 = pneg %p388
        $region66: #{tpu_custom_call.1} parent=11 // pred_check_branch
          %472 = sbr.rel (%p470) target = $region68
        $region67: #{tpu_custom_call.1} parent=11 // pred_region
          _
        $region68: #{tpu_custom_call.1} parent=11 // pred_fallthru
          _
      $region12: #{tpu_custom_call.1} parent=5 // pred_fallthru
        _
      %p473 = scmp.lt.s32.totalorder %s28, 4
      // Predicated region
      $region69: #{tpu_custom_call.1} parent=5 // pred_check
        %p474 = pneg %p473
      $region70: #{tpu_custom_call.1} parent=5 // pred_check_branch
        %476 = sbr.rel (%p474) target = $region72
      $region71: #{tpu_custom_call.1} parent=5 // pred_region
        // Predicated region
        $region73: #{tpu_custom_call.1} parent=71 // pred_check
          %p477 = pneg %p62
        $region74: #{tpu_custom_call.1} parent=71 // pred_check_branch
          %479 = sbr.rel (%p477) target = $region76
        $region75: #{tpu_custom_call.1} parent=71 // pred_region
          %p480 = scmp.lt.s32.totalorder %s35, 1
          %s481 = scalar_select %p480, %s35, 1
          %p482 = scmp.lt.s32.totalorder %s36, 1
          %s483 = scalar_select %p482, %s36, 1
          %s484 = smul.addr %s481, 2
          %s485 = sadd.s32 %s483, %s484
          %s486 = smul.addr %s485, 8
          %s487 = scalar_lea.vmem %s0, %s486
        $region76: #{tpu_custom_call.1} parent=71 // pred_fallthru
          _
        // Predicated region
        $region77: #{tpu_custom_call.1} parent=71 // pred_check
          %p488 = pneg %p88
        $region78: #{tpu_custom_call.1} parent=71 // pred_check_branch
          %490 = sbr.rel (%p488) target = $region80
        $region79: #{tpu_custom_call.1} parent=71 // pred_region
          %s491 = sand.u32 %s78, 1
          %s492 = scalar_lea.sflag [#allocation4], %s491
          %s493 = sand.u32 %s78, 1
          %s494 = smul.addr %s493, 8
          %s495 = scalar_lea.vmem [#allocation3], %s494
          %s497 = ssub.s32 128, 128
          %498 = vsyncadd %s492, %s497
          %s499 = smul.addr %s35, 128
          %s500 = scalar_lea.hbm %s1, %s499
          %s502 = sshll.u32 %s495, 4
          %s503 = int_to_ptr.vmem [resolvable:$true] %s502
          %505 = dma.hbm_to_vmem [thread:$0]  %s500, 128, %s503, %s492
        $region80: #{tpu_custom_call.1} parent=71 // pred_fallthru
          _
      $region72: #{tpu_custom_call.1} parent=5 // pred_fallthru
        _
      %p506 = scmp.le.s32.totalorder 1, %s28
      %p507 = scmp.lt.s32.totalorder %s28, 5
      %p508 = pnand %p506, %p507
      %p509 = pneg %p508
      // Predicated region
      $region81: #{tpu_custom_call.1} parent=5 // pred_check
        _
      $region82: #{tpu_custom_call.1} parent=5 // pred_check_branch
        %511 = sbr.rel (%p508) target = $region84
      $region83: #{tpu_custom_call.1} parent=5 // pred_region
        %s512 = ssub.s32 %s28, 1
        %s513 = sand.u32 %s81, 1
        %s514 = scalar_lea.sflag [#allocation4], %s513
        %s515 = sand.u32 %s81, 1
        %s516 = smul.addr %s515, 8
        %s517 = scalar_lea.vmem [#allocation3], %s516
        // Predicated region
        $region85: #{tpu_custom_call.1} parent=83 // pred_check
          %p518 = pneg %p94
        $region86: #{tpu_custom_call.1} parent=83 // pred_check_branch
          %520 = sbr.rel (%p518) target = $region88
        $region87: #{tpu_custom_call.1} parent=83 // pred_region
          %521 = dma.done %s514, 128
        $region88: #{tpu_custom_call.1} parent=83 // pred_fallthru
          _
        %p522 = scmp.lt.s32.totalorder %s37, 1
        %s523 = scalar_select %p522, %s37, 1
        %p524 = scmp.lt.s32.totalorder %s38, 1
        %s525 = scalar_select %p524, %s38, 1
        %s526 = smul.addr %s523, 2
        %s527 = sadd.s32 %s525, %s526
        %s528 = smul.addr %s527, 8
        %s529 = scalar_lea.vmem %s0, %s528
        %p530 = pneg %p68
        %p531 = pneg %p65
        %s532 = sand.u32 %s81, 1
        %s533 = scalar_lea.sflag [#allocation4], %s532
        %s534 = sand.u32 %s81, 1
        %s535 = smul.addr %s534, 8
        %s536 = scalar_lea.vmem [#allocation3], %s535
        %p537 = pneg %p94
        %p538 = pneg %p91
        %p539 = pneg %p115
        %p540 = pneg %p112
        %p541 = pneg %p136
        %p542 = pneg %p133
        %p543 = pneg %p157
        %p544 = pneg %p154
        %p545 = pneg %p178
        %p546 = pneg %p175
        %p547 = pneg %p199
        %p548 = pneg %p196
        %p549 = pneg %p220
        %p550 = pneg %p217
        %p551 = pneg %p241
        %p552 = pneg %p238
        %p553 = pneg %p262
        %p554 = pneg %p259
        %p555 = pneg %p283
        %p556 = pneg %p280
        %p557 = pneg %p304
        %p558 = pneg %p301
        %p559 = pneg %p325
        %p560 = pneg %p322
        %p561 = pneg %p346
        %p562 = pneg %p343
        %p563 = pneg %p367
        %p564 = pneg %p364
        %p565 = pneg %p388
        %p566 = pneg %p385
        %p567 = pneg %p416
        %p568 = pneg %p413
        %s569 = sand.u32 %s403, 1
        %s570 = scalar_lea.sflag [#allocation5], %s569
        %s571 = sand.u32 %s403, 1
        %s572 = smul.addr %s571, 8
        %s573 = scalar_lea.vmem [#allocation6], %s572
        %p574 = scmp.lt.s32.totalorder %s37, 1
        %s575 = scalar_select %p574, %s37, 1
        %p576 = scmp.lt.s32.totalorder %s38, 1
        %s577 = scalar_select %p576, %s38, 1
        %s578 = smul.addr %s575, 2
        %s579 = sadd.s32 %s577, %s578
        %s580 = smul.addr %s579, 8
        %s581 = scalar_lea.vmem %s0, %s580
        %p582 = scmp.eq.s32.totalorder %s38, 0
        // Predicated region
        $region89: #{tpu_custom_call.1} parent=83 // pred_check
          %p583 = pneg %p582
        $region90: #{tpu_custom_call.1} parent=83 // pred_check_branch
          %585 = sbr.rel (%p583) target = $region92
        $region91: #{tpu_custom_call.1} parent=83 // pred_region
          %v586 = vld [vmem:[%s517] sm:$0xff]
          %v587 = vld [vmem:[%s4] sm:$0xff]
          %v588 = vld [vmem:[%s4 + $0x8] sm:$0xff]
          %v589 = vld [vmem:[%s4 + $0x10] sm:$0xff]
          %v590 = vld [vmem:[%s4 + $0x18] sm:$0xff]
          %v591 = vld [vmem:[%s5] sm:$0x1]
          %v593 = vlaneseq
          %v594 = vshrl.u32 %v593, 7
          %v595 = vsub.s32 0, %v594
          %v596 = vrot.slane %v591, %v595
          %vm598 = vcmask 261120
          %v600 = vsel %vm598, %v586, 0
          %602 = vmatprep.subr.mxu0 0.0
          %603 = vmatpush1.msra.mxu0 %v587
          %604 = vmatprep.subr.mxu0 0.0
          %605 = vmatpush1.msra.mxu0 %v588
          %606 = vmatprep.subr.mxu0 0.0
          %607 = vmatpush1.msra.mxu0 %v589
          %608 = vmatprep.subr.mxu0 0.0
          %609 = vmatpush1.msra.mxu0 %v590
          %610 = vmatprep.subr.mxu0 0.0
          %611 = vmatpush1.msra.mxu0 0.0
          %612 = vmatprep.subr.mxu0 0.0
          %613 = vmatpush1.msra.mxu0 0.0
          %614 = vmatprep.subr.mxu0 0.0
          %615 = vmatpush1.msra.mxu0 0.0
          %616 = vmatprep.subr.mxu0 0.0
          %617 = vmatpush1.msra.mxu0 0.0
          %618 = vmatprep.subr.mxu0 0.0
          %619 = vmatpush1.msra.mxu0 0.0
          %620 = vmatprep.subr.mxu0 0.0
          %621 = vmatpush1.msra.mxu0 0.0
          %622 = vmatprep.subr.mxu0 0.0
          %623 = vmatpush1.msra.mxu0 0.0
          %624 = vmatprep.subr.mxu0 0.0
          %625 = vmatpush1.msra.mxu0 0.0
          %626 = vmatprep.subr.mxu0 0.0
          %627 = vmatpush1.msra.mxu0 0.0
          %628 = vmatprep.subr.mxu0 0.0
          %629 = vmatpush1.msra.mxu0 0.0
          %630 = vmatprep.subr.mxu0 0.0
          %631 = vmatpush1.msra.mxu0 0.0
          %632 = vmatprep.subr.mxu0 0.0
          %633 = vmatpush1.msra.mxu0 0.0
          %634 = vmatprep.subr.mxu0 0.0
          %635 = vmatpush1.msra.mxu0 0.0
          %636 = vmatprep.subr.mxu0 0.0
          %637 = vmatpush1.msra.mxu0 0.0
          %638 = vmatprep.subr.mxu0 0.0
          %639 = vmatpush1.msra.mxu0 0.0
          %640 = vmatprep.subr.mxu0 0.0
          %641 = vmatpush1.msra.mxu0 0.0
          %642 = vmatprep.subr.mxu0 0.0
          %643 = vmatpush1.msra.mxu0 0.0
          %644 = vmatprep.subr.mxu0 0.0
          %645 = vmatpush1.msra.mxu0 0.0
          %646 = vmatprep.subr.mxu0 0.0
          %647 = vmatpush1.msra.mxu0 0.0
          %648 = vmatprep.subr.mxu0 0.0
          %649 = vmatpush1.msra.mxu0 0.0
          %650 = vmatprep.subr.mxu0 0.0
          %651 = vmatpush1.msra.mxu0 0.0
          %652 = vmatprep.subr.mxu0 0.0
          %653 = vmatpush1.msra.mxu0 0.0
          %654 = vmatprep.subr.mxu0 0.0
          %655 = vmatpush1.msra.mxu0 0.0
          %656 = vmatprep.subr.mxu0 0.0
          %657 = vmatpush1.msra.mxu0 0.0
          %658 = vmatprep.subr.mxu0 0.0
          %659 = vmatpush1.msra.mxu0 0.0
          %660 = vmatprep.subr.mxu0 0.0
          %661 = vmatpush1.msra.mxu0 0.0
          %662 = vmatprep.subr.mxu0 0.0
          %663 = vmatpush1.msra.mxu0 0.0
          %664 = vmatprep.subr.mxu0 0.0
          %665 = vmatpush1.msra.mxu0 0.0
          %666 = vmatprep.mubr.f32.mxu0 0.0
          %667 = vmatmul.mubr.f32.gmra.mrb[0].mxu0 %v600
          %v668 = vpop.f32.mrb[0].mxu0
          %v669 = vadd.f32 %v596, %v668
          %v670 = vpop.f32.mrb[0].mxu0
          %671 = vdwg.mxu0
          %vm672 = vcmask 523264
          %673 = vst.msk [vmem:[#allocation2] sm:$0xff] %vm672, %v669
        $region92: #{tpu_custom_call.1} parent=83 // pred_fallthru
          _
        %v674 = vld [vmem:[%s581] sm:$0xff]
        %v675 = vld [vmem:[%s2] sm:$0xff]
        %v676 = vld [vmem:[%s2 + $0x8] sm:$0xff]
        %v677 = vld [vmem:[%s2 + $0x10] sm:$0xff]
        %v678 = vld [vmem:[%s2 + $0x18] sm:$0xff]
        %v679 = vld [vmem:[%s3] sm:$0x1]
        %v681 = vlaneseq
        %v682 = vshrl.u32 %v681, 7
        %v683 = vsub.s32 0, %v682
        %v684 = vrot.slane %v679, %v683
        %vm686 = vcmask 261120
        %v688 = vsel %vm686, %v674, 0
        %690 = vmatprep.subr.mxu0 0.0
        %691 = vmatpush1.msra.mxu0 %v675
        %692 = vmatprep.subr.mxu0 0.0
        %693 = vmatpush1.msra.mxu0 %v676
        %694 = vmatprep.subr.mxu0 0.0
        %695 = vmatpush1.msra.mxu0 %v677
        %696 = vmatprep.subr.mxu0 0.0
        %697 = vmatpush1.msra.mxu0 %v678
        %698 = vmatprep.subr.mxu0 0.0
        %699 = vmatpush1.msra.mxu0 0.0
        %700 = vmatprep.subr.mxu0 0.0
        %701 = vmatpush1.msra.mxu0 0.0
        %702 = vmatprep.subr.mxu0 0.0
        %703 = vmatpush1.msra.mxu0 0.0
        %704 = vmatprep.subr.mxu0 0.0
        %705 = vmatpush1.msra.mxu0 0.0
        %706 = vmatprep.subr.mxu0 0.0
        %707 = vmatpush1.msra.mxu0 0.0
        %708 = vmatprep.subr.mxu0 0.0
        %709 = vmatpush1.msra.mxu0 0.0
        %710 = vmatprep.subr.mxu0 0.0
        %711 = vmatpush1.msra.mxu0 0.0
        %712 = vmatprep.subr.mxu0 0.0
        %713 = vmatpush1.msra.mxu0 0.0
        %714 = vmatprep.subr.mxu0 0.0
        %715 = vmatpush1.msra.mxu0 0.0
        %716 = vmatprep.subr.mxu0 0.0
        %717 = vmatpush1.msra.mxu0 0.0
        %718 = vmatprep.subr.mxu0 0.0
        %719 = vmatpush1.msra.mxu0 0.0
        %720 = vmatprep.subr.mxu0 0.0
        %721 = vmatpush1.msra.mxu0 0.0
        %722 = vmatprep.subr.mxu0 0.0
        %723 = vmatpush1.msra.mxu0 0.0
        %724 = vmatprep.subr.mxu0 0.0
        %725 = vmatpush1.msra.mxu0 0.0
        %726 = vmatprep.subr.mxu0 0.0
        %727 = vmatpush1.msra.mxu0 0.0
        %728 = vmatprep.subr.mxu0 0.0
        %729 = vmatpush1.msra.mxu0 0.0
        %730 = vmatprep.subr.mxu0 0.0
        %731 = vmatpush1.msra.mxu0 0.0
        %732 = vmatprep.subr.mxu0 0.0
        %733 = vmatpush1.msra.mxu0 0.0
        %734 = vmatprep.subr.mxu0 0.0
        %735 = vmatpush1.msra.mxu0 0.0
        %736 = vmatprep.subr.mxu0 0.0
        %737 = vmatpush1.msra.mxu0 0.0
        %738 = vmatprep.subr.mxu0 0.0
        %739 = vmatpush1.msra.mxu0 0.0
        %740 = vmatprep.subr.mxu0 0.0
        %741 = vmatpush1.msra.mxu0 0.0
        %742 = vmatprep.subr.mxu0 0.0
        %743 = vmatpush1.msra.mxu0 0.0
        %744 = vmatprep.subr.mxu0 0.0
        %745 = vmatpush1.msra.mxu0 0.0
        %746 = vmatprep.subr.mxu0 0.0
        %747 = vmatpush1.msra.mxu0 0.0
        %748 = vmatprep.subr.mxu0 0.0
        %749 = vmatpush1.msra.mxu0 0.0
        %750 = vmatprep.subr.mxu0 0.0
        %751 = vmatpush1.msra.mxu0 0.0
        %752 = vmatprep.subr.mxu0 0.0
        %753 = vmatpush1.msra.mxu0 0.0
        %754 = vmatprep.mubr.f32.mxu0 0.0
        %755 = vmatmul.mubr.f32.gmra.mrb[0].mxu0 %v688
        %v756 = vpop.f32.mrb[0].mxu0
        %v757 = vadd.f32 %v684, %v756
        %v758 = vpop.f32.mrb[0].mxu0
        %759 = vdwg.mxu0
        %v760 = vld [vmem:[#allocation2] sm:$0xff]
        %vm761 = vcmask 64512
        %v763 = vsel %vm761, %v757, 0
        %v766 = vsel %vm761, %v760, 0
        %768 = vmatprep.subr.mxu0 0.0
        %769 = vmatpush1.xpose.msra.mxu0 %v766
        %770 = vmatprep.subr.mxu0 0.0
        %771 = vmatpush1.xpose.msra.mxu0 0.0
        %772 = vmatprep.subr.mxu0 0.0
        %773 = vmatpush1.xpose.msra.mxu0 0.0
        %774 = vmatprep.subr.mxu0 0.0
        %775 = vmatpush1.xpose.msra.mxu0 0.0
        %776 = vmatprep.subr.mxu0 0.0
        %777 = vmatpush1.xpose.msra.mxu0 0.0
        %778 = vmatprep.subr.mxu0 0.0
        %779 = vmatpush1.xpose.msra.mxu0 0.0
        %780 = vmatprep.subr.mxu0 0.0
        %781 = vmatpush1.xpose.msra.mxu0 0.0
        %782 = vmatprep.subr.mxu0 0.0
        %783 = vmatpush1.xpose.msra.mxu0 0.0
        %784 = vmatprep.subr.mxu0 0.0
        %785 = vmatpush1.xpose.msra.mxu0 0.0
        %786 = vmatprep.subr.mxu0 0.0
        %787 = vmatpush1.xpose.msra.mxu0 0.0
        %788 = vmatprep.subr.mxu0 0.0
        %789 = vmatpush1.xpose.msra.mxu0 0.0
        %790 = vmatprep.subr.mxu0 0.0
        %791 = vmatpush1.xpose.msra.mxu0 0.0
        %792 = vmatprep.subr.mxu0 0.0
        %793 = vmatpush1.xpose.msra.mxu0 0.0
        %794 = vmatprep.subr.mxu0 0.0
        %795 = vmatpush1.xpose.msra.mxu0 0.0
        %796 = vmatprep.subr.mxu0 0.0
        %797 = vmatpush1.xpose.msra.mxu0 0.0
        %798 = vmatprep.subr.mxu0 0.0
        %799 = vmatpush1.xpose.msra.mxu0 0.0
        %800 = vmatprep.subr.mxu0 0.0
        %801 = vmatpush1.xpose.msra.mxu0 0.0
        %802 = vmatprep.subr.mxu0 0.0
        %803 = vmatpush1.xpose.msra.mxu0 0.0
        %804 = vmatprep.subr.mxu0 0.0
        %805 = vmatpush1.xpose.msra.mxu0 0.0
        %806 = vmatprep.subr.mxu0 0.0
        %807 = vmatpush1.xpose.msra.mxu0 0.0
        %808 = vmatprep.subr.mxu0 0.0
        %809 = vmatpush1.xpose.msra.mxu0 0.0
        %810 = vmatprep.subr.mxu0 0.0
        %811 = vmatpush1.xpose.msra.mxu0 0.0
        %812 = vmatprep.subr.mxu0 0.0
        %813 = vmatpush1.xpose.msra.mxu0 0.0
        %814 = vmatprep.subr.mxu0 0.0
        %815 = vmatpush1.xpose.msra.mxu0 0.0
        %816 = vmatprep.subr.mxu0 0.0
        %817 = vmatpush1.xpose.msra.mxu0 0.0
        %818 = vmatprep.subr.mxu0 0.0
        %819 = vmatpush1.xpose.msra.mxu0 0.0
        %820 = vmatprep.subr.mxu0 0.0
        %821 = vmatpush1.xpose.msra.mxu0 0.0
        %822 = vmatprep.subr.mxu0 0.0
        %823 = vmatpush1.xpose.msra.mxu0 0.0
        %824 = vmatprep.subr.mxu0 0.0
        %825 = vmatpush1.xpose.msra.mxu0 0.0
        %826 = vmatprep.subr.mxu0 0.0
        %827 = vmatpush1.xpose.msra.mxu0 0.0
        %828 = vmatprep.subr.mxu0 0.0
        %829 = vmatpush1.xpose.msra.mxu0 0.0
        %830 = vmatprep.subr.mxu0 0.0
        %831 = vmatpush1.xpose.msra.mxu0 0.0
        %832 = vmatprep.mubr.f32.mxu0 0.0
        %833 = vmatmul.mubr.f32.gmra.mrb[0].mxu0 %v763
        %v834 = vpop.f32.mrb[0].mxu0
        %v835 = vadd.f32 0.0, %v834
        %v836 = vpop.f32.mrb[0].mxu0
        %837 = vdwg.mxu0
        %v838 = vsel %vm761, %v835, -inf
        %839 = vmax.xlane.f32.xlu0 %v838
        %v840 = vpop.xlane.xlu0 %839
        %v841 = vsub.f32 %v835, %v840
        %v842 = vmul.f32 %v841, 1.442695
        %v843 = vpow.pop %v842
        %v844 = vsel %vm761, %v843, 0.0
        %845 = vadd.xlane.f32.xlu0 %v844
        %v846 = vpop.xlane.xlu0 %845
        %v847 = vrcp.pop %v846
        %v848 = vmul.f32 %v843, %v847
        %849 = vrot.lane.b32.xlu0 %v760, 96
        %v850 = vpop.permute.xlu0 %849
        %v853 = vsel %vm761, %v848, 0
        %855 = vmatprep.subr.mxu0 0.0
        %856 = vmatpush1.msra.mxu0 %v850
        %857 = vmatprep.subr.mxu0 0.0
        %858 = vmatpush1.msra.mxu0 0.0
        %859 = vmatprep.subr.mxu0 0.0
        %860 = vmatpush1.msra.mxu0 0.0
        %861 = vmatprep.subr.mxu0 0.0
        %862 = vmatpush1.msra.mxu0 0.0
        %863 = vmatprep.subr.mxu0 0.0
        %864 = vmatpush1.msra.mxu0 0.0
        %865 = vmatprep.subr.mxu0 0.0
        %866 = vmatpush1.msra.mxu0 0.0
        %867 = vmatprep.subr.mxu0 0.0
        %868 = vmatpush1.msra.mxu0 0.0
        %869 = vmatprep.subr.mxu0 0.0
        %870 = vmatpush1.msra.mxu0 0.0
        %871 = vmatprep.subr.mxu0 0.0
        %872 = vmatpush1.msra.mxu0 0.0
        %873 = vmatprep.subr.mxu0 0.0
        %874 = vmatpush1.msra.mxu0 0.0
        %875 = vmatprep.subr.mxu0 0.0
        %876 = vmatpush1.msra.mxu0 0.0
        %877 = vmatprep.subr.mxu0 0.0
        %878 = vmatpush1.msra.mxu0 0.0
        %879 = vmatprep.subr.mxu0 0.0
        %880 = vmatpush1.msra.mxu0 0.0
        %881 = vmatprep.subr.mxu0 0.0
        %882 = vmatpush1.msra.mxu0 0.0
        %883 = vmatprep.subr.mxu0 0.0
        %884 = vmatpush1.msra.mxu0 0.0
        %885 = vmatprep.subr.mxu0 0.0
        %886 = vmatpush1.msra.mxu0 0.0
        %887 = vmatprep.subr.mxu0 0.0
        %888 = vmatpush1.msra.mxu0 0.0
        %889 = vmatprep.subr.mxu0 0.0
        %890 = vmatpush1.msra.mxu0 0.0
        %891 = vmatprep.subr.mxu0 0.0
        %892 = vmatpush1.msra.mxu0 0.0
        %893 = vmatprep.subr.mxu0 0.0
        %894 = vmatpush1.msra.mxu0 0.0
        %895 = vmatprep.subr.mxu0 0.0
        %896 = vmatpush1.msra.mxu0 0.0
        %897 = vmatprep.subr.mxu0 0.0
        %898 = vmatpush1.msra.mxu0 0.0
        %899 = vmatprep.subr.mxu0 0.0
        %900 = vmatpush1.msra.mxu0 0.0
        %901 = vmatprep.subr.mxu0 0.0
        %902 = vmatpush1.msra.mxu0 0.0
        %903 = vmatprep.subr.mxu0 0.0
        %904 = vmatpush1.msra.mxu0 0.0
        %905 = vmatprep.subr.mxu0 0.0
        %906 = vmatpush1.msra.mxu0 0.0
        %907 = vmatprep.subr.mxu0 0.0
        %908 = vmatpush1.msra.mxu0 0.0
        %909 = vmatprep.subr.mxu0 0.0
        %910 = vmatpush1.msra.mxu0 0.0
        %911 = vmatprep.subr.mxu0 0.0
        %912 = vmatpush1.msra.mxu0 0.0
        %913 = vmatprep.subr.mxu0 0.0
        %914 = vmatpush1.msra.mxu0 0.0
        %915 = vmatprep.subr.mxu0 0.0
        %916 = vmatpush1.msra.mxu0 0.0
        %917 = vmatprep.subr.mxu0 0.0
        %918 = vmatpush1.msra.mxu0 0.0
        %919 = vmatprep.mubr.f32.mxu0 0.0
        %920 = vmatmul.mubr.f32.gmra.mrb[0].mxu0 %v853
        %v921 = vpop.f32.mrb[0].mxu0
        %v922 = vadd.f32 0.0, %v921
        %v923 = vpop.f32.mrb[0].mxu0
        %924 = vdwg.mxu0
        %v925 = vld [vmem:[#allocation2] sm:$0xff]
        %926 = vrot.lane.b32.xlu0 %v757, 120
        %v927 = vpop.permute.xlu0 %926
        %929 = vrot.lane.b32.xlu0 %v925, 120
        %v930 = vpop.permute.xlu0 %929
        %v931 = vsel %vm761, %v927, 0
        %v933 = vsel %vm761, %v930, 0
        %935 = vmatprep.subr.mxu0 0.0
        %936 = vmatpush1.xpose.msra.mxu0 %v933
        %937 = vmatprep.subr.mxu0 0.0
        %938 = vmatpush1.xpose.msra.mxu0 0.0
        %939 = vmatprep.subr.mxu0 0.0
        %940 = vmatpush1.xpose.msra.mxu0 0.0
        %941 = vmatprep.subr.mxu0 0.0
        %942 = vmatpush1.xpose.msra.mxu0 0.0
        %943 = vmatprep.subr.mxu0 0.0
        %944 = vmatpush1.xpose.msra.mxu0 0.0
        %945 = vmatprep.subr.mxu0 0.0
        %946 = vmatpush1.xpose.msra.mxu0 0.0
        %947 = vmatprep.subr.mxu0 0.0
        %948 = vmatpush1.xpose.msra.mxu0 0.0
        %949 = vmatprep.subr.mxu0 0.0
        %950 = vmatpush1.xpose.msra.mxu0 0.0
        %951 = vmatprep.subr.mxu0 0.0
        %952 = vmatpush1.xpose.msra.mxu0 0.0
        %953 = vmatprep.subr.mxu0 0.0
        %954 = vmatpush1.xpose.msra.mxu0 0.0
        %955 = vmatprep.subr.mxu0 0.0
        %956 = vmatpush1.xpose.msra.mxu0 0.0
        %957 = vmatprep.subr.mxu0 0.0
        %958 = vmatpush1.xpose.msra.mxu0 0.0
        %959 = vmatprep.subr.mxu0 0.0
        %960 = vmatpush1.xpose.msra.mxu0 0.0
        %961 = vmatprep.subr.mxu0 0.0
        %962 = vmatpush1.xpose.msra.mxu0 0.0
        %963 = vmatprep.subr.mxu0 0.0
        %964 = vmatpush1.xpose.msra.mxu0 0.0
        %965 = vmatprep.subr.mxu0 0.0
        %966 = vmatpush1.xpose.msra.mxu0 0.0
        %967 = vmatprep.subr.mxu0 0.0
        %968 = vmatpush1.xpose.msra.mxu0 0.0
        %969 = vmatprep.subr.mxu0 0.0
        %970 = vmatpush1.xpose.msra.mxu0 0.0
        %971 = vmatprep.subr.mxu0 0.0
        %972 = vmatpush1.xpose.msra.mxu0 0.0
        %973 = vmatprep.subr.mxu0 0.0
        %974 = vmatpush1.xpose.msra.mxu0 0.0
        %975 = vmatprep.subr.mxu0 0.0
        %976 = vmatpush1.xpose.msra.mxu0 0.0
        %977 = vmatprep.subr.mxu0 0.0
        %978 = vmatpush1.xpose.msra.mxu0 0.0
        %979 = vmatprep.subr.mxu0 0.0
        %980 = vmatpush1.xpose.msra.mxu0 0.0
        %981 = vmatprep.subr.mxu0 0.0
        %982 = vmatpush1.xpose.msra.mxu0 0.0
        %983 = vmatprep.subr.mxu0 0.0
        %984 = vmatpush1.xpose.msra.mxu0 0.0
        %985 = vmatprep.subr.mxu0 0.0
        %986 = vmatpush1.xpose.msra.mxu0 0.0
        %987 = vmatprep.subr.mxu0 0.0
        %988 = vmatpush1.xpose.msra.mxu0 0.0
        %989 = vmatprep.subr.mxu0 0.0
        %990 = vmatpush1.xpose.msra.mxu0 0.0
        %991 = vmatprep.subr.mxu0 0.0
        %992 = vmatpush1.xpose.msra.mxu0 0.0
        %993 = vmatprep.subr.mxu0 0.0
        %994 = vmatpush1.xpose.msra.mxu0 0.0
        %995 = vmatprep.subr.mxu0 0.0
        %996 = vmatpush1.xpose.msra.mxu0 0.0
        %997 = vmatprep.subr.mxu0 0.0
        %998 = vmatpush1.xpose.msra.mxu0 0.0
        %999 = vmatprep.mubr.f32.mxu0 0.0
        %1000 = vmatmul.mubr.f32.gmra.mrb[0].mxu0 %v931
        %v1001 = vpop.f32.mrb[0].mxu0
        %v1002 = vadd.f32 0.0, %v1001
        %v1003 = vpop.f32.mrb[0].mxu0
        %1004 = vdwg.mxu0
        %v1005 = vsel %vm761, %v1002, -inf
        %1006 = vmax.xlane.f32.xlu0 %v1005
        %v1007 = vpop.xlane.xlu0 %1006
        %v1008 = vsub.f32 %v1002, %v1007
        %v1009 = vmul.f32 %v1008, 1.442695
        %v1010 = vpow.pop %v1009
        %v1011 = vsel %vm761, %v1010, 0.0
        %1012 = vadd.xlane.f32.xlu0 %v1011
        %v1013 = vpop.xlane.xlu0 %1012
        %v1014 = vrcp.pop %v1013
        %v1015 = vmul.f32 %v1010, %v1014
        %1016 = vrot.lane.b32.xlu0 %v925, 88
        %v1017 = vpop.permute.xlu0 %1016
        %v1020 = vsel %vm761, %v1015, 0
        %1022 = vmatprep.subr.mxu0 0.0
        %1023 = vmatpush1.msra.mxu0 %v1017
        %1024 = vmatprep.subr.mxu0 0.0
        %1025 = vmatpush1.msra.mxu0 0.0
        %1026 = vmatprep.subr.mxu0 0.0
        %1027 = vmatpush1.msra.mxu0 0.0
        %1028 = vmatprep.subr.mxu0 0.0
        %1029 = vmatpush1.msra.mxu0 0.0
        %1030 = vmatprep.subr.mxu0 0.0
        %1031 = vmatpush1.msra.mxu0 0.0
        %1032 = vmatprep.subr.mxu0 0.0
        %1033 = vmatpush1.msra.mxu0 0.0
        %1034 = vmatprep.subr.mxu0 0.0
        %1035 = vmatpush1.msra.mxu0 0.0
        %1036 = vmatprep.subr.mxu0 0.0
        %1037 = vmatpush1.msra.mxu0 0.0
        %1038 = vmatprep.subr.mxu0 0.0
        %1039 = vmatpush1.msra.mxu0 0.0
        %1040 = vmatprep.subr.mxu0 0.0
        %1041 = vmatpush1.msra.mxu0 0.0
        %1042 = vmatprep.subr.mxu0 0.0
        %1043 = vmatpush1.msra.mxu0 0.0
        %1044 = vmatprep.subr.mxu0 0.0
        %1045 = vmatpush1.msra.mxu0 0.0
        %1046 = vmatprep.subr.mxu0 0.0
        %1047 = vmatpush1.msra.mxu0 0.0
        %1048 = vmatprep.subr.mxu0 0.0
        %1049 = vmatpush1.msra.mxu0 0.0
        %1050 = vmatprep.subr.mxu0 0.0
        %1051 = vmatpush1.msra.mxu0 0.0
        %1052 = vmatprep.subr.mxu0 0.0
        %1053 = vmatpush1.msra.mxu0 0.0
        %1054 = vmatprep.subr.mxu0 0.0
        %1055 = vmatpush1.msra.mxu0 0.0
        %1056 = vmatprep.subr.mxu0 0.0
        %1057 = vmatpush1.msra.mxu0 0.0
        %1058 = vmatprep.subr.mxu0 0.0
        %1059 = vmatpush1.msra.mxu0 0.0
        %1060 = vmatprep.subr.mxu0 0.0
        %1061 = vmatpush1.msra.mxu0 0.0
        %1062 = vmatprep.subr.mxu0 0.0
        %1063 = vmatpush1.msra.mxu0 0.0
        %1064 = vmatprep.subr.mxu0 0.0
        %1065 = vmatpush1.msra.mxu0 0.0
        %1066 = vmatprep.subr.mxu0 0.0
        %1067 = vmatpush1.msra.mxu0 0.0
        %1068 = vmatprep.subr.mxu0 0.0
        %1069 = vmatpush1.msra.mxu0 0.0
        %1070 = vmatprep.subr.mxu0 0.0
        %1071 = vmatpush1.msra.mxu0 0.0
        %1072 = vmatprep.subr.mxu0 0.0
        %1073 = vmatpush1.msra.mxu0 0.0
        %1074 = vmatprep.subr.mxu0 0.0
        %1075 = vmatpush1.msra.mxu0 0.0
        %1076 = vmatprep.subr.mxu0 0.0
        %1077 = vmatpush1.msra.mxu0 0.0
        %1078 = vmatprep.subr.mxu0 0.0
        %1079 = vmatpush1.msra.mxu0 0.0
        %1080 = vmatprep.subr.mxu0 0.0
        %1081 = vmatpush1.msra.mxu0 0.0
        %1082 = vmatprep.subr.mxu0 0.0
        %1083 = vmatpush1.msra.mxu0 0.0
        %1084 = vmatprep.subr.mxu0 0.0
        %1085 = vmatpush1.msra.mxu0 0.0
        %1086 = vmatprep.mubr.f32.mxu0 0.0
        %1087 = vmatmul.mubr.f32.gmra.mrb[0].mxu0 %v1020
        %v1088 = vpop.f32.mrb[0].mxu0
        %v1089 = vadd.f32 0.0, %v1088
        %v1090 = vpop.f32.mrb[0].mxu0
        %1091 = vdwg.mxu0
        %v1092 = vld [vmem:[#allocation2] sm:$0xff]
        %1093 = vrot.lane.b32.xlu0 %v757, 112
        %v1094 = vpop.permute.xlu0 %1093
        %1096 = vrot.lane.b32.xlu0 %v1092, 112
        %v1097 = vpop.permute.xlu0 %1096
        %v1098 = vsel %vm761, %v1094, 0
        %v1100 = vsel %vm761, %v1097, 0
        %1102 = vmatprep.subr.mxu0 0.0
        %1103 = vmatpush1.xpose.msra.mxu0 %v1100
        %1104 = vmatprep.subr.mxu0 0.0
        %1105 = vmatpush1.xpose.msra.mxu0 0.0
        %1106 = vmatprep.subr.mxu0 0.0
        %1107 = vmatpush1.xpose.msra.mxu0 0.0
        %1108 = vmatprep.subr.mxu0 0.0
        %1109 = vmatpush1.xpose.msra.mxu0 0.0
        %1110 = vmatprep.subr.mxu0 0.0
        %1111 = vmatpush1.xpose.msra.mxu0 0.0
        %1112 = vmatprep.subr.mxu0 0.0
        %1113 = vmatpush1.xpose.msra.mxu0 0.0
        %1114 = vmatprep.subr.mxu0 0.0
        %1115 = vmatpush1.xpose.msra.mxu0 0.0
        %1116 = vmatprep.subr.mxu0 0.0
        %1117 = vmatpush1.xpose.msra.mxu0 0.0
        %1118 = vmatprep.subr.mxu0 0.0
        %1119 = vmatpush1.xpose.msra.mxu0 0.0
        %1120 = vmatprep.subr.mxu0 0.0
        %1121 = vmatpush1.xpose.msra.mxu0 0.0
        %1122 = vmatprep.subr.mxu0 0.0
        %1123 = vmatpush1.xpose.msra.mxu0 0.0
        %1124 = vmatprep.subr.mxu0 0.0
        %1125 = vmatpush1.xpose.msra.mxu0 0.0
        %1126 = vmatprep.subr.mxu0 0.0
        %1127 = vmatpush1.xpose.msra.mxu0 0.0
        %1128 = vmatprep.subr.mxu0 0.0
        %1129 = vmatpush1.xpose.msra.mxu0 0.0
        %1130 = vmatprep.subr.mxu0 0.0
        %1131 = vmatpush1.xpose.msra.mxu0 0.0
        %1132 = vmatprep.subr.mxu0 0.0
        %1133 = vmatpush1.xpose.msra.mxu0 0.0
        %1134 = vmatprep.subr.mxu0 0.0
        %1135 = vmatpush1.xpose.msra.mxu0 0.0
        %1136 = vmatprep.subr.mxu0 0.0
        %1137 = vmatpush1.xpose.msra.mxu0 0.0
        %1138 = vmatprep.subr.mxu0 0.0
        %1139 = vmatpush1.xpose.msra.mxu0 0.0
        %1140 = vmatprep.subr.mxu0 0.0
        %1141 = vmatpush1.xpose.msra.mxu0 0.0
        %1142 = vmatprep.subr.mxu0 0.0
        %1143 = vmatpush1.xpose.msra.mxu0 0.0
        %1144 = vmatprep.subr.mxu0 0.0
        %1145 = vmatpush1.xpose.msra.mxu0 0.0
        %1146 = vmatprep.subr.mxu0 0.0
        %1147 = vmatpush1.xpose.msra.mxu0 0.0
        %1148 = vmatprep.subr.mxu0 0.0
        %1149 = vmatpush1.xpose.msra.mxu0 0.0
        %1150 = vmatprep.subr.mxu0 0.0
        %1151 = vmatpush1.xpose.msra.mxu0 0.0
        %1152 = vmatprep.subr.mxu0 0.0
        %1153 = vmatpush1.xpose.msra.mxu0 0.0
        %1154 = vmatprep.subr.mxu0 0.0
        %1155 = vmatpush1.xpose.msra.mxu0 0.0
        %1156 = vmatprep.subr.mxu0 0.0
        %1157 = vmatpush1.xpose.msra.mxu0 0.0
        %1158 = vmatprep.subr.mxu0 0.0
        %1159 = vmatpush1.xpose.msra.mxu0 0.0
        %1160 = vmatprep.subr.mxu0 0.0
        %1161 = vmatpush1.xpose.msra.mxu0 0.0
        %1162 = vmatprep.subr.mxu0 0.0
        %1163 = vmatpush1.xpose.msra.mxu0 0.0
        %1164 = vmatprep.subr.mxu0 0.0
        %1165 = vmatpush1.xpose.msra.mxu0 0.0
        %1166 = vmatprep.mubr.f32.mxu0 0.0
        %1167 = vmatmul.mubr.f32.gmra.mrb[0].mxu0 %v1098
        %v1168 = vpop.f32.mrb[0].mxu0
        %v1169 = vadd.f32 0.0, %v1168
        %v1170 = vpop.f32.mrb[0].mxu0
        %1171 = vdwg.mxu0
        %v1172 = vsel %vm761, %v1169, -inf
        %1173 = vmax.xlane.f32.xlu0 %v1172
        %v1174 = vpop.xlane.xlu0 %1173
        %v1175 = vsub.f32 %v1169, %v1174
        %v1176 = vmul.f32 %v1175, 1.442695
        %v1177 = vpow.pop %v1176
        %v1178 = vsel %vm761, %v1177, 0.0
        %1179 = vadd.xlane.f32.xlu0 %v1178
        %v1180 = vpop.xlane.xlu0 %1179
        %v1181 = vrcp.pop %v1180
        %v1182 = vmul.f32 %v1177, %v1181
        %1183 = vrot.lane.b32.xlu0 %v1092, 80
        %v1184 = vpop.permute.xlu0 %1183
        %v1187 = vsel %vm761, %v1182, 0
        %1189 = vmatprep.subr.mxu0 0.0
        %1190 = vmatpush1.msra.mxu0 %v1184
        %1191 = vmatprep.subr.mxu0 0.0
        %1192 = vmatpush1.msra.mxu0 0.0
        %1193 = vmatprep.subr.mxu0 0.0
        %1194 = vmatpush1.msra.mxu0 0.0
        %1195 = vmatprep.subr.mxu0 0.0
        %1196 = vmatpush1.msra.mxu0 0.0
        %1197 = vmatprep.subr.mxu0 0.0
        %1198 = vmatpush1.msra.mxu0 0.0
        %1199 = vmatprep.subr.mxu0 0.0
        %1200 = vmatpush1.msra.mxu0 0.0
        %1201 = vmatprep.subr.mxu0 0.0
        %1202 = vmatpush1.msra.mxu0 0.0
        %1203 = vmatprep.subr.mxu0 0.0
        %1204 = vmatpush1.msra.mxu0 0.0
        %1205 = vmatprep.subr.mxu0 0.0
        %1206 = vmatpush1.msra.mxu0 0.0
        %1207 = vmatprep.subr.mxu0 0.0
        %1208 = vmatpush1.msra.mxu0 0.0
        %1209 = vmatprep.subr.mxu0 0.0
        %1210 = vmatpush1.msra.mxu0 0.0
        %1211 = vmatprep.subr.mxu0 0.0
        %1212 = vmatpush1.msra.mxu0 0.0
        %1213 = vmatprep.subr.mxu0 0.0
        %1214 = vmatpush1.msra.mxu0 0.0
        %1215 = vmatprep.subr.mxu0 0.0
        %1216 = vmatpush1.msra.mxu0 0.0
        %1217 = vmatprep.subr.mxu0 0.0
        %1218 = vmatpush1.msra.mxu0 0.0
        %1219 = vmatprep.subr.mxu0 0.0
        %1220 = vmatpush1.msra.mxu0 0.0
        %1221 = vmatprep.subr.mxu0 0.0
        %1222 = vmatpush1.msra.mxu0 0.0
        %1223 = vmatprep.subr.mxu0 0.0
        %1224 = vmatpush1.msra.mxu0 0.0
        %1225 = vmatprep.subr.mxu0 0.0
        %1226 = vmatpush1.msra.mxu0 0.0
        %1227 = vmatprep.subr.mxu0 0.0
        %1228 = vmatpush1.msra.mxu0 0.0
        %1229 = vmatprep.subr.mxu0 0.0
        %1230 = vmatpush1.msra.mxu0 0.0
        %1231 = vmatprep.subr.mxu0 0.0
        %1232 = vmatpush1.msra.mxu0 0.0
        %1233 = vmatprep.subr.mxu0 0.0
        %1234 = vmatpush1.msra.mxu0 0.0
        %1235 = vmatprep.subr.mxu0 0.0
        %1236 = vmatpush1.msra.mxu0 0.0
        %1237 = vmatprep.subr.mxu0 0.0
        %1238 = vmatpush1.msra.mxu0 0.0
        %1239 = vmatprep.subr.mxu0 0.0
        %1240 = vmatpush1.msra.mxu0 0.0
        %1241 = vmatprep.subr.mxu0 0.0
        %1242 = vmatpush1.msra.mxu0 0.0
        %1243 = vmatprep.subr.mxu0 0.0
        %1244 = vmatpush1.msra.mxu0 0.0
        %1245 = vmatprep.subr.mxu0 0.0
        %1246 = vmatpush1.msra.mxu0 0.0
        %1247 = vmatprep.subr.mxu0 0.0
        %1248 = vmatpush1.msra.mxu0 0.0
        %1249 = vmatprep.subr.mxu0 0.0
        %1250 = vmatpush1.msra.mxu0 0.0
        %1251 = vmatprep.subr.mxu0 0.0
        %1252 = vmatpush1.msra.mxu0 0.0
        %1253 = vmatprep.mubr.f32.mxu0 0.0
        %1254 = vmatmul.mubr.f32.gmra.mrb[0].mxu0 %v1187
        %v1255 = vpop.f32.mrb[0].mxu0
        %v1256 = vadd.f32 0.0, %v1255
        %v1257 = vpop.f32.mrb[0].mxu0
        %1258 = vdwg.mxu0
        %v1259 = vld [vmem:[#allocation2] sm:$0xff]
        %1260 = vrot.lane.b32.xlu0 %v757, 104
        %v1261 = vpop.permute.xlu0 %1260
        %1263 = vrot.lane.b32.xlu0 %v1259, 104
        %v1264 = vpop.permute.xlu0 %1263
        %v1265 = vsel %vm761, %v1261, 0
        %v1267 = vsel %vm761, %v1264, 0
        %1269 = vmatprep.subr.mxu0 0.0
        %1270 = vmatpush1.xpose.msra.mxu0 %v1267
        %1271 = vmatprep.subr.mxu0 0.0
        %1272 = vmatpush1.xpose.msra.mxu0 0.0
        %1273 = vmatprep.subr.mxu0 0.0
        %1274 = vmatpush1.xpose.msra.mxu0 0.0
        %1275 = vmatprep.subr.mxu0 0.0
        %1276 = vmatpush1.xpose.msra.mxu0 0.0
        %1277 = vmatprep.subr.mxu0 0.0
        %1278 = vmatpush1.xpose.msra.mxu0 0.0
        %1279 = vmatprep.subr.mxu0 0.0
        %1280 = vmatpush1.xpose.msra.mxu0 0.0
        %1281 = vmatprep.subr.mxu0 0.0
        %1282 = vmatpush1.xpose.msra.mxu0 0.0
        %1283 = vmatprep.subr.mxu0 0.0
        %1284 = vmatpush1.xpose.msra.mxu0 0.0
        %1285 = vmatprep.subr.mxu0 0.0
        %1286 = vmatpush1.xpose.msra.mxu0 0.0
        %1287 = vmatprep.subr.mxu0 0.0
        %1288 = vmatpush1.xpose.msra.mxu0 0.0
        %1289 = vmatprep.subr.mxu0 0.0
        %1290 = vmatpush1.xpose.msra.mxu0 0.0
        %1291 = vmatprep.subr.mxu0 0.0
        %1292 = vmatpush1.xpose.msra.mxu0 0.0
        %1293 = vmatprep.subr.mxu0 0.0
        %1294 = vmatpush1.xpose.msra.mxu0 0.0
        %1295 = vmatprep.subr.mxu0 0.0
        %1296 = vmatpush1.xpose.msra.mxu0 0.0
        %1297 = vmatprep.subr.mxu0 0.0
        %1298 = vmatpush1.xpose.msra.mxu0 0.0
        %1299 = vmatprep.subr.mxu0 0.0
        %1300 = vmatpush1.xpose.msra.mxu0 0.0
        %1301 = vmatprep.subr.mxu0 0.0
        %1302 = vmatpush1.xpose.msra.mxu0 0.0
        %1303 = vmatprep.subr.mxu0 0.0
        %1304 = vmatpush1.xpose.msra.mxu0 0.0
        %1305 = vmatprep.subr.mxu0 0.0
        %1306 = vmatpush1.xpose.msra.mxu0 0.0
        %1307 = vmatprep.subr.mxu0 0.0
        %1308 = vmatpush1.xpose.msra.mxu0 0.0
        %1309 = vmatprep.subr.mxu0 0.0
        %1310 = vmatpush1.xpose.msra.mxu0 0.0
        %1311 = vmatprep.subr.mxu0 0.0
        %1312 = vmatpush1.xpose.msra.mxu0 0.0
        %1313 = vmatprep.subr.mxu0 0.0
        %1314 = vmatpush1.xpose.msra.mxu0 0.0
        %1315 = vmatprep.subr.mxu0 0.0
        %1316 = vmatpush1.xpose.msra.mxu0 0.0
        %1317 = vmatprep.subr.mxu0 0.0
        %1318 = vmatpush1.xpose.msra.mxu0 0.0
        %1319 = vmatprep.subr.mxu0 0.0
        %1320 = vmatpush1.xpose.msra.mxu0 0.0
        %1321 = vmatprep.subr.mxu0 0.0
        %1322 = vmatpush1.xpose.msra.mxu0 0.0
        %1323 = vmatprep.subr.mxu0 0.0
        %1324 = vmatpush1.xpose.msra.mxu0 0.0
        %1325 = vmatprep.subr.mxu0 0.0
        %1326 = vmatpush1.xpose.msra.mxu0 0.0
        %1327 = vmatprep.subr.mxu0 0.0
        %1328 = vmatpush1.xpose.msra.mxu0 0.0
        %1329 = vmatprep.subr.mxu0 0.0
        %1330 = vmatpush1.xpose.msra.mxu0 0.0
        %1331 = vmatprep.subr.mxu0 0.0
        %1332 = vmatpush1.xpose.msra.mxu0 0.0
        %1333 = vmatprep.mubr.f32.mxu0 0.0
        %1334 = vmatmul.mubr.f32.gmra.mrb[0].mxu0 %v1265
        %v1335 = vpop.f32.mrb[0].mxu0
        %v1336 = vadd.f32 0.0, %v1335
        %v1337 = vpop.f32.mrb[0].mxu0
        %1338 = vdwg.mxu0
        %v1339 = vsel %vm761, %v1336, -inf
        %1340 = vmax.xlane.f32.xlu0 %v1339
        %v1341 = vpop.xlane.xlu0 %1340
        %v1342 = vsub.f32 %v1336, %v1341
        %v1343 = vmul.f32 %v1342, 1.442695
        %v1344 = vpow.pop %v1343
        %v1345 = vsel %vm761, %v1344, 0.0
        %1346 = vadd.xlane.f32.xlu0 %v1345
        %v1347 = vpop.xlane.xlu0 %1346
        %v1348 = vrcp.pop %v1347
        %v1349 = vmul.f32 %v1344, %v1348
        %1350 = vrot.lane.b32.xlu0 %v1259, 72
        %v1351 = vpop.permute.xlu0 %1350
        %v1354 = vsel %vm761, %v1349, 0
        %1356 = vmatprep.subr.mxu0 0.0
        %1357 = vmatpush1.msra.mxu0 %v1351
        %1358 = vmatprep.subr.mxu0 0.0
        %1359 = vmatpush1.msra.mxu0 0.0
        %1360 = vmatprep.subr.mxu0 0.0
        %1361 = vmatpush1.msra.mxu0 0.0
        %1362 = vmatprep.subr.mxu0 0.0
        %1363 = vmatpush1.msra.mxu0 0.0
        %1364 = vmatprep.subr.mxu0 0.0
        %1365 = vmatpush1.msra.mxu0 0.0
        %1366 = vmatprep.subr.mxu0 0.0
        %1367 = vmatpush1.msra.mxu0 0.0
        %1368 = vmatprep.subr.mxu0 0.0
        %1369 = vmatpush1.msra.mxu0 0.0
        %1370 = vmatprep.subr.mxu0 0.0
        %1371 = vmatpush1.msra.mxu0 0.0
        %1372 = vmatprep.subr.mxu0 0.0
        %1373 = vmatpush1.msra.mxu0 0.0
        %1374 = vmatprep.subr.mxu0 0.0
        %1375 = vmatpush1.msra.mxu0 0.0
        %1376 = vmatprep.subr.mxu0 0.0
        %1377 = vmatpush1.msra.mxu0 0.0
        %1378 = vmatprep.subr.mxu0 0.0
        %1379 = vmatpush1.msra.mxu0 0.0
        %1380 = vmatprep.subr.mxu0 0.0
        %1381 = vmatpush1.msra.mxu0 0.0
        %1382 = vmatprep.subr.mxu0 0.0
        %1383 = vmatpush1.msra.mxu0 0.0
        %1384 = vmatprep.subr.mxu0 0.0
        %1385 = vmatpush1.msra.mxu0 0.0
        %1386 = vmatprep.subr.mxu0 0.0
        %1387 = vmatpush1.msra.mxu0 0.0
        %1388 = vmatprep.subr.mxu0 0.0
        %1389 = vmatpush1.msra.mxu0 0.0
        %1390 = vmatprep.subr.mxu0 0.0
        %1391 = vmatpush1.msra.mxu0 0.0
        %1392 = vmatprep.subr.mxu0 0.0
        %1393 = vmatpush1.msra.mxu0 0.0
        %1394 = vmatprep.subr.mxu0 0.0
        %1395 = vmatpush1.msra.mxu0 0.0
        %1396 = vmatprep.subr.mxu0 0.0
        %1397 = vmatpush1.msra.mxu0 0.0
        %1398 = vmatprep.subr.mxu0 0.0
        %1399 = vmatpush1.msra.mxu0 0.0
        %1400 = vmatprep.subr.mxu0 0.0
        %1401 = vmatpush1.msra.mxu0 0.0
        %1402 = vmatprep.subr.mxu0 0.0
        %1403 = vmatpush1.msra.mxu0 0.0
        %1404 = vmatprep.subr.mxu0 0.0
        %1405 = vmatpush1.msra.mxu0 0.0
        %1406 = vmatprep.subr.mxu0 0.0
        %1407 = vmatpush1.msra.mxu0 0.0
        %1408 = vmatprep.subr.mxu0 0.0
        %1409 = vmatpush1.msra.mxu0 0.0
        %1410 = vmatprep.subr.mxu0 0.0
        %1411 = vmatpush1.msra.mxu0 0.0
        %1412 = vmatprep.subr.mxu0 0.0
        %1413 = vmatpush1.msra.mxu0 0.0
        %1414 = vmatprep.subr.mxu0 0.0
        %1415 = vmatpush1.msra.mxu0 0.0
        %1416 = vmatprep.subr.mxu0 0.0
        %1417 = vmatpush1.msra.mxu0 0.0
        %1418 = vmatprep.subr.mxu0 0.0
        %1419 = vmatpush1.msra.mxu0 0.0
        %1420 = vmatprep.mubr.f32.mxu0 0.0
        %1421 = vmatmul.mubr.f32.gmra.mrb[0].mxu0 %v1354
        %v1422 = vpop.f32.mrb[0].mxu0
        %v1423 = vadd.f32 0.0, %v1422
        %v1424 = vpop.f32.mrb[0].mxu0
        %1425 = vdwg.mxu0
        %1427 = vrot.lane.b32.xlu0 %v1089, 8
        %v1428 = vpop.permute.xlu0 %1427
        %1431 = vrot.lane.b32.xlu0 %v1256, 16
        %v1432 = vpop.permute.xlu0 %1431
        %1435 = vrot.lane.b32.xlu0 %v1423, 24
        %v1436 = vpop.permute.xlu0 %1435
        %v1438 = vsel %vm761, %v922, %v1428
        %vm1439 = vcmask 130048
        %v1440 = vsel %vm1439, %v1438, %v1432
        %vm1441 = vcmask 195584
        %v1442 = vsel %vm1441, %v1440, %v1436
        %v1443 = vld [vmem:[%s6] sm:$0xff]
        %v1444 = vld [vmem:[%s6 + $0x8] sm:$0xff]
        %v1445 = vld [vmem:[%s6 + $0x10] sm:$0xff]
        %v1446 = vld [vmem:[%s6 + $0x18] sm:$0xff]
        %v1447 = vld [vmem:[%s7] sm:$0x1]
        %v1449 = vlaneseq
        %v1450 = vshrl.u32 %v1449, 7
        %v1451 = vsub.s32 0, %v1450
        %v1452 = vrot.slane %v1447, %v1451
        %v1455 = vsel %vm686, %v1442, 0
        %1457 = vmatprep.subr.mxu0 0.0
        %1458 = vmatpush1.msra.mxu0 %v1443
        %1459 = vmatprep.subr.mxu0 0.0
        %1460 = vmatpush1.msra.mxu0 %v1444
        %1461 = vmatprep.subr.mxu0 0.0
        %1462 = vmatpush1.msra.mxu0 %v1445
        %1463 = vmatprep.subr.mxu0 0.0
        %1464 = vmatpush1.msra.mxu0 %v1446
        %1465 = vmatprep.subr.mxu0 0.0
        %1466 = vmatpush1.msra.mxu0 0.0
        %1467 = vmatprep.subr.mxu0 0.0
        %1468 = vmatpush1.msra.mxu0 0.0
        %1469 = vmatprep.subr.mxu0 0.0
        %1470 = vmatpush1.msra.mxu0 0.0
        %1471 = vmatprep.subr.mxu0 0.0
        %1472 = vmatpush1.msra.mxu0 0.0
        %1473 = vmatprep.subr.mxu0 0.0
        %1474 = vmatpush1.msra.mxu0 0.0
        %1475 = vmatprep.subr.mxu0 0.0
        %1476 = vmatpush1.msra.mxu0 0.0
        %1477 = vmatprep.subr.mxu0 0.0
        %1478 = vmatpush1.msra.mxu0 0.0
        %1479 = vmatprep.subr.mxu0 0.0
        %1480 = vmatpush1.msra.mxu0 0.0
        %1481 = vmatprep.subr.mxu0 0.0
        %1482 = vmatpush1.msra.mxu0 0.0
        %1483 = vmatprep.subr.mxu0 0.0
        %1484 = vmatpush1.msra.mxu0 0.0
        %1485 = vmatprep.subr.mxu0 0.0
        %1486 = vmatpush1.msra.mxu0 0.0
        %1487 = vmatprep.subr.mxu0 0.0
        %1488 = vmatpush1.msra.mxu0 0.0
        %1489 = vmatprep.subr.mxu0 0.0
        %1490 = vmatpush1.msra.mxu0 0.0
        %1491 = vmatprep.subr.mxu0 0.0
        %1492 = vmatpush1.msra.mxu0 0.0
        %1493 = vmatprep.subr.mxu0 0.0
        %1494 = vmatpush1.msra.mxu0 0.0
        %1495 = vmatprep.subr.mxu0 0.0
        %1496 = vmatpush1.msra.mxu0 0.0
        %1497 = vmatprep.subr.mxu0 0.0
        %1498 = vmatpush1.msra.mxu0 0.0
        %1499 = vmatprep.subr.mxu0 0.0
        %1500 = vmatpush1.msra.mxu0 0.0
        %1501 = vmatprep.subr.mxu0 0.0
        %1502 = vmatpush1.msra.mxu0 0.0
        %1503 = vmatprep.subr.mxu0 0.0
        %1504 = vmatpush1.msra.mxu0 0.0
        %1505 = vmatprep.subr.mxu0 0.0
        %1506 = vmatpush1.msra.mxu0 0.0
        %1507 = vmatprep.subr.mxu0 0.0
        %1508 = vmatpush1.msra.mxu0 0.0
        %1509 = vmatprep.subr.mxu0 0.0
        %1510 = vmatpush1.msra.mxu0 0.0
        %1511 = vmatprep.subr.mxu0 0.0
        %1512 = vmatpush1.msra.mxu0 0.0
        %1513 = vmatprep.subr.mxu0 0.0
        %1514 = vmatpush1.msra.mxu0 0.0
        %1515 = vmatprep.subr.mxu0 0.0
        %1516 = vmatpush1.msra.mxu0 0.0
        %1517 = vmatprep.subr.mxu0 0.0
        %1518 = vmatpush1.msra.mxu0 0.0
        %1519 = vmatprep.subr.mxu0 0.0
        %1520 = vmatpush1.msra.mxu0 0.0
        %1521 = vmatprep.mubr.f32.mxu0 0.0
        %1522 = vmatmul.mubr.f32.gmra.mrb[0].mxu0 %v1455
        %v1523 = vpop.f32.mrb[0].mxu0
        %v1524 = vadd.f32 %v1452, %v1523
        %v1525 = vpop.f32.mrb[0].mxu0
        %1526 = vdwg.mxu0
        %v1527 = vadd.f32 %v674, %v1524
        %v1528 = vld [vmem:[%s8] sm:$0x1]
        %v1529 = vld [vmem:[%s9] sm:$0x1]
        %v1530 = vsel %vm686, %v1527, 0.0
        %1531 = vadd.xlane.f32.xlu0 %v1530
        %v1532 = vpop.xlane.xlu0 %1531
        %v1533 = vrcp.pop 32.0
        %v1534 = vmul.f32 %v1532, %v1533
        %v1535 = vsub.f32 %v1527, %v1534
        %v1536 = vmul.f32 %v1535, %v1535
        %v1537 = vsel %vm686, %v1536, 0.0
        %1538 = vadd.xlane.f32.xlu0 %v1537
        %v1539 = vpop.xlane.xlu0 %1538
        %v1540 = vmul.f32 %v1539, %v1533
        %v1541 = vadd.f32 %v1540, 1e-05
        %v1542 = vrsqrt.pop %v1541
        %v1543 = vmul.f32 %v1535, %v1542
        %v1545 = vlaneseq
        %v1546 = vshrl.u32 %v1545, 7
        %v1547 = vsub.s32 0, %v1546
        %v1548 = vrot.slane %v1528, %v1547
        %v1550 = vmul.f32 %v1543, %v1548
        %v1552 = vlaneseq
        %v1553 = vshrl.u32 %v1552, 7
        %v1554 = vsub.s32 0, %v1553
        %v1555 = vrot.slane %v1529, %v1554
        %v1557 = vadd.f32 %v1550, %v1555
        %v1558 = vld [vmem:[%s10] sm:$0xff]
        %v1559 = vld [vmem:[%s10 + $0x8] sm:$0xff]
        %v1560 = vld [vmem:[%s10 + $0x10] sm:$0xff]
        %v1561 = vld [vmem:[%s10 + $0x18] sm:$0xff]
        %v1562 = vld [vmem:[%s11] sm:$0x1]
        %v1564 = vlaneseq
        %v1565 = vshrl.u32 %v1564, 7
        %v1566 = vsub.s32 0, %v1565
        %v1567 = vrot.slane %v1562, %v1566
        %v1570 = vsel %vm686, %v1557, 0
        %1572 = vmatprep.subr.mxu0 0.0
        %1573 = vmatpush1.msra.mxu0 %v1558
        %1574 = vmatprep.subr.mxu0 0.0
        %1575 = vmatpush1.msra.mxu0 %v1559
        %1576 = vmatprep.subr.mxu0 0.0
        %1577 = vmatpush1.msra.mxu0 %v1560
        %1578 = vmatprep.subr.mxu0 0.0
        %1579 = vmatpush1.msra.mxu0 %v1561
        %1580 = vmatprep.subr.mxu0 0.0
        %1581 = vmatpush1.msra.mxu0 0.0
        %1582 = vmatprep.subr.mxu0 0.0
        %1583 = vmatpush1.msra.mxu0 0.0
        %1584 = vmatprep.subr.mxu0 0.0
        %1585 = vmatpush1.msra.mxu0 0.0
        %1586 = vmatprep.subr.mxu0 0.0
        %1587 = vmatpush1.msra.mxu0 0.0
        %1588 = vmatprep.subr.mxu0 0.0
        %1589 = vmatpush1.msra.mxu0 0.0
        %1590 = vmatprep.subr.mxu0 0.0
        %1591 = vmatpush1.msra.mxu0 0.0
        %1592 = vmatprep.subr.mxu0 0.0
        %1593 = vmatpush1.msra.mxu0 0.0
        %1594 = vmatprep.subr.mxu0 0.0
        %1595 = vmatpush1.msra.mxu0 0.0
        %1596 = vmatprep.subr.mxu0 0.0
        %1597 = vmatpush1.msra.mxu0 0.0
        %1598 = vmatprep.subr.mxu0 0.0
        %1599 = vmatpush1.msra.mxu0 0.0
        %1600 = vmatprep.subr.mxu0 0.0
        %1601 = vmatpush1.msra.mxu0 0.0
        %1602 = vmatprep.subr.mxu0 0.0
        %1603 = vmatpush1.msra.mxu0 0.0
        %1604 = vmatprep.subr.mxu0 0.0
        %1605 = vmatpush1.msra.mxu0 0.0
        %1606 = vmatprep.subr.mxu0 0.0
        %1607 = vmatpush1.msra.mxu0 0.0
        %1608 = vmatprep.subr.mxu0 0.0
        %1609 = vmatpush1.msra.mxu0 0.0
        %1610 = vmatprep.subr.mxu0 0.0
        %1611 = vmatpush1.msra.mxu0 0.0
        %1612 = vmatprep.subr.mxu0 0.0
        %1613 = vmatpush1.msra.mxu0 0.0
        %1614 = vmatprep.subr.mxu0 0.0
        %1615 = vmatpush1.msra.mxu0 0.0
        %1616 = vmatprep.subr.mxu0 0.0
        %1617 = vmatpush1.msra.mxu0 0.0
        %1618 = vmatprep.subr.mxu0 0.0
        %1619 = vmatpush1.msra.mxu0 0.0
        %1620 = vmatprep.subr.mxu0 0.0
        %1621 = vmatpush1.msra.mxu0 0.0
        %1622 = vmatprep.subr.mxu0 0.0
        %1623 = vmatpush1.msra.mxu0 0.0
        %1624 = vmatprep.subr.mxu0 0.0
        %1625 = vmatpush1.msra.mxu0 0.0
        %1626 = vmatprep.subr.mxu0 0.0
        %1627 = vmatpush1.msra.mxu0 0.0
        %1628 = vmatprep.subr.mxu0 0.0
        %1629 = vmatpush1.msra.mxu0 0.0
        %1630 = vmatprep.subr.mxu0 0.0
        %1631 = vmatpush1.msra.mxu0 0.0
        %1632 = vmatprep.subr.mxu0 0.0
        %1633 = vmatpush1.msra.mxu0 0.0
        %1634 = vmatprep.subr.mxu0 0.0
        %1635 = vmatpush1.msra.mxu0 0.0
        %1636 = vmatprep.mubr.f32.mxu0 0.0
        %1637 = vmatmul.mubr.f32.gmra.mrb[0].mxu0 %v1570
        %v1638 = vpop.f32.mrb[0].mxu0
        %v1639 = vadd.f32 %v1567, %v1638
        %v1640 = vpop.f32.mrb[0].mxu0
        %1641 = vdwg.mxu0
        %v1642 = vmax.f32 %v1639, 0.0
        %v1643 = vld [vmem:[%s12] sm:$0xff]
        %v1644 = vld [vmem:[%s12 + $0x8] sm:$0xff]
        %v1645 = vld [vmem:[%s12 + $0x10] sm:$0xff]
        %v1646 = vld [vmem:[%s12 + $0x18] sm:$0xff]
        %v1647 = vld [vmem:[%s12 + $0x20] sm:$0xff]
        %v1648 = vld [vmem:[%s12 + $0x28] sm:$0xff]
        %v1649 = vld [vmem:[%s12 + $0x30] sm:$0xff]
        %v1650 = vld [vmem:[%s12 + $0x38] sm:$0xff]
        %v1651 = vld [vmem:[%s12 + $0x40] sm:$0xff]
        %v1652 = vld [vmem:[%s12 + $0x48] sm:$0xff]
        %v1653 = vld [vmem:[%s12 + $0x50] sm:$0xff]
        %v1654 = vld [vmem:[%s12 + $0x58] sm:$0xff]
        %v1655 = vld [vmem:[%s12 + $0x60] sm:$0xff]
        %v1656 = vld [vmem:[%s12 + $0x68] sm:$0xff]
        %v1657 = vld [vmem:[%s12 + $0x70] sm:$0xff]
        %v1658 = vld [vmem:[%s12 + $0x78] sm:$0xff]
        %v1659 = vld [vmem:[%s13] sm:$0x1]
        %v1661 = vlaneseq
        %v1662 = vshrl.u32 %v1661, 7
        %v1663 = vsub.s32 0, %v1662
        %v1664 = vrot.slane %v1659, %v1663
        %1666 = vmatprep.subr.mxu0 0.0
        %1667 = vmatpush1.msra.mxu0 %v1643
        %1668 = vmatprep.subr.mxu0 0.0
        %1669 = vmatpush1.msra.mxu0 %v1644
        %1670 = vmatprep.subr.mxu0 0.0
        %1671 = vmatpush1.msra.mxu0 %v1645
        %1672 = vmatprep.subr.mxu0 0.0
        %1673 = vmatpush1.msra.mxu0 %v1646
        %1674 = vmatprep.subr.mxu0 0.0
        %1675 = vmatpush1.msra.mxu0 %v1647
        %1676 = vmatprep.subr.mxu0 0.0
        %1677 = vmatpush1.msra.mxu0 %v1648
        %1678 = vmatprep.subr.mxu0 0.0
        %1679 = vmatpush1.msra.mxu0 %v1649
        %1680 = vmatprep.subr.mxu0 0.0
        %1681 = vmatpush1.msra.mxu0 %v1650
        %1682 = vmatprep.subr.mxu0 0.0
        %1683 = vmatpush1.msra.mxu0 %v1651
        %1684 = vmatprep.subr.mxu0 0.0
        %1685 = vmatpush1.msra.mxu0 %v1652
        %1686 = vmatprep.subr.mxu0 0.0
        %1687 = vmatpush1.msra.mxu0 %v1653
        %1688 = vmatprep.subr.mxu0 0.0
        %1689 = vmatpush1.msra.mxu0 %v1654
        %1690 = vmatprep.subr.mxu0 0.0
        %1691 = vmatpush1.msra.mxu0 %v1655
        %1692 = vmatprep.subr.mxu0 0.0
        %1693 = vmatpush1.msra.mxu0 %v1656
        %1694 = vmatprep.subr.mxu0 0.0
        %1695 = vmatpush1.msra.mxu0 %v1657
        %1696 = vmatprep.subr.mxu0 0.0
        %1697 = vmatpush1.msra.mxu0 %v1658
        %1698 = vmatprep.subr.mxu0 0.0
        %1699 = vmatpush1.msra.mxu0 0.0
        %1700 = vmatprep.subr.mxu0 0.0
        %1701 = vmatpush1.msra.mxu0 0.0
        %1702 = vmatprep.subr.mxu0 0.0
        %1703 = vmatpush1.msra.mxu0 0.0
        %1704 = vmatprep.subr.mxu0 0.0
        %1705 = vmatpush1.msra.mxu0 0.0
        %1706 = vmatprep.subr.mxu0 0.0
        %1707 = vmatpush1.msra.mxu0 0.0
        %1708 = vmatprep.subr.mxu0 0.0
        %1709 = vmatpush1.msra.mxu0 0.0
        %1710 = vmatprep.subr.mxu0 0.0
        %1711 = vmatpush1.msra.mxu0 0.0
        %1712 = vmatprep.subr.mxu0 0.0
        %1713 = vmatpush1.msra.mxu0 0.0
        %1714 = vmatprep.subr.mxu0 0.0
        %1715 = vmatpush1.msra.mxu0 0.0
        %1716 = vmatprep.subr.mxu0 0.0
        %1717 = vmatpush1.msra.mxu0 0.0
        %1718 = vmatprep.subr.mxu0 0.0
        %1719 = vmatpush1.msra.mxu0 0.0
        %1720 = vmatprep.subr.mxu0 0.0
        %1721 = vmatpush1.msra.mxu0 0.0
        %1722 = vmatprep.subr.mxu0 0.0
        %1723 = vmatpush1.msra.mxu0 0.0
        %1724 = vmatprep.subr.mxu0 0.0
        %1725 = vmatpush1.msra.mxu0 0.0
        %1726 = vmatprep.subr.mxu0 0.0
        %1727 = vmatpush1.msra.mxu0 0.0
        %1728 = vmatprep.subr.mxu0 0.0
        %1729 = vmatpush1.msra.mxu0 0.0
        %1730 = vmatprep.mubr.f32.mxu0 0.0
        %1731 = vmatmul.mubr.f32.gmra.mrb[0].mxu0 %v1642
        %v1732 = vpop.f32.mrb[0].mxu0
        %v1733 = vadd.f32 %v1664, %v1732
        %v1734 = vpop.f32.mrb[0].mxu0
        %1735 = vdwg.mxu0
        %v1736 = vadd.f32 %v1557, %v1733
        %v1737 = vld [vmem:[%s14] sm:$0x1]
        %v1738 = vld [vmem:[%s15] sm:$0x1]
        %v1739 = vsel %vm686, %v1736, 0.0
        %1740 = vadd.xlane.f32.xlu0 %v1739
        %v1741 = vpop.xlane.xlu0 %1740
        %v1742 = vmul.f32 %v1741, %v1533
        %v1743 = vsub.f32 %v1736, %v1742
        %v1744 = vmul.f32 %v1743, %v1743
        %v1745 = vsel %vm686, %v1744, 0.0
        %1746 = vadd.xlane.f32.xlu0 %v1745
        %v1747 = vpop.xlane.xlu0 %1746
        %v1748 = vmul.f32 %v1747, %v1533
        %v1749 = vadd.f32 %v1748, 1e-05
        %v1750 = vrsqrt.pop %v1749
        %v1751 = vmul.f32 %v1743, %v1750
        %v1753 = vlaneseq
        %v1754 = vshrl.u32 %v1753, 7
        %v1755 = vsub.s32 0, %v1754
        %v1756 = vrot.slane %v1737, %v1755
        %v1758 = vmul.f32 %v1751, %v1756
        %v1760 = vlaneseq
        %v1761 = vshrl.u32 %v1760, 7
        %v1762 = vsub.s32 0, %v1761
        %v1763 = vrot.slane %v1738, %v1762
        %v1765 = vadd.f32 %v1758, %v1763
        %1766 = vst.msk [vmem:[%s573] sm:$0xff] %vm686, %v1765
        %s1767 = sand.u32 %s403, 1
        %s1768 = scalar_lea.sflag [#allocation5], %s1767
        %s1769 = sand.u32 %s403, 1
        %s1770 = smul.addr %s1769, 8
        %s1771 = scalar_lea.vmem [#allocation6], %s1770
        // Predicated region
        $region93: #{tpu_custom_call.1} parent=83 // pred_check
          %p1772 = pneg %p413
        $region94: #{tpu_custom_call.1} parent=83 // pred_check_branch
          %1774 = sbr.rel (%p1772) target = $region96
        $region95: #{tpu_custom_call.1} parent=83 // pred_region
          %s1776 = ssub.s32 128, 128
          %1777 = vsyncadd %s1768, %s1776
          %s1778 = smul.addr %s37, 2
          %s1779 = sadd.s32 %s38, %s1778
          %s1780 = smul.addr %s1779, 128
          %s1781 = scalar_lea.hbm %s16, %s1780
          %s1783 = sshll.u32 %s1771, 4
          %s1784 = int_to_ptr.vmem [resolvable:$true] %s1783
          %1786 = dma.vmem_to_hbm [thread:$0]  %s1784, 128, %s1781, %s1768
        $region96: #{tpu_custom_call.1} parent=83 // pred_fallthru
          _
      $region84: #{tpu_custom_call.1} parent=5 // pred_fallthru
        _
      %p1787 = scmp.le.s32.totalorder 2, %s28
      // Predicated region
      $region97: #{tpu_custom_call.1} parent=5 // pred_check
        %p1788 = pneg %p1787
      $region98: #{tpu_custom_call.1} parent=5 // pred_check_branch
        %1790 = sbr.rel (%p1788) target = $region100
      $region99: #{tpu_custom_call.1} parent=5 // pred_region
        %s1791 = ssub.s32 %s28, 2
        // Predicated region
        $region101: #{tpu_custom_call.1} parent=99 // pred_check
          %p1792 = pneg %p419
        $region102: #{tpu_custom_call.1} parent=99 // pred_check_branch
          %1794 = sbr.rel (%p1792) target = $region104
        $region103: #{tpu_custom_call.1} parent=99 // pred_region
          %s1795 = sand.u32 %s404, 1
          %s1796 = scalar_lea.sflag [#allocation5], %s1795
          %s1797 = sand.u32 %s404, 1
          %s1798 = smul.addr %s1797, 8
          %s1799 = scalar_lea.vmem [#allocation6], %s1798
          %1800 = dma.done %s1796, 128
        $region104: #{tpu_custom_call.1} parent=99 // pred_fallthru
          _
      $region100: #{tpu_custom_call.1} parent=5 // pred_fallthru
        _
    $region6: #{tpu_custom_call.1} parent=1 // loop_footer
      %s32 = sadd.s32 1, %s28
    $region7: #{tpu_custom_call.1} parent=1 // loop_footer_branch
      %27 = sbr.rel target = $region3
    $region8: #{tpu_custom_call.1} parent=1 // loop_exit
      _
    %1801 = vsyncpa [#allocation4], 1
    %s1802 = scalar_lea.sflag [#allocation4], 1
    %1803 = vsyncpa %s1802, 1
    %1804 = vsyncpa [#allocation5], 1
    %s1805 = scalar_lea.sflag [#allocation5], 1
    %1806 = vsyncpa %s1805, 1

// kernel: tpu_custom_call.1
$region0: #{tpu_custom_call.1}
  #allocation0 [shape = 'u32[]', space=smem, size = 0x4, offset = 0x4, fixed_abs, tag = 'smem constant byte address 0x4 - core index']
  #allocation1 [shape = 'u32[144,128]{1,0:T(1,128)}', space=vmem, size = 0x12000, scoped, tag = 'internal scratch']
  #allocation2 [shape = 'f32[8,64]{1,0:T(8,128)}', space=vmem, size = 0x1000, scoped, tag = 'scratch operand']
  %s0 = inlined_call_operand.vmem [shape: f32[2,16,32], index: 0, kind: input, shape index: {}]
  %s1 = inlined_call_operand.hbm [shape: f32[2,8,32], index: 1, kind: input, shape index: {}]
  %s2 = inlined_call_operand.vmem [shape: f32[32,32], index: 2, kind: input, shape index: {}]
  %s3 = inlined_call_operand.vmem [shape: f32[1,32], index: 3, kind: input, shape index: {}]
  %s4 = inlined_call_operand.vmem [shape: f32[32,64], index: 4, kind: input, shape index: {}]
  %s5 = inlined_call_operand.vmem [shape: f32[1,64], index: 5, kind: input, shape index: {}]
  %s6 = inlined_call_operand.vmem [shape: f32[32,32], index: 6, kind: input, shape index: {}]
  %s7 = inlined_call_operand.vmem [shape: f32[1,32], index: 7, kind: input, shape index: {}]
  %s8 = inlined_call_operand.vmem [shape: f32[1,32], index: 8, kind: input, shape index: {}]
  %s9 = inlined_call_operand.vmem [shape: f32[1,32], index: 9, kind: input, shape index: {}]
  %s10 = inlined_call_operand.vmem [shape: f32[32,128], index: 10, kind: input, shape index: {}]
  %s11 = inlined_call_operand.vmem [shape: f32[1,128], index: 11, kind: input, shape index: {}]
  %s12 = inlined_call_operand.vmem [shape: f32[128,32], index: 12, kind: input, shape index: {}]
  %s13 = inlined_call_operand.vmem [shape: f32[1,32], index: 13, kind: input, shape index: {}]
  %s14 = inlined_call_operand.vmem [shape: f32[1,32], index: 14, kind: input, shape index: {}]
  %s15 = inlined_call_operand.vmem [shape: f32[1,32], index: 15, kind: input, shape index: {}]
  %s16 = inlined_call_operand.hbm [shape: f32[2,16,32], index: 16, kind: output, shape index: {}]
  %s17 = sld [smem:[#allocation0]]
  $region105: #{tpu_custom_call.1} parent=0
    _
  %s19 = ssub.s32 1, %s17
  %s20 = scalar_select 0, %s19, %s17
  $region1: #{tpu_custom_call.1} parent=0
    #allocation3 [shape = 'u8[8192]{0}', space=vmem, size = 0x2000, scoped, tag = 'input window, operand 1']
    #allocation4 [shape = 's32[2]{0}', space=sflag, size = 0x8, scoped, tag = 'scoped memory for tpu_custom_call.1']
    #allocation5 [shape = 's32[2]{0}', space=sflag, size = 0x8, scoped, tag = 'scoped memory for tpu_custom_call.1']
    #allocation6 [shape = 'u8[8192]{0}', space=vmem, size = 0x2000, scoped, tag = 'output window, operand 0']
    %21 = vsyncpa [#allocation4], 0
    %s22 = scalar_lea.sflag [#allocation4], 1
    %23 = vsyncpa %s22, 0
    %24 = vsyncpa [#allocation5], 0
    %s25 = scalar_lea.sflag [#allocation5], 1
    %26 = vsyncpa %s25, 0
    loop: start=0, step=1, limit=6
    $region2: #{tpu_custom_call.1} parent=1 // loop_pre_header
      _
    $region3: #{tpu_custom_call.1} parent=1 // loop_header
      %s28 = sphi 0, %s32
      %p29 = scmp.ge.s32.totalorder %s28, 6
      %s35 = sphi 0, %s47
      %s36 = sphi 0, %s43
      %s37 = sphi 0, %s35
      %s38 = sphi 0, %s36
      %s39 = sphi 0, %s37
      %s40 = sphi 0, %s38
      %s52 = sphi 0, %s54
      %s55 = sphi 0, %s52
      %s56 = sphi 0, %s55
      %s72 = sphi 0, %s56
      %s78 = sphi 0, %s80
      %s81 = sphi 0, %s78
      %s82 = sphi 0, %s81
      %s98 = sphi 0, %s82
      %s102 = sphi 0, %s102
      %s104 = sphi 0, %s102
      %s105 = sphi 0, %s104
      %s119 = sphi 0, %s105
      %s123 = sphi 0, %s123
      %s125 = sphi 0, %s123
      %s126 = sphi 0, %s125
      %s140 = sphi 0, %s126
      %s144 = sphi 0, %s144
      %s146 = sphi 0, %s144
      %s147 = sphi 0, %s146
      %s161 = sphi 0, %s147
      %s165 = sphi 0, %s165
      %s167 = sphi 0, %s165
      %s168 = sphi 0, %s167
      %s182 = sphi 0, %s168
      %s186 = sphi 0, %s186
      %s188 = sphi 0, %s186
      %s189 = sphi 0, %s188
      %s203 = sphi 0, %s189
      %s207 = sphi 0, %s207
      %s209 = sphi 0, %s207
      %s210 = sphi 0, %s209
      %s224 = sphi 0, %s210
      %s228 = sphi 0, %s228
      %s230 = sphi 0, %s228
      %s231 = sphi 0, %s230
      %s245 = sphi 0, %s231
      %s249 = sphi 0, %s249
      %s251 = sphi 0, %s249
      %s252 = sphi 0, %s251
      %s266 = sphi 0, %s252
      %s270 = sphi 0, %s270
      %s272 = sphi 0, %s270
      %s273 = sphi 0, %s272
      %s287 = sphi 0, %s273
      %s291 = sphi 0, %s291
      %s293 = sphi 0, %s291
      %s294 = sphi 0, %s293
      %s308 = sphi 0, %s294
      %s312 = sphi 0, %s312
      %s314 = sphi 0, %s312
      %s315 = sphi 0, %s314
      %s329 = sphi 0, %s315
      %s333 = sphi 0, %s333
      %s335 = sphi 0, %s333
      %s336 = sphi 0, %s335
      %s350 = sphi 0, %s336
      %s354 = sphi 0, %s354
      %s356 = sphi 0, %s354
      %s357 = sphi 0, %s356
      %s371 = sphi 0, %s357
      %s375 = sphi 0, %s375
      %s377 = sphi 0, %s375
      %s378 = sphi 0, %s377
      %s392 = sphi 0, %s378
      %s400 = sphi 0, %s402
      %s403 = sphi 0, %s400
      %s404 = sphi 0, %s403
      %s420 = sphi 0, %s404
    $region4: #{tpu_custom_call.1} parent=1 // loop_header_branch
      %31 = sbr.rel (%p29) target = $region8
    $region5: #{tpu_custom_call.1} parent=1 // loop_body
      %s33 = ssub.s32 %s28, 1
      %s34 = ssub.s32 %s28, 2
      %s41 = sadd.s32 1, %s36
      %p42 = scmp.ge.s32.totalorder %s41, 2
      %s43 = scalar_select %p42, 0, %s41
      %s44 = sadd.s32 1, %s35
      %s45 = scalar_select %p42, %s44, %s35
      %p46 = scmp.ge.s32.totalorder %s45, 2
      %s47 = scalar_select %p46, 0, %s45
      %s48 = ssub.s32 %s35, %s47
      %s49 = ssub.s32 %s36, %s43
      %s50 = sor.u32 %s48, %s49
      %p51 = scmp.eq.s32.totalorder %s50, 0
      %s53 = sadd.s32 %s52, 1
      %s54 = scalar_select %p51, %s52, %s53
      %p57 = pneg %p51
      %p58 = scmp.eq.s32.totalorder %s28, 3
      %p59 = por %p57, %p58
      %p60 = scmp.ne.s32.totalorder %s52, %s55
      %p61 = scmp.eq.s32.totalorder %s28, 0
      %p62 = por %p60, %p61
      %p63 = scmp.ne.s32.totalorder %s52, %s55
      %p64 = scmp.eq.s32.totalorder %s33, 3
      %p65 = por %p63, %p64
      %p66 = scmp.ne.s32.totalorder %s55, %s56
      %p67 = scmp.eq.s32.totalorder %s33, 0
      %p68 = por %p66, %p67
      %p69 = scmp.ne.s32.totalorder %s55, %s56
      %p70 = scmp.eq.s32.totalorder %s34, 3
      %p71 = por %p69, %p70
      %p73 = scmp.ne.s32.totalorder %s56, %s72
      %p74 = scmp.eq.s32.totalorder %s34, 0
      %p75 = por %p73, %p74
      %s76 = ssub.s32 %s35, %s47
      %p77 = scmp.eq.s32.totalorder %s76, 0
      %s79 = sadd.s32 %s78, 1
      %s80 = scalar_select %p77, %s78, %s79
      %p83 = pneg %p77
      %p84 = scmp.eq.s32.totalorder %s28, 3
      %p85 = por %p83, %p84
      %p86 = scmp.ne.s32.totalorder %s78, %s81
      %p87 = scmp.eq.s32.totalorder %s28, 0
      %p88 = por %p86, %p87
      %p89 = scmp.ne.s32.totalorder %s78, %s81
      %p90 = scmp.eq.s32.totalorder %s33, 3
      %p91 = por %p89, %p90
      %p92 = scmp.ne.s32.totalorder %s81, %s82
      %p93 = scmp.eq.s32.totalorder %s33, 0
      %p94 = por %p92, %p93
      %p95 = scmp.ne.s32.totalorder %s81, %s82
      %p96 = scmp.eq.s32.totalorder %s34, 3
      %p97 = por %p95, %p96
      %p99 = scmp.ne.s32.totalorder %s82, %s98
      %p100 = scmp.eq.s32.totalorder %s34, 0
      %p101 = por %p99, %p100
      %s103 = sadd.s32 %s102, 1
      %p106 = scmp.eq.s32.totalorder %s28, 3
      %p107 = scmp.ne.s32.totalorder %s102, %s104
      %p108 = scmp.eq.s32.totalorder %s28, 0
      %p109 = por %p107, %p108
      %p110 = scmp.ne.s32.totalorder %s102, %s104
      %p111 = scmp.eq.s32.totalorder %s33, 3
      %p112 = por %p110, %p111
      %p113 = scmp.ne.s32.totalorder %s104, %s105
      %p114 = scmp.eq.s32.totalorder %s33, 0
      %p115 = por %p113, %p114
      %p116 = scmp.ne.s32.totalorder %s104, %s105
      %p117 = scmp.eq.s32.totalorder %s34, 3
      %p118 = por %p116, %p117
      %p120 = scmp.ne.s32.totalorder %s105, %s119
      %p121 = scmp.eq.s32.totalorder %s34, 0
      %p122 = por %p120, %p121
      %s124 = sadd.s32 %s123, 1
      %p127 = scmp.eq.s32.totalorder %s28, 3
      %p128 = scmp.ne.s32.totalorder %s123, %s125
      %p129 = scmp.eq.s32.totalorder %s28, 0
      %p130 = por %p128, %p129
      %p131 = scmp.ne.s32.totalorder %s123, %s125
      %p132 = scmp.eq.s32.totalorder %s33, 3
      %p133 = por %p131, %p132
      %p134 = scmp.ne.s32.totalorder %s125, %s126
      %p135 = scmp.eq.s32.totalorder %s33, 0
      %p136 = por %p134, %p135
      %p137 = scmp.ne.s32.totalorder %s125, %s126
      %p138 = scmp.eq.s32.totalorder %s34, 3
      %p139 = por %p137, %p138
      %p141 = scmp.ne.s32.totalorder %s126, %s140
      %p142 = scmp.eq.s32.totalorder %s34, 0
      %p143 = por %p141, %p142
      %s145 = sadd.s32 %s144, 1
      %p148 = scmp.eq.s32.totalorder %s28, 3
      %p149 = scmp.ne.s32.totalorder %s144, %s146
      %p150 = scmp.eq.s32.totalorder %s28, 0
      %p151 = por %p149, %p150
      %p152 = scmp.ne.s32.totalorder %s144, %s146
      %p153 = scmp.eq.s32.totalorder %s33, 3
      %p154 = por %p152, %p153
      %p155 = scmp.ne.s32.totalorder %s146, %s147
      %p156 = scmp.eq.s32.totalorder %s33, 0
      %p157 = por %p155, %p156
      %p158 = scmp.ne.s32.totalorder %s146, %s147
      %p159 = scmp.eq.s32.totalorder %s34, 3
      %p160 = por %p158, %p159
      %p162 = scmp.ne.s32.totalorder %s147, %s161
      %p163 = scmp.eq.s32.totalorder %s34, 0
      %p164 = por %p162, %p163
      %s166 = sadd.s32 %s165, 1
      %p169 = scmp.eq.s32.totalorder %s28, 3
      %p170 = scmp.ne.s32.totalorder %s165, %s167
      %p171 = scmp.eq.s32.totalorder %s28, 0
      %p172 = por %p170, %p171
      %p173 = scmp.ne.s32.totalorder %s165, %s167
      %p174 = scmp.eq.s32.totalorder %s33, 3
      %p175 = por %p173, %p174
      %p176 = scmp.ne.s32.totalorder %s167, %s168
      %p177 = scmp.eq.s32.totalorder %s33, 0
      %p178 = por %p176, %p177
      %p179 = scmp.ne.s32.totalorder %s167, %s168
      %p180 = scmp.eq.s32.totalorder %s34, 3
      %p181 = por %p179, %p180
      %p183 = scmp.ne.s32.totalorder %s168, %s182
      %p184 = scmp.eq.s32.totalorder %s34, 0
      %p185 = por %p183, %p184
      %s187 = sadd.s32 %s186, 1
      %p190 = scmp.eq.s32.totalorder %s28, 3
      %p191 = scmp.ne.s32.totalorder %s186, %s188
      %p192 = scmp.eq.s32.totalorder %s28, 0
      %p193 = por %p191, %p192
      %p194 = scmp.ne.s32.totalorder %s186, %s188
      %p195 = scmp.eq.s32.totalorder %s33, 3
      %p196 = por %p194, %p195
      %p197 = scmp.ne.s32.totalorder %s188, %s189
      %p198 = scmp.eq.s32.totalorder %s33, 0
      %p199 = por %p197, %p198
      %p200 = scmp.ne.s32.totalorder %s188, %s189
      %p201 = scmp.eq.s32.totalorder %s34, 3
      %p202 = por %p200, %p201
      %p204 = scmp.ne.s32.totalorder %s189, %s203
      %p205 = scmp.eq.s32.totalorder %s34, 0
      %p206 = por %p204, %p205
      %s208 = sadd.s32 %s207, 1
      %p211 = scmp.eq.s32.totalorder %s28, 3
      %p212 = scmp.ne.s32.totalorder %s207, %s209
      %p213 = scmp.eq.s32.totalorder %s28, 0
      %p214 = por %p212, %p213
      %p215 = scmp.ne.s32.totalorder %s207, %s209
      %p216 = scmp.eq.s32.totalorder %s33, 3
      %p217 = por %p215, %p216
      %p218 = scmp.ne.s32.totalorder %s209, %s210
      %p219 = scmp.eq.s32.totalorder %s33, 0
      %p220 = por %p218, %p219
      %p221 = scmp.ne.s32.totalorder %s209, %s210
      %p222 = scmp.eq.s32.totalorder %s34, 3
      %p223 = por %p221, %p222
      %p225 = scmp.ne.s32.totalorder %s210, %s224
      %p226 = scmp.eq.s32.totalorder %s34, 0
      %p227 = por %p225, %p226
      %s229 = sadd.s32 %s228, 1
      %p232 = scmp.eq.s32.totalorder %s28, 3
      %p233 = scmp.ne.s32.totalorder %s228, %s230
      %p234 = scmp.eq.s32.totalorder %s28, 0
      %p235 = por %p233, %p234
      %p236 = scmp.ne.s32.totalorder %s228, %s230
      %p237 = scmp.eq.s32.totalorder %s33, 3
      %p238 = por %p236, %p237
      %p239 = scmp.ne.s32.totalorder %s230, %s231
      %p240 = scmp.eq.s32.totalorder %s33, 0
      %p241 = por %p239, %p240
      %p242 = scmp.ne.s32.totalorder %s230, %s231
      %p243 = scmp.eq.s32.totalorder %s34, 3
      %p244 = por %p242, %p243
      %p246 = scmp.ne.s32.totalorder %s231, %s245
      %p247 = scmp.eq.s32.totalorder %s34, 0
      %p248 = por %p246, %p247
      %s250 = sadd.s32 %s249, 1
      %p253 = scmp.eq.s32.totalorder %s28, 3
      %p254 = scmp.ne.s32.totalorder %s249, %s251
      %p255 = scmp.eq.s32.totalorder %s28, 0
      %p256 = por %p254, %p255
      %p257 = scmp.ne.s32.totalorder %s249, %s251
      %p258 = scmp.eq.s32.totalorder %s33, 3
      %p259 = por %p257, %p258
      %p260 = scmp.ne.s32.totalorder %s251, %s252
      %p261 = scmp.eq.s32.totalorder %s33, 0
      %p262 = por %p260, %p261
      %p263 = scmp.ne.s32.totalorder %s251, %s252
      %p264 = scmp.eq.s32.totalorder %s34, 3
      %p265 = por %p263, %p264
      %p267 = scmp.ne.s32.totalorder %s252, %s266
      %p268 = scmp.eq.s32.totalorder %s34, 0
      %p269 = por %p267, %p268
      %s271 = sadd.s32 %s270, 1
      %p274 = scmp.eq.s32.totalorder %s28, 3
      %p275 = scmp.ne.s32.totalorder %s270, %s272
      %p276 = scmp.eq.s32.totalorder %s28, 0
      %p277 = por %p275, %p276
      %p278 = scmp.ne.s32.totalorder %s270, %s272
      %p279 = scmp.eq.s32.totalorder %s33, 3
      %p280 = por %p278, %p279
      %p281 = scmp.ne.s32.totalorder %s272, %s273
      %p282 = scmp.eq.s32.totalorder %s33, 0
      %p283 = por %p281, %p282
      %p284 = scmp.ne.s32.totalorder %s272, %s273
      %p285 = scmp.eq.s32.totalorder %s34, 3
      %p286 = por %p284, %p285
      %p288 = scmp.ne.s32.totalorder %s273, %s287
      %p289 = scmp.eq.s32.totalorder %s34, 0
      %p290 = por %p288, %p289
      %s292 = sadd.s32 %s291, 1
      %p295 = scmp.eq.s32.totalorder %s28, 3
      %p296 = scmp.ne.s32.totalorder %s291, %s293
      %p297 = scmp.eq.s32.totalorder %s28, 0
      %p298 = por %p296, %p297
      %p299 = scmp.ne.s32.totalorder %s291, %s293
      %p300 = scmp.eq.s32.totalorder %s33, 3
      %p301 = por %p299, %p300
      %p302 = scmp.ne.s32.totalorder %s293, %s294
      %p303 = scmp.eq.s32.totalorder %s33, 0
      %p304 = por %p302, %p303
      %p305 = scmp.ne.s32.totalorder %s293, %s294
      %p306 = scmp.eq.s32.totalorder %s34, 3
      %p307 = por %p305, %p306
      %p309 = scmp.ne.s32.totalorder %s294, %s308
      %p310 = scmp.eq.s32.totalorder %s34, 0
      %p311 = por %p309, %p310
      %s313 = sadd.s32 %s312, 1
      %p316 = scmp.eq.s32.totalorder %s28, 3
      %p317 = scmp.ne.s32.totalorder %s312, %s314
      %p318 = scmp.eq.s32.totalorder %s28, 0
      %p319 = por %p317, %p318
      %p320 = scmp.ne.s32.totalorder %s312, %s314
      %p321 = scmp.eq.s32.totalorder %s33, 3
      %p322 = por %p320, %p321
      %p323 = scmp.ne.s32.totalorder %s314, %s315
      %p324 = scmp.eq.s32.totalorder %s33, 0
      %p325 = por %p323, %p324
      %p326 = scmp.ne.s32.totalorder %s314, %s315
      %p327 = scmp.eq.s32.totalorder %s34, 3
      %p328 = por %p326, %p327
      %p330 = scmp.ne.s32.totalorder %s315, %s329
      %p331 = scmp.eq.s32.totalorder %s34, 0
      %p332 = por %p330, %p331
      %s334 = sadd.s32 %s333, 1
      %p337 = scmp.eq.s32.totalorder %s28, 3
      %p338 = scmp.ne.s32.totalorder %s333, %s335
      %p339 = scmp.eq.s32.totalorder %s28, 0
      %p340 = por %p338, %p339
      %p341 = scmp.ne.s32.totalorder %s333, %s335
      %p342 = scmp.eq.s32.totalorder %s33, 3
      %p343 = por %p341, %p342
      %p344 = scmp.ne.s32.totalorder %s335, %s336
      %p345 = scmp.eq.s32.totalorder %s33, 0
      %p346 = por %p344, %p345
      %p347 = scmp.ne.s32.totalorder %s335, %s336
      %p348 = scmp.eq.s32.totalorder %s34, 3
      %p349 = por %p347, %p348
      %p351 = scmp.ne.s32.totalorder %s336, %s350
      %p352 = scmp.eq.s32.totalorder %s34, 0
      %p353 = por %p351, %p352
      %s355 = sadd.s32 %s354, 1
      %p358 = scmp.eq.s32.totalorder %s28, 3
      %p359 = scmp.ne.s32.totalorder %s354, %s356
      %p360 = scmp.eq.s32.totalorder %s28, 0
      %p361 = por %p359, %p360
      %p362 = scmp.ne.s32.totalorder %s354, %s356
      %p363 = scmp.eq.s32.totalorder %s33, 3
      %p364 = por %p362, %p363
      %p365 = scmp.ne.s32.totalorder %s356, %s357
      %p366 = scmp.eq.s32.totalorder %s33, 0
      %p367 = por %p365, %p366
      %p368 = scmp.ne.s32.totalorder %s356, %s357
      %p369 = scmp.eq.s32.totalorder %s34, 3
      %p370 = por %p368, %p369
      %p372 = scmp.ne.s32.totalorder %s357, %s371
      %p373 = scmp.eq.s32.totalorder %s34, 0
      %p374 = por %p372, %p373
      %s376 = sadd.s32 %s375, 1
      %p379 = scmp.eq.s32.totalorder %s28, 3
      %p380 = scmp.ne.s32.totalorder %s375, %s377
      %p381 = scmp.eq.s32.totalorder %s28, 0
      %p382 = por %p380, %p381
      %p383 = scmp.ne.s32.totalorder %s375, %s377
      %p384 = scmp.eq.s32.totalorder %s33, 3
      %p385 = por %p383, %p384
      %p386 = scmp.ne.s32.totalorder %s377, %s378
      %p387 = scmp.eq.s32.totalorder %s33, 0
      %p388 = por %p386, %p387
      %p389 = scmp.ne.s32.totalorder %s377, %s378
      %p390 = scmp.eq.s32.totalorder %s34, 3
      %p391 = por %p389, %p390
      %p393 = scmp.ne.s32.totalorder %s378, %s392
      %p394 = scmp.eq.s32.totalorder %s34, 0
      %p395 = por %p393, %p394
      %s396 = ssub.s32 %s35, %s47
      %s397 = ssub.s32 %s36, %s43
      %s398 = sor.u32 %s396, %s397
      %p399 = scmp.eq.s32.totalorder %s398, 0
      %s401 = sadd.s32 %s400, 1
      %s402 = scalar_select %p399, %s400, %s401
      %p405 = pneg %p399
      %p406 = scmp.eq.s32.totalorder %s28, 3
      %p407 = por %p405, %p406
      %p408 = scmp.ne.s32.totalorder %s400, %s403
      %p409 = scmp.eq.s32.totalorder %s28, 0
      %p410 = por %p408, %p409
      %p411 = scmp.ne.s32.totalorder %s400, %s403
      %p412 = scmp.eq.s32.totalorder %s33, 3
      %p413 = por %p411, %p412
      %p414 = scmp.ne.s32.totalorder %s403, %s404
      %p415 = scmp.eq.s32.totalorder %s33, 0
      %p416 = por %p414, %p415
      %p417 = scmp.ne.s32.totalorder %s403, %s404
      %p418 = scmp.eq.s32.totalorder %s34, 3
      %p419 = por %p417, %p418
      %p421 = scmp.ne.s32.totalorder %s404, %s420
      %p422 = scmp.eq.s32.totalorder %s34, 0
      %p423 = por %p421, %p422
      %p424 = scmp.le.s32.totalorder 1, %s28
      %p425 = scmp.lt.s32.totalorder %s28, 5
      %p426 = pnand %p424, %p425
      %p427 = pneg %p426
      // Predicated region
      $region9: #{tpu_custom_call.1} parent=5 // pred_check
        _
      $region10: #{tpu_custom_call.1} parent=5 // pred_check_branch
        %429 = sbr.rel (%p426) target = $region12
      $region11: #{tpu_custom_call.1} parent=5 // pred_region
        %s430 = ssub.s32 %s28, 1
        // Predicated region
        $region13: #{tpu_custom_call.1} parent=11 // pred_check
          %p431 = pneg %p115
        $region14: #{tpu_custom_call.1} parent=11 // pred_check_branch
          %433 = sbr.rel (%p431) target = $region16
        $region15: #{tpu_custom_call.1} parent=11 // pred_region
          _
        $region16: #{tpu_custom_call.1} parent=11 // pred_fallthru
          _
        // Predicated region
        $region17: #{tpu_custom_call.1} parent=11 // pred_check
          %p434 = pneg %p136
        $region18: #{tpu_custom_call.1} parent=11 // pred_check_branch
          %436 = sbr.rel (%p434) target = $region20
        $region19: #{tpu_custom_call.1} parent=11 // pred_region
          _
        $region20: #{tpu_custom_call.1} parent=11 // pred_fallthru
          _
        // Predicated region
        $region21: #{tpu_custom_call.1} parent=11 // pred_check
          %p437 = pneg %p157
        $region22: #{tpu_custom_call.1} parent=11 // pred_check_branch
          %439 = sbr.rel (%p437) target = $region24
        $region23: #{tpu_custom_call.1} parent=11 // pred_region
          _
        $region24: #{tpu_custom_call.1} parent=11 // pred_fallthru
          _
        // Predicated region
        $region25: #{tpu_custom_call.1} parent=11 // pred_check
          %p440 = pneg %p178
        $region26: #{tpu_custom_call.1} parent=11 // pred_check_branch
          %442 = sbr.rel (%p440) target = $region28
        $region27: #{tpu_custom_call.1} parent=11 // pred_region
          _
        $region28: #{tpu_custom_call.1} parent=11 // pred_fallthru
          _
        // Predicated region
        $region29: #{tpu_custom_call.1} parent=11 // pred_check
          %p443 = pneg %p199
        $region30: #{tpu_custom_call.1} parent=11 // pred_check_branch
          %445 = sbr.rel (%p443) target = $region32
        $region31: #{tpu_custom_call.1} parent=11 // pred_region
          _
        $region32: #{tpu_custom_call.1} parent=11 // pred_fallthru
          _
        // Predicated region
        $region33: #{tpu_custom_call.1} parent=11 // pred_check
          %p446 = pneg %p220
        $region34: #{tpu_custom_call.1} parent=11 // pred_check_branch
          %448 = sbr.rel (%p446) target = $region36
        $region35: #{tpu_custom_call.1} parent=11 // pred_region
          _
        $region36: #{tpu_custom_call.1} parent=11 // pred_fallthru
          _
        // Predicated region
        $region37: #{tpu_custom_call.1} parent=11 // pred_check
          %p449 = pneg %p241
        $region38: #{tpu_custom_call.1} parent=11 // pred_check_branch
          %451 = sbr.rel (%p449) target = $region40
        $region39: #{tpu_custom_call.1} parent=11 // pred_region
          _
        $region40: #{tpu_custom_call.1} parent=11 // pred_fallthru
          _
        // Predicated region
        $region41: #{tpu_custom_call.1} parent=11 // pred_check
          %p452 = pneg %p262
        $region42: #{tpu_custom_call.1} parent=11 // pred_check_branch
          %454 = sbr.rel (%p452) target = $region44
        $region43: #{tpu_custom_call.1} parent=11 // pred_region
          _
        $region44: #{tpu_custom_call.1} parent=11 // pred_fallthru
          _
        // Predicated region
        $region45: #{tpu_custom_call.1} parent=11 // pred_check
          %p455 = pneg %p283
        $region46: #{tpu_custom_call.1} parent=11 // pred_check_branch
          %457 = sbr.rel (%p455) target = $region48
        $region47: #{tpu_custom_call.1} parent=11 // pred_region
          _
        $region48: #{tpu_custom_call.1} parent=11 // pred_fallthru
          _
        // Predicated region
        $region49: #{tpu_custom_call.1} parent=11 // pred_check
          %p458 = pneg %p304
        $region50: #{tpu_custom_call.1} parent=11 // pred_check_branch
          %460 = sbr.rel (%p458) target = $region52
        $region51: #{tpu_custom_call.1} parent=11 // pred_region
          _
        $region52: #{tpu_custom_call.1} parent=11 // pred_fallthru
          _
        // Predicated region
        $region53: #{tpu_custom_call.1} parent=11 // pred_check
          %p461 = pneg %p325
        $region54: #{tpu_custom_call.1} parent=11 // pred_check_branch
          %463 = sbr.rel (%p461) target = $region56
        $region55: #{tpu_custom_call.1} parent=11 // pred_region
          _
        $region56: #{tpu_custom_call.1} parent=11 // pred_fallthru
          _
        // Predicated region
        $region57: #{tpu_custom_call.1} parent=11 // pred_check
          %p464 = pneg %p346
        $region58: #{tpu_custom_call.1} parent=11 // pred_check_branch
          %466 = sbr.rel (%p464) target = $region60
        $region59: #{tpu_custom_call.1} parent=11 // pred_region
          _
        $region60: #{tpu_custom_call.1} parent=11 // pred_fallthru
          _
        // Predicated region
        $region61: #{tpu_custom_call.1} parent=11 // pred_check
          %p467 = pneg %p367
        $region62: #{tpu_custom_call.1} parent=11 // pred_check_branch
          %469 = sbr.rel (%p467) target = $region64
        $region63: #{tpu_custom_call.1} parent=11 // pred_region
          _
        $region64: #{tpu_custom_call.1} parent=11 // pred_fallthru
          _
        // Predicated region
        $region65: #{tpu_custom_call.1} parent=11 // pred_check
          %p470 = pneg %p388
        $region66: #{tpu_custom_call.1} parent=11 // pred_check_branch
          %472 = sbr.rel (%p470) target = $region68
        $region67: #{tpu_custom_call.1} parent=11 // pred_region
          _
        $region68: #{tpu_custom_call.1} parent=11 // pred_fallthru
          _
      $region12: #{tpu_custom_call.1} parent=5 // pred_fallthru
        _
      %p473 = scmp.lt.s32.totalorder %s28, 4
      // Predicated region
      $region69: #{tpu_custom_call.1} parent=5 // pred_check
        %p474 = pneg %p473
      $region70: #{tpu_custom_call.1} parent=5 // pred_check_branch
        %476 = sbr.rel (%p474) target = $region72
      $region71: #{tpu_custom_call.1} parent=5 // pred_region
        // Predicated region
        $region73: #{tpu_custom_call.1} parent=71 // pred_check
          %p477 = pneg %p62
        $region74: #{tpu_custom_call.1} parent=71 // pred_check_branch
          %479 = sbr.rel (%p477) target = $region76
        $region75: #{tpu_custom_call.1} parent=71 // pred_region
          %p480 = scmp.lt.s32.totalorder %s35, 1
          %s481 = scalar_select %p480, %s35, 1
          %p482 = scmp.lt.s32.totalorder %s36, 1
          %s483 = scalar_select %p482, %s36, 1
          %s484 = smul.addr %s481, 2
          %s485 = sadd.s32 %s483, %s484
          %s486 = smul.addr %s485, 8
          %s487 = scalar_lea.vmem %s0, %s486
        $region76: #{tpu_custom_call.1} parent=71 // pred_fallthru
          _
        // Predicated region
        $region77: #{tpu_custom_call.1} parent=71 // pred_check
          %p488 = pneg %p88
        $region78: #{tpu_custom_call.1} parent=71 // pred_check_branch
          %490 = sbr.rel (%p488) target = $region80
        $region79: #{tpu_custom_call.1} parent=71 // pred_region
          %s491 = sand.u32 %s78, 1
          %s492 = scalar_lea.sflag [#allocation4], %s491
          %s493 = sand.u32 %s78, 1
          %s494 = smul.addr %s493, 8
          %s495 = scalar_lea.vmem [#allocation3], %s494
          %s497 = ssub.s32 128, 128
          %498 = vsyncadd %s492, %s497
          %s499 = smul.addr %s35, 128
          %s500 = scalar_lea.hbm %s1, %s499
          %s502 = sshll.u32 %s495, 4
          %s503 = int_to_ptr.vmem [resolvable:$true] %s502
          %505 = dma.hbm_to_vmem [thread:$0]  %s500, 128, %s503, %s492
        $region80: #{tpu_custom_call.1} parent=71 // pred_fallthru
          _
      $region72: #{tpu_custom_call.1} parent=5 // pred_fallthru
        _
      %p506 = scmp.le.s32.totalorder 1, %s28
      %p507 = scmp.lt.s32.totalorder %s28, 5
      %p508 = pnand %p506, %p507
      %p509 = pneg %p508
      // Predicated region
      $region81: #{tpu_custom_call.1} parent=5 // pred_check
        _
      $region82: #{tpu_custom_call.1} parent=5 // pred_check_branch
        %511 = sbr.rel (%p508) target = $region84
      $region83: #{tpu_custom_call.1} parent=5 // pred_region
        %s512 = ssub.s32 %s28, 1
        %s513 = sand.u32 %s81, 1
        %s514 = scalar_lea.sflag [#allocation4], %s513
        %s515 = sand.u32 %s81, 1
        %s516 = smul.addr %s515, 8
        %s517 = scalar_lea.vmem [#allocation3], %s516
        // Predicated region
        $region85: #{tpu_custom_call.1} parent=83 // pred_check
          %p518 = pneg %p94
        $region86: #{tpu_custom_call.1} parent=83 // pred_check_branch
          %520 = sbr.rel (%p518) target = $region88
        $region87: #{tpu_custom_call.1} parent=83 // pred_region
          %521 = dma.done %s514, 128
        $region88: #{tpu_custom_call.1} parent=83 // pred_fallthru
          _
        %p522 = scmp.lt.s32.totalorder %s37, 1
        %s523 = scalar_select %p522, %s37, 1
        %p524 = scmp.lt.s32.totalorder %s38, 1
        %s525 = scalar_select %p524, %s38, 1
        %s526 = smul.addr %s523, 2
        %s527 = sadd.s32 %s525, %s526
        %s528 = smul.addr %s527, 8
        %s529 = scalar_lea.vmem %s0, %s528
        %p530 = pneg %p68
        %p531 = pneg %p65
        %s532 = sand.u32 %s81, 1
        %s533 = scalar_lea.sflag [#allocation4], %s532
        %s534 = sand.u32 %s81, 1
        %s535 = smul.addr %s534, 8
        %s536 = scalar_lea.vmem [#allocation3], %s535
        %p537 = pneg %p94
        %p538 = pneg %p91
        %p539 = pneg %p115
        %p540 = pneg %p112
        %p541 = pneg %p136
        %p542 = pneg %p133
        %p543 = pneg %p157
        %p544 = pneg %p154
        %p545 = pneg %p178
        %p546 = pneg %p175
        %p547 = pneg %p199
        %p548 = pneg %p196
        %p549 = pneg %p220
        %p550 = pneg %p217
        %p551 = pneg %p241
        %p552 = pneg %p238
        %p553 = pneg %p262
        %p554 = pneg %p259
        %p555 = pneg %p283
        %p556 = pneg %p280
        %p557 = pneg %p304
        %p558 = pneg %p301
        %p559 = pneg %p325
        %p560 = pneg %p322
        %p561 = pneg %p346
        %p562 = pneg %p343
        %p563 = pneg %p367
        %p564 = pneg %p364
        %p565 = pneg %p388
        %p566 = pneg %p385
        %p567 = pneg %p416
        %p568 = pneg %p413
        %s569 = sand.u32 %s403, 1
        %s570 = scalar_lea.sflag [#allocation5], %s569
        %s571 = sand.u32 %s403, 1
        %s572 = smul.addr %s571, 8
        %s573 = scalar_lea.vmem [#allocation6], %s572
        %p574 = scmp.lt.s32.totalorder %s37, 1
        %s575 = scalar_select %p574, %s37, 1
        %p576 = scmp.lt.s32.totalorder %s38, 1
        %s577 = scalar_select %p576, %s38, 1
        %s578 = smul.addr %s575, 2
        %s579 = sadd.s32 %s577, %s578
        %s580 = smul.addr %s579, 8
        %s581 = scalar_lea.vmem %s0, %s580
        %p582 = scmp.eq.s32.totalorder %s38, 0
        // Predicated region
        $region89: #{tpu_custom_call.1} parent=83 // pred_check
          %p583 = pneg %p582
        $region90: #{tpu_custom_call.1} parent=83 // pred_check_branch
          %585 = sbr.rel (%p583) target = $region92
        $region91: #{tpu_custom_call.1} parent=83 // pred_region
          %v586 = vld [vmem:[%s517] sm:$0xff]
          %v587 = vld [vmem:[%s4] sm:$0xff]
          %v588 = vld [vmem:[%s4 + $0x8] sm:$0xff]
          %v589 = vld [vmem:[%s4 + $0x10] sm:$0xff]
          %v590 = vld [vmem:[%s4 + $0x18] sm:$0xff]
          %v591 = vld [vmem:[%s5] sm:$0x1]
          %v593 = vlaneseq
          %v594 = vshrl.u32 %v593, 7
          %v595 = vsub.s32 0, %v594
          %v596 = vrot.slane %v591, %v595
          %vm598 = vcmask 261120
          %v600 = vsel %vm598, %v586, 0
          %602 = vmatprep.subr.mxu0 0.0
          %603 = vmatpush1.msra.mxu0 %v587
          %604 = vmatprep.subr.mxu0 0.0
          %605 = vmatpush1.msra.mxu0 %v588
          %606 = vmatprep.subr.mxu0 0.0
          %607 = vmatpush1.msra.mxu0 %v589
          %608 = vmatprep.subr.mxu0 0.0
          %609 = vmatpush1.msra.mxu0 %v590
          %610 = vmatprep.subr.mxu0 0.0
          %611 = vmatpush1.msra.mxu0 0.0
          %612 = vmatprep.subr.mxu0 0.0
          %613 = vmatpush1.msra.mxu0 0.0
          %614 = vmatprep.subr.mxu0 0.0
          %615 = vmatpush1.msra.mxu0 0.0
          %616 = vmatprep.subr.mxu0 0.0
          %617 = vmatpush1.msra.mxu0 0.0
          %618 = vmatprep.subr.mxu0 0.0
          %619 = vmatpush1.msra.mxu0 0.0
          %620 = vmatprep.subr.mxu0 0.0
          %621 = vmatpush1.msra.mxu0 0.0
          %622 = vmatprep.subr.mxu0 0.0
          %623 = vmatpush1.msra.mxu0 0.0
          %624 = vmatprep.subr.mxu0 0.0
          %625 = vmatpush1.msra.mxu0 0.0
          %626 = vmatprep.subr.mxu0 0.0
          %627 = vmatpush1.msra.mxu0 0.0
          %628 = vmatprep.subr.mxu0 0.0
          %629 = vmatpush1.msra.mxu0 0.0
          %630 = vmatprep.subr.mxu0 0.0
          %631 = vmatpush1.msra.mxu0 0.0
          %632 = vmatprep.subr.mxu0 0.0
          %633 = vmatpush1.msra.mxu0 0.0
          %634 = vmatprep.subr.mxu0 0.0
          %635 = vmatpush1.msra.mxu0 0.0
          %636 = vmatprep.subr.mxu0 0.0
          %637 = vmatpush1.msra.mxu0 0.0
          %638 = vmatprep.subr.mxu0 0.0
          %639 = vmatpush1.msra.mxu0 0.0
          %640 = vmatprep.subr.mxu0 0.0
          %641 = vmatpush1.msra.mxu0 0.0
          %642 = vmatprep.subr.mxu0 0.0
          %643 = vmatpush1.msra.mxu0 0.0
          %644 = vmatprep.subr.mxu0 0.0
          %645 = vmatpush1.msra.mxu0 0.0
          %646 = vmatprep.subr.mxu0 0.0
          %647 = vmatpush1.msra.mxu0 0.0
          %648 = vmatprep.subr.mxu0 0.0
          %649 = vmatpush1.msra.mxu0 0.0
          %650 = vmatprep.subr.mxu0 0.0
          %651 = vmatpush1.msra.mxu0 0.0
          %652 = vmatprep.subr.mxu0 0.0
          %653 = vmatpush1.msra.mxu0 0.0
          %654 = vmatprep.subr.mxu0 0.0
          %655 = vmatpush1.msra.mxu0 0.0
          %656 = vmatprep.subr.mxu0 0.0
          %657 = vmatpush1.msra.mxu0 0.0
          %658 = vmatprep.subr.mxu0 0.0
          %659 = vmatpush1.msra.mxu0 0.0
          %660 = vmatprep.subr.mxu0 0.0
          %661 = vmatpush1.msra.mxu0 0.0
          %662 = vmatprep.subr.mxu0 0.0
          %663 = vmatpush1.msra.mxu0 0.0
          %664 = vmatprep.subr.mxu0 0.0
          %665 = vmatpush1.msra.mxu0 0.0
          %666 = vmatprep.mubr.f32.mxu0 0.0
          %667 = vmatmul.mubr.f32.gmra.mrb[0].mxu0 %v600
          %v668 = vpop.f32.mrb[0].mxu0
          %v669 = vadd.f32 %v596, %v668
          %v670 = vpop.f32.mrb[0].mxu0
          %671 = vdwg.mxu0
          %vm672 = vcmask 523264
          %673 = vst.msk [vmem:[#allocation2] sm:$0xff] %vm672, %v669
        $region92: #{tpu_custom_call.1} parent=83 // pred_fallthru
          _
        %v674 = vld [vmem:[%s581] sm:$0xff]
        %v675 = vld [vmem:[%s2] sm:$0xff]
        %v676 = vld [vmem:[%s2 + $0x8] sm:$0xff]
        %v677 = vld [vmem:[%s2 + $0x10] sm:$0xff]
        %v678 = vld [vmem:[%s2 + $0x18] sm:$0xff]
        %v679 = vld [vmem:[%s3] sm:$0x1]
        %v681 = vlaneseq
        %v682 = vshrl.u32 %v681, 7
        %v683 = vsub.s32 0, %v682
        %v684 = vrot.slane %v679, %v683
        %vm686 = vcmask 261120
        %v688 = vsel %vm686, %v674, 0
        %690 = vmatprep.subr.mxu0 0.0
        %691 = vmatpush1.msra.mxu0 %v675
        %692 = vmatprep.subr.mxu0 0.0
        %693 = vmatpush1.msra.mxu0 %v676
        %694 = vmatprep.subr.mxu0 0.0
        %695 = vmatpush1.msra.mxu0 %v677
        %696 = vmatprep.subr.mxu0 0.0
        %697 = vmatpush1.msra.mxu0 %v678
        %698 = vmatprep.subr.mxu0 0.0
        %699 = vmatpush1.msra.mxu0 0.0
        %700 = vmatprep.subr.mxu0 0.0
        %701 = vmatpush1.msra.mxu0 0.0
        %702 = vmatprep.subr.mxu0 0.0
        %703 = vmatpush1.msra.mxu0 0.0
        %704 = vmatprep.subr.mxu0 0.0
        %705 = vmatpush1.msra.mxu0 0.0
        %706 = vmatprep.subr.mxu0 0.0
        %707 = vmatpush1.msra.mxu0 0.0
        %708 = vmatprep.subr.mxu0 0.0
        %709 = vmatpush1.msra.mxu0 0.0
        %710 = vmatprep.subr.mxu0 0.0
        %711 = vmatpush1.msra.mxu0 0.0
        %712 = vmatprep.subr.mxu0 0.0
        %713 = vmatpush1.msra.mxu0 0.0
        %714 = vmatprep.subr.mxu0 0.0
        %715 = vmatpush1.msra.mxu0 0.0
        %716 = vmatprep.subr.mxu0 0.0
        %717 = vmatpush1.msra.mxu0 0.0
        %718 = vmatprep.subr.mxu0 0.0
        %719 = vmatpush1.msra.mxu0 0.0
        %720 = vmatprep.subr.mxu0 0.0
        %721 = vmatpush1.msra.mxu0 0.0
        %722 = vmatprep.subr.mxu0 0.0
        %723 = vmatpush1.msra.mxu0 0.0
        %724 = vmatprep.subr.mxu0 0.0
        %725 = vmatpush1.msra.mxu0 0.0
        %726 = vmatprep.subr.mxu0 0.0
        %727 = vmatpush1.msra.mxu0 0.0
        %728 = vmatprep.subr.mxu0 0.0
        %729 = vmatpush1.msra.mxu0 0.0
        %730 = vmatprep.subr.mxu0 0.0
        %731 = vmatpush1.msra.mxu0 0.0
        %732 = vmatprep.subr.mxu0 0.0
        %733 = vmatpush1.msra.mxu0 0.0
        %734 = vmatprep.subr.mxu0 0.0
        %735 = vmatpush1.msra.mxu0 0.0
        %736 = vmatprep.subr.mxu0 0.0
        %737 = vmatpush1.msra.mxu0 0.0
        %738 = vmatprep.subr.mxu0 0.0
        %739 = vmatpush1.msra.mxu0 0.0
        %740 = vmatprep.subr.mxu0 0.0
        %741 = vmatpush1.msra.mxu0 0.0
        %742 = vmatprep.subr.mxu0 0.0
        %743 = vmatpush1.msra.mxu0 0.0
        %744 = vmatprep.subr.mxu0 0.0
        %745 = vmatpush1.msra.mxu0 0.0
        %746 = vmatprep.subr.mxu0 0.0
        %747 = vmatpush1.msra.mxu0 0.0
        %748 = vmatprep.subr.mxu0 0.0
        %749 = vmatpush1.msra.mxu0 0.0
        %750 = vmatprep.subr.mxu0 0.0
        %751 = vmatpush1.msra.mxu0 0.0
        %752 = vmatprep.subr.mxu0 0.0
        %753 = vmatpush1.msra.mxu0 0.0
        %754 = vmatprep.mubr.f32.mxu0 0.0
        %755 = vmatmul.mubr.f32.gmra.mrb[0].mxu0 %v688
        %v756 = vpop.f32.mrb[0].mxu0
        %v757 = vadd.f32 %v684, %v756
        %v758 = vpop.f32.mrb[0].mxu0
        %759 = vdwg.mxu0
        %v760 = vld [vmem:[#allocation2] sm:$0xff]
        %vm761 = vcmask 64512
        %v763 = vsel %vm761, %v757, 0
        %v766 = vsel %vm761, %v760, 0
        %768 = vmatprep.subr.mxu0 0.0
        %769 = vmatpush1.xpose.msra.mxu0 %v766
        %770 = vmatprep.subr.mxu0 0.0
        %771 = vmatpush1.xpose.msra.mxu0 0.0
        %772 = vmatprep.subr.mxu0 0.0
        %773 = vmatpush1.xpose.msra.mxu0 0.0
        %774 = vmatprep.subr.mxu0 0.0
        %775 = vmatpush1.xpose.msra.mxu0 0.0
        %776 = vmatprep.subr.mxu0 0.0
        %777 = vmatpush1.xpose.msra.mxu0 0.0
        %778 = vmatprep.subr.mxu0 0.0
        %779 = vmatpush1.xpose.msra.mxu0 0.0
        %780 = vmatprep.subr.mxu0 0.0
        %781 = vmatpush1.xpose.msra.mxu0 0.0
        %782 = vmatprep.subr.mxu0 0.0
        %783 = vmatpush1.xpose.msra.mxu0 0.0
        %784 = vmatprep.subr.mxu0 0.0
        %785 = vmatpush1.xpose.msra.mxu0 0.0
        %786 = vmatprep.subr.mxu0 0.0
        %787 = vmatpush1.xpose.msra.mxu0 0.0
        %788 = vmatprep.subr.mxu0 0.0
        %789 = vmatpush1.xpose.msra.mxu0 0.0
        %790 = vmatprep.subr.mxu0 0.0
        %791 = vmatpush1.xpose.msra.mxu0 0.0
        %792 = vmatprep.subr.mxu0 0.0
        %793 = vmatpush1.xpose.msra.mxu0 0.0
        %794 = vmatprep.subr.mxu0 0.0
        %795 = vmatpush1.xpose.msra.mxu0 0.0
        %796 = vmatprep.subr.mxu0 0.0
        %797 = vmatpush1.xpose.msra.mxu0 0.0
        %798 = vmatprep.subr.mxu0 0.0
        %799 = vmatpush1.xpose.msra.mxu0 0.0
        %800 = vmatprep.subr.mxu0 0.0
        %801 = vmatpush1.xpose.msra.mxu0 0.0
        %802 = vmatprep.subr.mxu0 0.0
        %803 = vmatpush1.xpose.msra.mxu0 0.0
        %804 = vmatprep.subr.mxu0 0.0
        %805 = vmatpush1.xpose.msra.mxu0 0.0
        %806 = vmatprep.subr.mxu0 0.0
        %807 = vmatpush1.xpose.msra.mxu0 0.0
        %808 = vmatprep.subr.mxu0 0.0
        %809 = vmatpush1.xpose.msra.mxu0 0.0
        %810 = vmatprep.subr.mxu0 0.0
        %811 = vmatpush1.xpose.msra.mxu0 0.0
        %812 = vmatprep.subr.mxu0 0.0
        %813 = vmatpush1.xpose.msra.mxu0 0.0
        %814 = vmatprep.subr.mxu0 0.0
        %815 = vmatpush1.xpose.msra.mxu0 0.0
        %816 = vmatprep.subr.mxu0 0.0
        %817 = vmatpush1.xpose.msra.mxu0 0.0
        %818 = vmatprep.subr.mxu0 0.0
        %819 = vmatpush1.xpose.msra.mxu0 0.0
        %820 = vmatprep.subr.mxu0 0.0
        %821 = vmatpush1.xpose.msra.mxu0 0.0
        %822 = vmatprep.subr.mxu0 0.0
        %823 = vmatpush1.xpose.msra.mxu0 0.0
        %824 = vmatprep.subr.mxu0 0.0
        %825 = vmatpush1.xpose.msra.mxu0 0.0
        %826 = vmatprep.subr.mxu0 0.0
        %827 = vmatpush1.xpose.msra.mxu0 0.0
        %828 = vmatprep.subr.mxu0 0.0
        %829 = vmatpush1.xpose.msra.mxu0 0.0
        %830 = vmatprep.subr.mxu0 0.0
        %831 = vmatpush1.xpose.msra.mxu0 0.0
        %832 = vmatprep.mubr.f32.mxu0 0.0
        %833 = vmatmul.mubr.f32.gmra.mrb[0].mxu0 %v763
        %v834 = vpop.f32.mrb[0].mxu0
        %v835 = vadd.f32 0.0, %v834
        %v836 = vpop.f32.mrb[0].mxu0
        %837 = vdwg.mxu0
        %v838 = vsel %vm761, %v835, -inf
        %839 = vmax.xlane.f32.xlu0 %v838
        %v840 = vpop.xlane.xlu0 %839
        %v841 = vsub.f32 %v835, %v840
        %v842 = vmul.f32 %v841, 1.442695
        %v843 = vpow.pop %v842
        %v844 = vsel %vm761, %v843, 0.0
        %845 = vadd.xlane.f32.xlu0 %v844
        %v846 = vpop.xlane.xlu0 %845
        %v847 = vrcp.pop %v846
        %v848 = vmul.f32 %v843, %v847
        %849 = vrot.lane.b32.xlu0 %v760, 96
        %v850 = vpop.permute.xlu0 %849
        %v853 = vsel %vm761, %v848, 0
        %855 = vmatprep.subr.mxu0 0.0
        %856 = vmatpush1.msra.mxu0 %v850
        %857 = vmatprep.subr.mxu0 0.0
        %858 = vmatpush1.msra.mxu0 0.0
        %859 = vmatprep.subr.mxu0 0.0
        %860 = vmatpush1.msra.mxu0 0.0
        %861 = vmatprep.subr.mxu0 0.0
        %862 = vmatpush1.msra.mxu0 0.0
        %863 = vmatprep.subr.mxu0 0.0
        %864 = vmatpush1.msra.mxu0 0.0
        %865 = vmatprep.subr.mxu0 0.0
        %866 = vmatpush1.msra.mxu0 0.0
        %867 = vmatprep.subr.mxu0 0.0
        %868 = vmatpush1.msra.mxu0 0.0
        %869 = vmatprep.subr.mxu0 0.0
        %870 = vmatpush1.msra.mxu0 0.0
        %871 = vmatprep.subr.mxu0 0.0
        %872 = vmatpush1.msra.mxu0 0.0
        %873 = vmatprep.subr.mxu0 0.0
        %874 = vmatpush1.msra.mxu0 0.0
        %875 = vmatprep.subr.mxu0 0.0
        %876 = vmatpush1.msra.mxu0 0.0
        %877 = vmatprep.subr.mxu0 0.0
        %878 = vmatpush1.msra.mxu0 0.0
        %879 = vmatprep.subr.mxu0 0.0
        %880 = vmatpush1.msra.mxu0 0.0
        %881 = vmatprep.subr.mxu0 0.0
        %882 = vmatpush1.msra.mxu0 0.0
        %883 = vmatprep.subr.mxu0 0.0
        %884 = vmatpush1.msra.mxu0 0.0
        %885 = vmatprep.subr.mxu0 0.0
        %886 = vmatpush1.msra.mxu0 0.0
        %887 = vmatprep.subr.mxu0 0.0
        %888 = vmatpush1.msra.mxu0 0.0
        %889 = vmatprep.subr.mxu0 0.0
        %890 = vmatpush1.msra.mxu0 0.0
        %891 = vmatprep.subr.mxu0 0.0
        %892 = vmatpush1.msra.mxu0 0.0
        %893 = vmatprep.subr.mxu0 0.0
        %894 = vmatpush1.msra.mxu0 0.0
        %895 = vmatprep.subr.mxu0 0.0
        %896 = vmatpush1.msra.mxu0 0.0
        %897 = vmatprep.subr.mxu0 0.0
        %898 = vmatpush1.msra.mxu0 0.0
        %899 = vmatprep.subr.mxu0 0.0
        %900 = vmatpush1.msra.mxu0 0.0
        %901 = vmatprep.subr.mxu0 0.0
        %902 = vmatpush1.msra.mxu0 0.0
        %903 = vmatprep.subr.mxu0 0.0
        %904 = vmatpush1.msra.mxu0 0.0
        %905 = vmatprep.subr.mxu0 0.0
        %906 = vmatpush1.msra.mxu0 0.0
        %907 = vmatprep.subr.mxu0 0.0
        %908 = vmatpush1.msra.mxu0 0.0
        %909 = vmatprep.subr.mxu0 0.0
        %910 = vmatpush1.msra.mxu0 0.0
        %911 = vmatprep.subr.mxu0 0.0
        %912 = vmatpush1.msra.mxu0 0.0
        %913 = vmatprep.subr.mxu0 0.0
        %914 = vmatpush1.msra.mxu0 0.0
        %915 = vmatprep.subr.mxu0 0.0
        %916 = vmatpush1.msra.mxu0 0.0
        %917 = vmatprep.subr.mxu0 0.0
        %918 = vmatpush1.msra.mxu0 0.0
        %919 = vmatprep.mubr.f32.mxu0 0.0
        %920 = vmatmul.mubr.f32.gmra.mrb[0].mxu0 %v853
        %v921 = vpop.f32.mrb[0].mxu0
        %v922 = vadd.f32 0.0, %v921
        %v923 = vpop.f32.mrb[0].mxu0
        %924 = vdwg.mxu0
        %v925 = vld [vmem:[#allocation2] sm:$0xff]
        %926 = vrot.lane.b32.xlu0 %v757, 120
        %v927 = vpop.permute.xlu0 %926
        %929 = vrot.lane.b32.xlu0 %v925, 120
        %v930 = vpop.permute.xlu0 %929
        %v931 = vsel %vm761, %v927, 0
        %v933 = vsel %vm761, %v930, 0
        %935 = vmatprep.subr.mxu0 0.0
        %936 = vmatpush1.xpose.msra.mxu0 %v933
        %937 = vmatprep.subr.mxu0 0.0
        %938 = vmatpush1.xpose.msra.mxu0 0.0
        %939 = vmatprep.subr.mxu0 0.0
        %940 = vmatpush1.xpose.msra.mxu0 0.0
        %941 = vmatprep.subr.mxu0 0.0
        %942 = vmatpush1.xpose.msra.mxu0 0.0
        %943 = vmatprep.subr.mxu0 0.0
        %944 = vmatpush1.xpose.msra.mxu0 0.0
        %945 = vmatprep.subr.mxu0 0.0
        %946 = vmatpush1.xpose.msra.mxu0 0.0
        %947 = vmatprep.subr.mxu0 0.0
        %948 = vmatpush1.xpose.msra.mxu0 0.0
        %949 = vmatprep.subr.mxu0 0.0
        %950 = vmatpush1.xpose.msra.mxu0 0.0
        %951 = vmatprep.subr.mxu0 0.0
        %952 = vmatpush1.xpose.msra.mxu0 0.0
        %953 = vmatprep.subr.mxu0 0.0
        %954 = vmatpush1.xpose.msra.mxu0 0.0
        %955 = vmatprep.subr.mxu0 0.0
        %956 = vmatpush1.xpose.msra.mxu0 0.0
        %957 = vmatprep.subr.mxu0 0.0
        %958 = vmatpush1.xpose.msra.mxu0 0.0
        %959 = vmatprep.subr.mxu0 0.0
        %960 = vmatpush1.xpose.msra.mxu0 0.0
        %961 = vmatprep.subr.mxu0 0.0
        %962 = vmatpush1.xpose.msra.mxu0 0.0
        %963 = vmatprep.subr.mxu0 0.0
        %964 = vmatpush1.xpose.msra.mxu0 0.0
        %965 = vmatprep.subr.mxu0 0.0
        %966 = vmatpush1.xpose.msra.mxu0 0.0
        %967 = vmatprep.subr.mxu0 0.0
        %968 = vmatpush1.xpose.msra.mxu0 0.0
        %969 = vmatprep.subr.mxu0 0.0
        %970 = vmatpush1.xpose.msra.mxu0 0.0
        %971 = vmatprep.subr.mxu0 0.0
        %972 = vmatpush1.xpose.msra.mxu0 0.0
        %973 = vmatprep.subr.mxu0 0.0
        %974 = vmatpush1.xpose.msra.mxu0 0.0
        %975 = vmatprep.subr.mxu0 0.0
        %976 = vmatpush1.xpose.msra.mxu0 0.0
        %977 = vmatprep.subr.mxu0 0.0
        %978 = vmatpush1.xpose.msra.mxu0 0.0
        %979 = vmatprep.subr.mxu0 0.0
        %980 = vmatpush1.xpose.msra.mxu0 0.0
        %981 = vmatprep.subr.mxu0 0.0
        %982 = vmatpush1.xpose.msra.mxu0 0.0
        %983 = vmatprep.subr.mxu0 0.0
        %984 = vmatpush1.xpose.msra.mxu0 0.0
        %985 = vmatprep.subr.mxu0 0.0
        %986 = vmatpush1.xpose.msra.mxu0 0.0
        %987 = vmatprep.subr.mxu0 0.0
        %988 = vmatpush1.xpose.msra.mxu0 0.0
        %989 = vmatprep.subr.mxu0 0.0
        %990 = vmatpush1.xpose.msra.mxu0 0.0
        %991 = vmatprep.subr.mxu0 0.0
        %992 = vmatpush1.xpose.msra.mxu0 0.0
        %993 = vmatprep.subr.mxu0 0.0
        %994 = vmatpush1.xpose.msra.mxu0 0.0
        %995 = vmatprep.subr.mxu0 0.0
        %996 = vmatpush1.xpose.msra.mxu0 0.0
        %997 = vmatprep.subr.mxu0 0.0
        %998 = vmatpush1.xpose.msra.mxu0 0.0
        %999 = vmatprep.mubr.f32.mxu0 0.0
        %1000 = vmatmul.mubr.f32.gmra.mrb[0].mxu0 %v931
        %v1001 = vpop.f32.mrb[0].mxu0
        %v1002 = vadd.f32 0.0, %v1001
        %v1003 = vpop.f32.mrb[0].mxu0
        %1004 = vdwg.mxu0
        %v1005 = vsel %vm761, %v1002, -inf
        %1006 = vmax.xlane.f32.xlu0 %v1005
        %v1007 = vpop.xlane.xlu0 %1006
        %v1008 = vsub.f32 %v1002, %v1007
        %v1009 = vmul.f32 %v1008, 1.442695
        %v1010 = vpow.pop %v1009
        %v1011 = vsel %vm761, %v1010, 0.0
        %1012 = vadd.xlane.f32.xlu0 %v1011
        %v1013 = vpop.xlane.xlu0 %1012
        %v1014 = vrcp.pop %v1013
        %v1015 = vmul.f32 %v1010, %v1014
        %1016 = vrot.lane.b32.xlu0 %v925, 88
        %v1017 = vpop.permute.xlu0 %1016
        %v1020 = vsel %vm761, %v1015, 0
        %1022 = vmatprep.subr.mxu0 0.0
        %1023 = vmatpush1.msra.mxu0 %v1017
        %1024 = vmatprep.subr.mxu0 0.0
        %1025 = vmatpush1.msra.mxu0 0.0
        %1026 = vmatprep.subr.mxu0 0.0
        %1027 = vmatpush1.msra.mxu0 0.0
        %1028 = vmatprep.subr.mxu0 0.0
        %1029 = vmatpush1.msra.mxu0 0.0
        %1030 = vmatprep.subr.mxu0 0.0
        %1031 = vmatpush1.msra.mxu0 0.0
        %1032 = vmatprep.subr.mxu0 0.0
        %1033 = vmatpush1.msra.mxu0 0.0
        %1034 = vmatprep.subr.mxu0 0.0
        %1035 = vmatpush1.msra.mxu0 0.0
        %1036 = vmatprep.subr.mxu0 0.0
        %1037 = vmatpush1.msra.mxu0 0.0
        %1038 = vmatprep.subr.mxu0 0.0
        %1039 = vmatpush1.msra.mxu0 0.0
        %1040 = vmatprep.subr.mxu0 0.0
        %1041 = vmatpush1.msra.mxu0 0.0
        %1042 = vmatprep.subr.mxu0 0.0
        %1043 = vmatpush1.msra.mxu0 0.0
        %1044 = vmatprep.subr.mxu0 0.0
        %1045 = vmatpush1.msra.mxu0 0.0
        %1046 = vmatprep.subr.mxu0 0.0
        %1047 = vmatpush1.msra.mxu0 0.0
        %1048 = vmatprep.subr.mxu0 0.0
        %1049 = vmatpush1.msra.mxu0 0.0
        %1050 = vmatprep.subr.mxu0 0.0
        %1051 = vmatpush1.msra.mxu0 0.0
        %1052 = vmatprep.subr.mxu0 0.0
        %1053 = vmatpush1.msra.mxu0 0.0
        %1054 = vmatprep.subr.mxu0 0.0
        %1055 = vmatpush1.msra.mxu0 0.0
        %1056 = vmatprep.subr.mxu0 0.0
        %1057 = vmatpush1.msra.mxu0 0.0
        %1058 = vmatprep.subr.mxu0 0.0
        %1059 = vmatpush1.msra.mxu0 0.0
        %1060 = vmatprep.subr.mxu0 0.0
        %1061 = vmatpush1.msra.mxu0 0.0
        %1062 = vmatprep.subr.mxu0 0.0
        %1063 = vmatpush1.msra.mxu0 0.0
        %1064 = vmatprep.subr.mxu0 0.0
        %1065 = vmatpush1.msra.mxu0 0.0
        %1066 = vmatprep.subr.mxu0 0.0
        %1067 = vmatpush1.msra.mxu0 0.0
        %1068 = vmatprep.subr.mxu0 0.0
        %1069 = vmatpush1.msra.mxu0 0.0
        %1070 = vmatprep.subr.mxu0 0.0
        %1071 = vmatpush1.msra.mxu0 0.0
        %1072 = vmatprep.subr.mxu0 0.0
        %1073 = vmatpush1.msra.mxu0 0.0
        %1074 = vmatprep.subr.mxu0 0.0
        %1075 = vmatpush1.msra.mxu0 0.0
        %1076 = vmatprep.subr.mxu0 0.0
        %1077 = vmatpush1.msra.mxu0 0.0
        %1078 = vmatprep.subr.mxu0 0.0
        %1079 = vmatpush1.msra.mxu0 0.0
        %1080 = vmatprep.subr.mxu0 0.0
        %1081 = vmatpush1.msra.mxu0 0.0
        %1082 = vmatprep.subr.mxu0 0.0
        %1083 = vmatpush1.msra.mxu0 0.0
        %1084 = vmatprep.subr.mxu0 0.0
        %1085 = vmatpush1.msra.mxu0 0.0
        %1086 = vmatprep.mubr.f32.mxu0 0.0
        %1087 = vmatmul.mubr.f32.gmra.mrb[0].mxu0 %v1020
        %v1088 = vpop.f32.mrb[0].mxu0
        %v1089 = vadd.f32 0.0, %v1088
        %v1090 = vpop.f32.mrb[0].mxu0
        %1091 = vdwg.mxu0
        %v1092 = vld [vmem:[#allocation2] sm:$0xff]
        %1093 = vrot.lane.b32.xlu0 %v757, 112
        %v1094 = vpop.permute.xlu0 %1093
        %1096 = vrot.lane.b32.xlu0 %v1092, 112
        %v1097 = vpop.permute.xlu0 %1096
        %v1098 = vsel %vm761, %v1094, 0
        %v1100 = vsel %vm761, %v1097, 0
        %1102 = vmatprep.subr.mxu0 0.0
        %1103 = vmatpush1.xpose.msra.mxu0 %v1100
        %1104 = vmatprep.subr.mxu0 0.0
        %1105 = vmatpush1.xpose.msra.mxu0 0.0
        %1106 = vmatprep.subr.mxu0 0.0
        %1107 = vmatpush1.xpose.msra.mxu0 0.0
        %1108 = vmatprep.subr.mxu0 0.0
        %1109 = vmatpush1.xpose.msra.mxu0 0.0
        %1110 = vmatprep.subr.mxu0 0.0
        %1111 = vmatpush1.xpose.msra.mxu0 0.0
        %1112 = vmatprep.subr.mxu0 0.0
        %1113 = vmatpush1.xpose.msra.mxu0 0.0
        %1114 = vmatprep.subr.mxu0 0.0
        %1115 = vmatpush1.xpose.msra.mxu0 0.0
        %1116 = vmatprep.subr.mxu0 0.0
        %1117 = vmatpush1.xpose.msra.mxu0 0.0
        %1118 = vmatprep.subr.mxu0 0.0
        %1119 = vmatpush1.xpose.msra.mxu0 0.0
        %1120 = vmatprep.subr.mxu0 0.0
        %1121 = vmatpush1.xpose.msra.mxu0 0.0
        %1122 = vmatprep.subr.mxu0 0.0
        %1123 = vmatpush1.xpose.msra.mxu0 0.0
        %1124 = vmatprep.subr.mxu0 0.0
        %1125 = vmatpush1.xpose.msra.mxu0 0.0
        %1126 = vmatprep.subr.mxu0 0.0
        %1127 = vmatpush1.xpose.msra.mxu0 0.0
        %1128 = vmatprep.subr.mxu0 0.0
        %1129 = vmatpush1.xpose.msra.mxu0 0.0
        %1130 = vmatprep.subr.mxu0 0.0
        %1131 = vmatpush1.xpose.msra.mxu0 0.0
        %1132 = vmatprep.subr.mxu0 0.0
        %1133 = vmatpush1.xpose.msra.mxu0 0.0
        %1134 = vmatprep.subr.mxu0 0.0
        %1135 = vmatpush1.xpose.msra.mxu0 0.0
        %1136 = vmatprep.subr.mxu0 0.0
        %1137 = vmatpush1.xpose.msra.mxu0 0.0
        %1138 = vmatprep.subr.mxu0 0.0
        %1139 = vmatpush1.xpose.msra.mxu0 0.0
        %1140 = vmatprep.subr.mxu0 0.0
        %1141 = vmatpush1.xpose.msra.mxu0 0.0
        %1142 = vmatprep.subr.mxu0 0.0
        %1143 = vmatpush1.xpose.msra.mxu0 0.0
        %1144 = vmatprep.subr.mxu0 0.0
        %1145 = vmatpush1.xpose.msra.mxu0 0.0
        %1146 = vmatprep.subr.mxu0 0.0
        %1147 = vmatpush1.xpose.msra.mxu0 0.0
        %1148 = vmatprep.subr.mxu0 0.0
        %1149 = vmatpush1.xpose.msra.mxu0 0.0
        %1150 = vmatprep.subr.mxu0 0.0
        %1151 = vmatpush1.xpose.msra.mxu0 0.0
        %1152 = vmatprep.subr.mxu0 0.0
        %1153 = vmatpush1.xpose.msra.mxu0 0.0
        %1154 = vmatprep.subr.mxu0 0.0
        %1155 = vmatpush1.xpose.msra.mxu0 0.0
        %1156 = vmatprep.subr.mxu0 0.0
        %1157 = vmatpush1.xpose.msra.mxu0 0.0
        %1158 = vmatprep.subr.mxu0 0.0
        %1159 = vmatpush1.xpose.msra.mxu0 0.0
        %1160 = vmatprep.subr.mxu0 0.0
        %1161 = vmatpush1.xpose.msra.mxu0 0.0
        %1162 = vmatprep.subr.mxu0 0.0
        %1163 = vmatpush1.xpose.msra.mxu0 0.0
        %1164 = vmatprep.subr.mxu0 0.0
        %1165 = vmatpush1.xpose.msra.mxu0 0.0
        %1166 = vmatprep.mubr.f32.mxu0 0.0
        %1167 = vmatmul.mubr.f32.gmra.mrb[0].mxu0 %v1098
        %v1168 = vpop.f32.mrb[0].mxu0
        %v1169 = vadd.f32 0.0, %v1168
        %v1170 = vpop.f32.mrb[0].mxu0
        %1171 = vdwg.mxu0
        %v1172 = vsel %vm761, %v1169, -inf
        %1173 = vmax.xlane.f32.xlu0 %v1172
        %v1174 = vpop.xlane.xlu0 %1173
        %v1175 = vsub.f32 %v1169, %v1174
        %v1176 = vmul.f32 %v1175, 1.442695
        %v1177 = vpow.pop %v1176
        %v1178 = vsel %vm761, %v1177, 0.0
        %1179 = vadd.xlane.f32.xlu0 %v1178
        %v1180 = vpop.xlane.xlu0 %1179
        %v1181 = vrcp.pop %v1180
        %v1182 = vmul.f32 %v1177, %v1181
        %1183 = vrot.lane.b32.xlu0 %v1092, 80
        %v1184 = vpop.permute.xlu0 %1183
        %v1187 = vsel %vm761, %v1182, 0
        %1189 = vmatprep.subr.mxu0 0.0
        %1190 = vmatpush1.msra.mxu0 %v1184
        %1191 = vmatprep.subr.mxu0 0.0
        %1192 = vmatpush1.msra.mxu0 0.0
        %1193 = vmatprep.subr.mxu0 0.0
        %1194 = vmatpush1.msra.mxu0 0.0
        %1195 = vmatprep.subr.mxu0 0.0
        %1196 = vmatpush1.msra.mxu0 0.0
        %1197 = vmatprep.subr.mxu0 0.0
        %1198 = vmatpush1.msra.mxu0 0.0
        %1199 = vmatprep.subr.mxu0 0.0
        %1200 = vmatpush1.msra.mxu0 0.0
        %1201 = vmatprep.subr.mxu0 0.0
        %1202 = vmatpush1.msra.mxu0 0.0
        %1203 = vmatprep.subr.mxu0 0.0
        %1204 = vmatpush1.msra.mxu0 0.0
        %1205 = vmatprep.subr.mxu0 0.0
        %1206 = vmatpush1.msra.mxu0 0.0
        %1207 = vmatprep.subr.mxu0 0.0
        %1208 = vmatpush1.msra.mxu0 0.0
        %1209 = vmatprep.subr.mxu0 0.0
        %1210 = vmatpush1.msra.mxu0 0.0
        %1211 = vmatprep.subr.mxu0 0.0
        %1212 = vmatpush1.msra.mxu0 0.0
        %1213 = vmatprep.subr.mxu0 0.0
        %1214 = vmatpush1.msra.mxu0 0.0
        %1215 = vmatprep.subr.mxu0 0.0
        %1216 = vmatpush1.msra.mxu0 0.0
        %1217 = vmatprep.subr.mxu0 0.0
        %1218 = vmatpush1.msra.mxu0 0.0
        %1219 = vmatprep.subr.mxu0 0.0
        %1220 = vmatpush1.msra.mxu0 0.0
        %1221 = vmatprep.subr.mxu0 0.0
        %1222 = vmatpush1.msra.mxu0 0.0
        %1223 = vmatprep.subr.mxu0 0.0
        %1224 = vmatpush1.msra.mxu0 0.0
        %1225 = vmatprep.subr.mxu0 0.0
        %1226 = vmatpush1.msra.mxu0 0.0
        %1227 = vmatprep.subr.mxu0 0.0
        %1228 = vmatpush1.msra.mxu0 0.0
        %1229 = vmatprep.subr.mxu0 0.0
        %1230 = vmatpush1.msra.mxu0 0.0
        %1231 = vmatprep.subr.mxu0 0.0
        %1232 = vmatpush1.msra.mxu0 0.0
        %1233 = vmatprep.subr.mxu0 0.0
        %1234 = vmatpush1.msra.mxu0 0.0
        %1235 = vmatprep.subr.mxu0 0.0
        %1236 = vmatpush1.msra.mxu0 0.0
        %1237 = vmatprep.subr.mxu0 0.0
        %1238 = vmatpush1.msra.mxu0 0.0
        %1239 = vmatprep.subr.mxu0 0.0
        %1240 = vmatpush1.msra.mxu0 0.0
        %1241 = vmatprep.subr.mxu0 0.0
        %1242 = vmatpush1.msra.mxu0 0.0
        %1243 = vmatprep.subr.mxu0 0.0
        %1244 = vmatpush1.msra.mxu0 0.0
        %1245 = vmatprep.subr.mxu0 0.0
        %1246 = vmatpush1.msra.mxu0 0.0
        %1247 = vmatprep.subr.mxu0 0.0
        %1248 = vmatpush1.msra.mxu0 0.0
        %1249 = vmatprep.subr.mxu0 0.0
        %1250 = vmatpush1.msra.mxu0 0.0
        %1251 = vmatprep.subr.mxu0 0.0
        %1252 = vmatpush1.msra.mxu0 0.0
        %1253 = vmatprep.mubr.f32.mxu0 0.0
        %1254 = vmatmul.mubr.f32.gmra.mrb[0].mxu0 %v1187
        %v1255 = vpop.f32.mrb[0].mxu0
        %v1256 = vadd.f32 0.0, %v1255
        %v1257 = vpop.f32.mrb[0].mxu0
        %1258 = vdwg.mxu0
        %v1259 = vld [vmem:[#allocation2] sm:$0xff]
        %1260 = vrot.lane.b32.xlu0 %v757, 104
        %v1261 = vpop.permute.xlu0 %1260
        %1263 = vrot.lane.b32.xlu0 %v1259, 104
        %v1264 = vpop.permute.xlu0 %1263
        %v1265 = vsel %vm761, %v1261, 0
        %v1267 = vsel %vm761, %v1264, 0
        %1269 = vmatprep.subr.mxu0 0.0
        %1270 = vmatpush1.xpose.msra.mxu0 %v1267
        %1271 = vmatprep.subr.mxu0 0.0
        %1272 = vmatpush1.xpose.msra.mxu0 0.0
        %1273 = vmatprep.subr.mxu0 0.0
        %1274 = vmatpush1.xpose.msra.mxu0 0.0
        %1275 = vmatprep.subr.mxu0 0.0
        %1276 = vmatpush1.xpose.msra.mxu0 0.0
        %1277 = vmatprep.subr.mxu0 0.0
        %1278 = vmatpush1.xpose.msra.mxu0 0.0
        %1279 = vmatprep.subr.mxu0 0.0
        %1280 = vmatpush1.xpose.msra.mxu0 0.0
        %1281 = vmatprep.subr.mxu0 0.0
        %1282 = vmatpush1.xpose.msra.mxu0 0.0
        %1283 = vmatprep.subr.mxu0 0.0
        %1284 = vmatpush1.xpose.msra.mxu0 0.0
        %1285 = vmatprep.subr.mxu0 0.0
        %1286 = vmatpush1.xpose.msra.mxu0 0.0
        %1287 = vmatprep.subr.mxu0 0.0
        %1288 = vmatpush1.xpose.msra.mxu0 0.0
        %1289 = vmatprep.subr.mxu0 0.0
        %1290 = vmatpush1.xpose.msra.mxu0 0.0
        %1291 = vmatprep.subr.mxu0 0.0
        %1292 = vmatpush1.xpose.msra.mxu0 0.0
        %1293 = vmatprep.subr.mxu0 0.0
        %1294 = vmatpush1.xpose.msra.mxu0 0.0
        %1295 = vmatprep.subr.mxu0 0.0
        %1296 = vmatpush1.xpose.msra.mxu0 0.0
        %1297 = vmatprep.subr.mxu0 0.0
        %1298 = vmatpush1.xpose.msra.mxu0 0.0
        %1299 = vmatprep.subr.mxu0 0.0
        %1300 = vmatpush1.xpose.msra.mxu0 0.0
        %1301 = vmatprep.subr.mxu0 0.0
        %1302 = vmatpush1.xpose.msra.mxu0 0.0
        %1303 = vmatprep.subr.mxu0 0.0
        %1304 = vmatpush1.xpose.msra.mxu0 0.0
        %1305 = vmatprep.subr.mxu0 0.0
        %1306 = vmatpush1.xpose.msra.mxu0 0.0
        %1307 = vmatprep.subr.mxu0 0.0
        %1308 = vmatpush1.xpose.msra.mxu0 0.0
        %1309 = vmatprep.subr.mxu0 0.0
        %1310 = vmatpush1.xpose.msra.mxu0 0.0
        %1311 = vmatprep.subr.mxu0 0.0
        %1312 = vmatpush1.xpose.msra.mxu0 0.0
        %1313 = vmatprep.subr.mxu0 0.0
        %1314 = vmatpush1.xpose.msra.mxu0 0.0
        %1315 = vmatprep.subr.mxu0 0.0
        %1316 = vmatpush1.xpose.msra.mxu0 0.0
        %1317 = vmatprep.subr.mxu0 0.0
        %1318 = vmatpush1.xpose.msra.mxu0 0.0
        %1319 = vmatprep.subr.mxu0 0.0
        %1320 = vmatpush1.xpose.msra.mxu0 0.0
        %1321 = vmatprep.subr.mxu0 0.0
        %1322 = vmatpush1.xpose.msra.mxu0 0.0
        %1323 = vmatprep.subr.mxu0 0.0
        %1324 = vmatpush1.xpose.msra.mxu0 0.0
        %1325 = vmatprep.subr.mxu0 0.0
        %1326 = vmatpush1.xpose.msra.mxu0 0.0
        %1327 = vmatprep.subr.mxu0 0.0
        %1328 = vmatpush1.xpose.msra.mxu0 0.0
        %1329 = vmatprep.subr.mxu0 0.0
        %1330 = vmatpush1.xpose.msra.mxu0 0.0
        %1331 = vmatprep.subr.mxu0 0.0
        %1332 = vmatpush1.xpose.msra.mxu0 0.0
        %1333 = vmatprep.mubr.f32.mxu0 0.0
        %1334 = vmatmul.mubr.f32.gmra.mrb[0].mxu0 %v1265
        %v1335 = vpop.f32.mrb[0].mxu0
        %v1336 = vadd.f32 0.0, %v1335
        %v1337 = vpop.f32.mrb[0].mxu0
        %1338 = vdwg.mxu0
        %v1339 = vsel %vm761, %v1336, -inf
        %1340 = vmax.xlane.f32.xlu0 %v1339
        %v1341 = vpop.xlane.xlu0 %1340
        %v1342 = vsub.f32 %v1336, %v1341
        %v1343 = vmul.f32 %v1342, 1.442695
        %v1344 = vpow.pop %v1343
        %v1345 = vsel %vm761, %v1344, 0.0
        %1346 = vadd.xlane.f32.xlu0 %v1345
        %v1347 = vpop.xlane.xlu0 %1346
        %v1348 = vrcp.pop %v1347
        %v1349 = vmul.f32 %v1344, %v1348
        %1350 = vrot.lane.b32.xlu0 %v1259, 72
        %v1351 = vpop.permute.xlu0 %1350
        %v1354 = vsel %vm761, %v1349, 0
        %1356 = vmatprep.subr.mxu0 0.0
        %1357 = vmatpush1.msra.mxu0 %v1351
        %1358 = vmatprep.subr.mxu0 0.0
        %1359 = vmatpush1.msra.mxu0 0.0
        %1360 = vmatprep.subr.mxu0 0.0
        %1361 = vmatpush1.msra.mxu0 0.0
        %1362 = vmatprep.subr.mxu0 0.0
        %1363 = vmatpush1.msra.mxu0 0.0
        %1364 = vmatprep.subr.mxu0 0.0
        %1365 = vmatpush1.msra.mxu0 0.0
        %1366 = vmatprep.subr.mxu0 0.0
        %1367 = vmatpush1.msra.mxu0 0.0
        %1368 = vmatprep.subr.mxu0 0.0
        %1369 = vmatpush1.msra.mxu0 0.0
        %1370 = vmatprep.subr.mxu0 0.0
        %1371 = vmatpush1.msra.mxu0 0.0
        %1372 = vmatprep.subr.mxu0 0.0
        %1373 = vmatpush1.msra.mxu0 0.0
        %1374 = vmatprep.subr.mxu0 0.0
        %1375 = vmatpush1.msra.mxu0 0.0
        %1376 = vmatprep.subr.mxu0 0.0
        %1377 = vmatpush1.msra.mxu0 0.0
        %1378 = vmatprep.subr.mxu0 0.0
        %1379 = vmatpush1.msra.mxu0 0.0
        %1380 = vmatprep.subr.mxu0 0.0
        %1381 = vmatpush1.msra.mxu0 0.0
        %1382 = vmatprep.subr.mxu0 0.0
        %1383 = vmatpush1.msra.mxu0 0.0
        %1384 = vmatprep.subr.mxu0 0.0
        %1385 = vmatpush1.msra.mxu0 0.0
        %1386 = vmatprep.subr.mxu0 0.0
        %1387 = vmatpush1.msra.mxu0 0.0
        %1388 = vmatprep.subr.mxu0 0.0
        %1389 = vmatpush1.msra.mxu0 0.0
        %1390 = vmatprep.subr.mxu0 0.0
        %1391 = vmatpush1.msra.mxu0 0.0
        %1392 = vmatprep.subr.mxu0 0.0
        %1393 = vmatpush1.msra.mxu0 0.0
        %1394 = vmatprep.subr.mxu0 0.0
        %1395 = vmatpush1.msra.mxu0 0.0
        %1396 = vmatprep.subr.mxu0 0.0
        %1397 = vmatpush1.msra.mxu0 0.0
        %1398 = vmatprep.subr.mxu0 0.0
        %1399 = vmatpush1.msra.mxu0 0.0
        %1400 = vmatprep.subr.mxu0 0.0
        %1401 = vmatpush1.msra.mxu0 0.0
        %1402 = vmatprep.subr.mxu0 0.0
        %1403 = vmatpush1.msra.mxu0 0.0
        %1404 = vmatprep.subr.mxu0 0.0
        %1405 = vmatpush1.msra.mxu0 0.0
        %1406 = vmatprep.subr.mxu0 0.0
        %1407 = vmatpush1.msra.mxu0 0.0
        %1408 = vmatprep.subr.mxu0 0.0
        %1409 = vmatpush1.msra.mxu0 0.0
        %1410 = vmatprep.subr.mxu0 0.0
        %1411 = vmatpush1.msra.mxu0 0.0
        %1412 = vmatprep.subr.mxu0 0.0
        %1413 = vmatpush1.msra.mxu0 0.0
        %1414 = vmatprep.subr.mxu0 0.0
        %1415 = vmatpush1.msra.mxu0 0.0
        %1416 = vmatprep.subr.mxu0 0.0
        %1417 = vmatpush1.msra.mxu0 0.0
        %1418 = vmatprep.subr.mxu0 0.0
        %1419 = vmatpush1.msra.mxu0 0.0
        %1420 = vmatprep.mubr.f32.mxu0 0.0
        %1421 = vmatmul.mubr.f32.gmra.mrb[0].mxu0 %v1354
        %v1422 = vpop.f32.mrb[0].mxu0
        %v1423 = vadd.f32 0.0, %v1422
        %v1424 = vpop.f32.mrb[0].mxu0
        %1425 = vdwg.mxu0
        %1427 = vrot.lane.b32.xlu0 %v1089, 8
        %v1428 = vpop.permute.xlu0 %1427
        %1431 = vrot.lane.b32.xlu0 %v1256, 16
        %v1432 = vpop.permute.xlu0 %1431
        %1435 = vrot.lane.b32.xlu0 %v1423, 24
        %v1436 = vpop.permute.xlu0 %1435
        %v1438 = vsel %vm761, %v922, %v1428
        %vm1439 = vcmask 130048
        %v1440 = vsel %vm1439, %v1438, %v1432
        %vm1441 = vcmask 195584
        %v1442 = vsel %vm1441, %v1440, %v1436
        %v1443 = vld [vmem:[%s6] sm:$0xff]
        %v1444 = vld [vmem:[%s6 + $0x8] sm:$0xff]
        %v1445 = vld [vmem:[%s6 + $0x10] sm:$0xff]
        %v1446 = vld [vmem:[%s6 + $0x18] sm:$0xff]
        %v1447 = vld [vmem:[%s7] sm:$0x1]
        %v1449 = vlaneseq
        %v1450 = vshrl.u32 %v1449, 7
        %v1451 = vsub.s32 0, %v1450
        %v1452 = vrot.slane %v1447, %v1451
        %v1455 = vsel %vm686, %v1442, 0
        %1457 = vmatprep.subr.mxu0 0.0
        %1458 = vmatpush1.msra.mxu0 %v1443
        %1459 = vmatprep.subr.mxu0 0.0
        %1460 = vmatpush1.msra.mxu0 %v1444
        %1461 = vmatprep.subr.mxu0 0.0
        %1462 = vmatpush1.msra.mxu0 %v1445
        %1463 = vmatprep.subr.mxu0 0.0
        %1464 = vmatpush1.msra.mxu0 %v1446
        %1465 = vmatprep.subr.mxu0 0.0
        %1466 = vmatpush1.msra.mxu0 0.0
        %1467 = vmatprep.subr.mxu0 0.0
        %1468 = vmatpush1.msra.mxu0 0.0
        %1469 = vmatprep.subr.mxu0 0.0
        %1470 = vmatpush1.msra.mxu0 0.0
        %1471 = vmatprep.subr.mxu0 0.0
        %1472 = vmatpush1.msra.mxu0 0.0
        %1473 = vmatprep.subr.mxu0 0.0
        %1474 = vmatpush1.msra.mxu0 0.0
        %1475 = vmatprep.subr.mxu0 0.0
        %1476 = vmatpush1.msra.mxu0 0.0
        %1477 = vmatprep.subr.mxu0 0.0
        %1478 = vmatpush1.msra.mxu0 0.0
        %1479 = vmatprep.subr.mxu0 0.0
        %1480 = vmatpush1.msra.mxu0 0.0
        %1481 = vmatprep.subr.mxu0 0.0
        %1482 = vmatpush1.msra.mxu0 0.0
        %1483 = vmatprep.subr.mxu0 0.0
        %1484 = vmatpush1.msra.mxu0 0.0
        %1485 = vmatprep.subr.mxu0 0.0
        %1486 = vmatpush1.msra.mxu0 0.0
        %1487 = vmatprep.subr.mxu0 0.0
        %1488 = vmatpush1.msra.mxu0 0.0
        %1489 = vmatprep.subr.mxu0 0.0
        %1490 = vmatpush1.msra.mxu0 0.0
        %1491 = vmatprep.subr.mxu0 0.0
        %1492 = vmatpush1.msra.mxu0 0.0
        %1493 = vmatprep.subr.mxu0 0.0
        %1494 = vmatpush1.msra.mxu0 0.0
        %1495 = vmatprep.subr.mxu0 0.0
        %1496 = vmatpush1.msra.mxu0 0.0
        %1497 = vmatprep.subr.mxu0 0.0
        %1498 = vmatpush1.msra.mxu0 0.0
        %1499 = vmatprep.subr.mxu0 0.0
        %1500 = vmatpush1.msra.mxu0 0.0
        %1501 = vmatprep.subr.mxu0 0.0
        %1502 = vmatpush1.msra.mxu0 0.0
        %1503 = vmatprep.subr.mxu0 0.0
        %1504 = vmatpush1.msra.mxu0 0.0
        %1505 = vmatprep.subr.mxu0 0.0
        %1506 = vmatpush1.msra.mxu0 0.0
        %1507 = vmatprep.subr.mxu0 0.0
        %1508 = vmatpush1.msra.mxu0 0.0
        %1509 = vmatprep.subr.mxu0 0.0
        %1510 = vmatpush1.msra.mxu0 0.0
        %1511 = vmatprep.subr.mxu0 0.0
        %1512 = vmatpush1.msra.mxu0 0.0
        %1513 = vmatprep.subr.mxu0 0.0
        %1514 = vmatpush1.msra.mxu0 0.0
        %1515 = vmatprep.subr.mxu0 0.0
        %1516 = vmatpush1.msra.mxu0 0.0
        %1517 = vmatprep.subr.mxu0 0.0
        %1518 = vmatpush1.msra.mxu0 0.0
        %1519 = vmatprep.subr.mxu0 0.0
        %1520 = vmatpush1.msra.mxu0 0.0
        %1521 = vmatprep.mubr.f32.mxu0 0.0
        %1522 = vmatmul.mubr.f32.gmra.mrb[0].mxu0 %v1455
        %v1523 = vpop.f32.mrb[0].mxu0
        %v1524 = vadd.f32 %v1452, %v1523
        %v1525 = vpop.f32.mrb[0].mxu0
        %1526 = vdwg.mxu0
        %v1527 = vadd.f32 %v674, %v1524
        %v1528 = vld [vmem:[%s8] sm:$0x1]
        %v1529 = vld [vmem:[%s9] sm:$0x1]
        %v1530 = vsel %vm686, %v1527, 0.0
        %1531 = vadd.xlane.f32.xlu0 %v1530
        %v1532 = vpop.xlane.xlu0 %1531
        %v1533 = vrcp.pop 32.0
        %v1534 = vmul.f32 %v1532, %v1533
        %v1535 = vsub.f32 %v1527, %v1534
        %v1536 = vmul.f32 %v1535, %v1535
        %v1537 = vsel %vm686, %v1536, 0.0
        %1538 = vadd.xlane.f32.xlu0 %v1537
        %v1539 = vpop.xlane.xlu0 %1538
        %v1540 = vmul.f32 %v1539, %v1533
        %v1541 = vadd.f32 %v1540, 1e-05
        %v1542 = vrsqrt.pop %v1541
        %v1543 = vmul.f32 %v1535, %v1542
        %v1545 = vlaneseq
        %v1546 = vshrl.u32 %v1545, 7
        %v1547 = vsub.s32 0, %v1546
        %v1548 = vrot.slane %v1528, %v1547
        %v1550 = vmul.f32 %v1543, %v1548
        %v1552 = vlaneseq
        %v1553 = vshrl.u32 %v1552, 7
        %v1554 = vsub.s32 0, %v1553
        %v1555 = vrot.slane %v1529, %v1554
        %v1557 = vadd.f32 %v1550, %v1555
        %v1558 = vld [vmem:[%s10] sm:$0xff]
        %v1559 = vld [vmem:[%s10 + $0x8] sm:$0xff]
        %v1560 = vld [vmem:[%s10 + $0x10] sm:$0xff]
        %v1561 = vld [vmem:[%s10 + $0x18] sm:$0xff]
        %v1562 = vld [vmem:[%s11] sm:$0x1]
        %v1564 = vlaneseq
        %v1565 = vshrl.u32 %v1564, 7
        %v1566 = vsub.s32 0, %v1565
        %v1567 = vrot.slane %v1562, %v1566
        %v1570 = vsel %vm686, %v1557, 0
        %1572 = vmatprep.subr.mxu0 0.0
        %1573 = vmatpush1.msra.mxu0 %v1558
        %1574 = vmatprep.subr.mxu0 0.0
        %1575 = vmatpush1.msra.mxu0 %v1559
        %1576 = vmatprep.subr.mxu0 0.0
        %1577 = vmatpush1.msra.mxu0 %v1560
        %1578 = vmatprep.subr.mxu0 0.0
        %1579 = vmatpush1.msra.mxu0 %v1561
        %1580 = vmatprep.subr.mxu0 0.0
        %1581 = vmatpush1.msra.mxu0 0.0
        %1582 = vmatprep.subr.mxu0 0.0
        %1583 = vmatpush1.msra.mxu0 0.0
        %1584 = vmatprep.subr.mxu0 0.0
        %1585 = vmatpush1.msra.mxu0 0.0
        %1586 = vmatprep.subr.mxu0 0.0
        %1587 = vmatpush1.msra.mxu0 0.0
        %1588 = vmatprep.subr.mxu0 0.0
        %1589 = vmatpush1.msra.mxu0 0.0
        %1590 = vmatprep.subr.mxu0 0.0
        %1591 = vmatpush1.msra.mxu0 0.0
        %1592 = vmatprep.subr.mxu0 0.0
        %1593 = vmatpush1.msra.mxu0 0.0
        %1594 = vmatprep.subr.mxu0 0.0
        %1595 = vmatpush1.msra.mxu0 0.0
        %1596 = vmatprep.subr.mxu0 0.0
        %1597 = vmatpush1.msra.mxu0 0.0
        %1598 = vmatprep.subr.mxu0 0.0
        %1599 = vmatpush1.msra.mxu0 0.0
        %1600 = vmatprep.subr.mxu0 0.0
        %1601 = vmatpush1.msra.mxu0 0.0
        %1602 = vmatprep.subr.mxu0 0.0
        %1603 = vmatpush1.msra.mxu0 0.0
        %1604 = vmatprep.subr.mxu0 0.0
        %1605 = vmatpush1.msra.mxu0 0.0
        %1606 = vmatprep.subr.mxu0 0.0
        %1607 = vmatpush1.msra.mxu0 0.0
        %1608 = vmatprep.subr.mxu0 0.0
        %1609 = vmatpush1.msra.mxu0 0.0
        %1610 = vmatprep.subr.mxu0 0.0
        %1611 = vmatpush1.msra.mxu0 0.0
        %1612 = vmatprep.subr.mxu0 0.0
        %1613 = vmatpush1.msra.mxu0 0.0
        %1614 = vmatprep.subr.mxu0 0.0
        %1615 = vmatpush1.msra.mxu0 0.0
        %1616 = vmatprep.subr.mxu0 0.0
        %1617 = vmatpush1.msra.mxu0 0.0
        %1618 = vmatprep.subr.mxu0 0.0
        %1619 = vmatpush1.msra.mxu0 0.0
        %1620 = vmatprep.subr.mxu0 0.0
        %1621 = vmatpush1.msra.mxu0 0.0
        %1622 = vmatprep.subr.mxu0 0.0
        %1623 = vmatpush1.msra.mxu0 0.0
        %1624 = vmatprep.subr.mxu0 0.0
        %1625 = vmatpush1.msra.mxu0 0.0
        %1626 = vmatprep.subr.mxu0 0.0
        %1627 = vmatpush1.msra.mxu0 0.0
        %1628 = vmatprep.subr.mxu0 0.0
        %1629 = vmatpush1.msra.mxu0 0.0
        %1630 = vmatprep.subr.mxu0 0.0
        %1631 = vmatpush1.msra.mxu0 0.0
        %1632 = vmatprep.subr.mxu0 0.0
        %1633 = vmatpush1.msra.mxu0 0.0
        %1634 = vmatprep.subr.mxu0 0.0
        %1635 = vmatpush1.msra.mxu0 0.0
        %1636 = vmatprep.mubr.f32.mxu0 0.0
        %1637 = vmatmul.mubr.f32.gmra.mrb[0].mxu0 %v1570
        %v1638 = vpop.f32.mrb[0].mxu0
        %v1639 = vadd.f32 %v1567, %v1638
        %v1640 = vpop.f32.mrb[0].mxu0
        %1641 = vdwg.mxu0
        %v1642 = vmax.f32 %v1639, 0.0
        %v1643 = vld [vmem:[%s12] sm:$0xff]
        %v1644 = vld [vmem:[%s12 + $0x8] sm:$0xff]
        %v1645 = vld [vmem:[%s12 + $0x10] sm:$0xff]
        %v1646 = vld [vmem:[%s12 + $0x18] sm:$0xff]
        %v1647 = vld [vmem:[%s12 + $0x20] sm:$0xff]
        %v1648 = vld [vmem:[%s12 + $0x28] sm:$0xff]
        %v1649 = vld [vmem:[%s12 + $0x30] sm:$0xff]
        %v1650 = vld [vmem:[%s12 + $0x38] sm:$0xff]
        %v1651 = vld [vmem:[%s12 + $0x40] sm:$0xff]
        %v1652 = vld [vmem:[%s12 + $0x48] sm:$0xff]
        %v1653 = vld [vmem:[%s12 + $0x50] sm:$0xff]
        %v1654 = vld [vmem:[%s12 + $0x58] sm:$0xff]
        %v1655 = vld [vmem:[%s12 + $0x60] sm:$0xff]
        %v1656 = vld [vmem:[%s12 + $0x68] sm:$0xff]
        %v1657 = vld [vmem:[%s12 + $0x70] sm:$0xff]
        %v1658 = vld [vmem:[%s12 + $0x78] sm:$0xff]
        %v1659 = vld [vmem:[%s13] sm:$0x1]
        %v1661 = vlaneseq
        %v1662 = vshrl.u32 %v1661, 7
        %v1663 = vsub.s32 0, %v1662
        %v1664 = vrot.slane %v1659, %v1663
        %1666 = vmatprep.subr.mxu0 0.0
        %1667 = vmatpush1.msra.mxu0 %v1643
        %1668 = vmatprep.subr.mxu0 0.0
        %1669 = vmatpush1.msra.mxu0 %v1644
        %1670 = vmatprep.subr.mxu0 0.0
        %1671 = vmatpush1.msra.mxu0 %v1645
        %1672 = vmatprep.subr.mxu0 0.0
        %1673 = vmatpush1.msra.mxu0 %v1646
        %1674 = vmatprep.subr.mxu0 0.0
        %1675 = vmatpush1.msra.mxu0 %v1647
        %1676 = vmatprep.subr.mxu0 0.0
        %1677 = vmatpush1.msra.mxu0 %v1648
        %1678 = vmatprep.subr.mxu0 0.0
        %1679 = vmatpush1.msra.mxu0 %v1649
        %1680 = vmatprep.subr.mxu0 0.0
        %1681 = vmatpush1.msra.mxu0 %v1650
        %1682 = vmatprep.subr.mxu0 0.0
        %1683 = vmatpush1.msra.mxu0 %v1651
        %1684 = vmatprep.subr.mxu0 0.0
        %1685 = vmatpush1.msra.mxu0 %v1652
        %1686 = vmatprep.subr.mxu0 0.0
        %1687 = vmatpush1.msra.mxu0 %v1653
        %1688 = vmatprep.subr.mxu0 0.0
        %1689 = vmatpush1.msra.mxu0 %v1654
        %1690 = vmatprep.subr.mxu0 0.0
        %1691 = vmatpush1.msra.mxu0 %v1655
        %1692 = vmatprep.subr.mxu0 0.0
        %1693 = vmatpush1.msra.mxu0 %v1656
        %1694 = vmatprep.subr.mxu0 0.0
        %1695 = vmatpush1.msra.mxu0 %v1657
        %1696 = vmatprep.subr.mxu0 0.0
        %1697 = vmatpush1.msra.mxu0 %v1658
        %1698 = vmatprep.subr.mxu0 0.0
        %1699 = vmatpush1.msra.mxu0 0.0
        %1700 = vmatprep.subr.mxu0 0.0
        %1701 = vmatpush1.msra.mxu0 0.0
        %1702 = vmatprep.subr.mxu0 0.0
        %1703 = vmatpush1.msra.mxu0 0.0
        %1704 = vmatprep.subr.mxu0 0.0
        %1705 = vmatpush1.msra.mxu0 0.0
        %1706 = vmatprep.subr.mxu0 0.0
        %1707 = vmatpush1.msra.mxu0 0.0
        %1708 = vmatprep.subr.mxu0 0.0
        %1709 = vmatpush1.msra.mxu0 0.0
        %1710 = vmatprep.subr.mxu0 0.0
        %1711 = vmatpush1.msra.mxu0 0.0
        %1712 = vmatprep.subr.mxu0 0.0
        %1713 = vmatpush1.msra.mxu0 0.0
        %1714 = vmatprep.subr.mxu0 0.0
        %1715 = vmatpush1.msra.mxu0 0.0
        %1716 = vmatprep.subr.mxu0 0.0
        %1717 = vmatpush1.msra.mxu0 0.0
        %1718 = vmatprep.subr.mxu0 0.0
        %1719 = vmatpush1.msra.mxu0 0.0
        %1720 = vmatprep.subr.mxu0 0.0
        %1721 = vmatpush1.msra.mxu0 0.0
        %1722 = vmatprep.subr.mxu0 0.0
        %1723 = vmatpush1.msra.mxu0 0.0
        %1724 = vmatprep.subr.mxu0 0.0
        %1725 = vmatpush1.msra.mxu0 0.0
        %1726 = vmatprep.subr.mxu0 0.0
        %1727 = vmatpush1.msra.mxu0 0.0
        %1728 = vmatprep.subr.mxu0 0.0
        %1729 = vmatpush1.msra.mxu0 0.0
        %1730 = vmatprep.mubr.f32.mxu0 0.0
        %1731 = vmatmul.mubr.f32.gmra.mrb[0].mxu0 %v1642
        %v1732 = vpop.f32.mrb[0].mxu0
        %v1733 = vadd.f32 %v1664, %v1732
        %v1734 = vpop.f32.mrb[0].mxu0
        %1735 = vdwg.mxu0
        %v1736 = vadd.f32 %v1557, %v1733
        %v1737 = vld [vmem:[%s14] sm:$0x1]
        %v1738 = vld [vmem:[%s15] sm:$0x1]
        %v1739 = vsel %vm686, %v1736, 0.0
        %1740 = vadd.xlane.f32.xlu0 %v1739
        %v1741 = vpop.xlane.xlu0 %1740
        %v1742 = vmul.f32 %v1741, %v1533
        %v1743 = vsub.f32 %v1736, %v1742
        %v1744 = vmul.f32 %v1743, %v1743
        %v1745 = vsel %vm686, %v1744, 0.0
        %1746 = vadd.xlane.f32.xlu0 %v1745
        %v1747 = vpop.xlane.xlu0 %1746
        %v1748 = vmul.f32 %v1747, %v1533
        %v1749 = vadd.f32 %v1748, 1e-05
        %v1750 = vrsqrt.pop %v1749
        %v1751 = vmul.f32 %v1743, %v1750
        %v1753 = vlaneseq
        %v1754 = vshrl.u32 %v1753, 7
        %v1755 = vsub.s32 0, %v1754
        %v1756 = vrot.slane %v1737, %v1755
        %v1758 = vmul.f32 %v1751, %v1756
        %v1760 = vlaneseq
        %v1761 = vshrl.u32 %v1760, 7
        %v1762 = vsub.s32 0, %v1761
        %v1763 = vrot.slane %v1738, %v1762
        %v1765 = vadd.f32 %v1758, %v1763
        %1766 = vst.msk [vmem:[%s573] sm:$0xff] %vm686, %v1765
        %s1767 = sand.u32 %s403, 1
        %s1768 = scalar_lea.sflag [#allocation5], %s1767
        %s1769 = sand.u32 %s403, 1
        %s1770 = smul.addr %s1769, 8
        %s1771 = scalar_lea.vmem [#allocation6], %s1770
        // Predicated region
        $region93: #{tpu_custom_call.1} parent=83 // pred_check
          %p1772 = pneg %p413
        $region94: #{tpu_custom_call.1} parent=83 // pred_check_branch
          %1774 = sbr.rel (%p1772) target = $region96
        $region95: #{tpu_custom_call.1} parent=83 // pred_region
          %s1776 = ssub.s32 128, 128
          %1777 = vsyncadd %s1768, %s1776
          %s1778 = smul.addr %s37, 2
          %s1779 = sadd.s32 %s38, %s1778
          %s1780 = smul.addr %s1779, 128
          %s1781 = scalar_lea.hbm %s16, %s1780
          %s1783 = sshll.u32 %s1771, 4
          %s1784 = int_to_ptr.vmem [resolvable:$true] %s1783
          %1786 = dma.vmem_to_hbm [thread:$0]  %s1784, 128, %s1781, %s1768
        $region96: #{tpu_custom_call.1} parent=83 // pred_fallthru
          _
      $region84: #{tpu_custom_call.1} parent=5 // pred_fallthru
        _
      %p1787 = scmp.le.s32.totalorder 2, %s28
      // Predicated region
      $region97: #{tpu_custom_call.1} parent=5 // pred_check
        %p1788 = pneg %p1787
      $region98: #{tpu_custom_call.1} parent=5 // pred_check_branch
        %1790 = sbr.rel (%p1788) target = $region100
      $region99: #{tpu_custom_call.1} parent=5 // pred_region
        %s1791 = ssub.s32 %s28, 2
        // Predicated region
        $region101: #{tpu_custom_call.1} parent=99 // pred_check
          %p1792 = pneg %p419
        $region102: #{tpu_custom_call.1} parent=99 // pred_check_branch
          %1794 = sbr.rel (%p1792) target = $region104
        $region103: #{tpu_custom_call.1} parent=99 // pred_region
          %s1795 = sand.u32 %s404, 1
          %s1796 = scalar_lea.sflag [#allocation5], %s1795
          %s1797 = sand.u32 %s404, 1
          %s1798 = smul.addr %s1797, 8
          %s1799 = scalar_lea.vmem [#allocation6], %s1798
          %1800 = dma.done %s1796, 128
        $region104: #{tpu_custom_call.1} parent=99 // pred_fallthru
          _
      $region100: #{tpu_custom_call.1} parent=5 // pred_fallthru
        _
    $region6: #{tpu_custom_call.1} parent=1 // loop_footer
      %s32 = sadd.s32 1, %s28
    $region7: #{tpu_custom_call.1} parent=1 // loop_footer_branch
      %27 = sbr.rel target = $region3
    $region8: #{tpu_custom_call.1} parent=1 // loop_exit
      _
    %1801 = vsyncpa [#allocation4], 1
    %s1802 = scalar_lea.sflag [#allocation4], 1
    %1803 = vsyncpa %s1802, 1
    %1804 = vsyncpa [#allocation5], 1
    %s1805 = scalar_lea.sflag [#allocation5], 1
    %1806 = vsyncpa %s1805, 1

</llo_original>
